<compile_context>
chip_gen: v7x
topology: tpu7x:2x2x1
jax: 0.10.0
libtpu: 0.0.40
codegen_flags: <defaults>
</compile_context>

<pallas_src>
import math
import functools

import jax
import jax.numpy as jnp
from jax.experimental import pallas as pl
from jax.experimental.pallas import tpu as pltpu


# ----------------------------------------------------------------------------
# Fused Pallas kernel (one grid step == one graph)
# ----------------------------------------------------------------------------
def _caesar_fused_kernel(
    cols_ref,    # (1, N, KCP)  layer-1 conv im2col of pooled+PE features, lane padded
    ahat_ref,    # (1, N, N)    per-graph normalized adjacency
    wc1_ref,     # (KCP, CD)    conv layer 1 folded weight, taps flattened into rows
    bc1_ref,     # (1, CD)
    wc2_ref,     # (K, CD, CD)  conv layer 2, tap-major (cin, cout)
    bc2_ref,     # (1, CD)
    wg1_ref,     # (KCP, GD)    GCN layer 1 weight lifted onto the center-tap rows
    bg1_ref,     # (1, GD)
    wg2_ref,     # (GD, GD)     GCN layer 2
    bg2_ref,     # (1, GD)
    w1ag_ref,    # (GD, H1)  pair-MLP layer 1, node_i (x[:, j]) half, gcn channels
    w1ac_ref,    # (CD, H1)  pair-MLP layer 1, node_i half, conv channels
    w1bg_ref,    # (GD, H1)  node_j (x[:, i]) half, gcn channels
    w1bc_ref,    # (CD, H1)  node_j half, conv channels
    b1_ref,      # (1, H1)
    w2_ref,      # (H1, H2)
    b2_ref,      # (1, H2)
    w3_ref,      # (1, H2)
    b3_ref,      # (1, 1)  scalar in SMEM
    o_ref,       # (1, N, N)
    c1pad_ref,   # VMEM scratch (N+K-1, CD) -- padded staging for conv layer 2
):
    n = ahat_ref.shape[1]
    taps = wc2_ref.shape[0]
    pad = (taps - 1) // 2

    cols = cols_ref[0]                                                     # (N, KCP)
    a_hat = ahat_ref[0]                                                    # (N, N)

    # ---- conv layer 1: one MXU matmul over the flattened 15-tap contraction ----
    c1 = jnp.maximum(
        jnp.dot(cols, wc1_ref[...], preferred_element_type=jnp.float32)
        + bc1_ref[...], 0.0)                                               # (N, CD)

    # ---- conv layer 2: Conv1d(15, pad=7)+BN(folded)+ReLU as shifted-tap matmuls ----
    c1pad_ref[...] = jnp.zeros_like(c1pad_ref)
    c1pad_ref[pad:pad + n, :] = c1
    acc = jnp.dot(c1pad_ref[0:n, :], wc2_ref[0], preferred_element_type=jnp.float32)
    for k in range(1, taps):
        acc = acc + jnp.dot(c1pad_ref[k:k + n, :], wc2_ref[k],
                            preferred_element_type=jnp.float32)
    c2 = jnp.maximum(acc + bc2_ref[...], 0.0)                              # (N, CD)

    # ---- GCN branch: relu(A_hat @ (X @ W) + b), two layers ----
    # Layer 1 reads the SAME im2col tile; its weight is nonzero only on the
    # center-tap rows, which hold the un-shifted node features.
    def gcn_layer(h, w_ref, b_ref):
        hw = jnp.dot(h, w_ref[...], preferred_element_type=jnp.float32)
        return jnp.maximum(
            jnp.dot(a_hat, hw, preferred_element_type=jnp.float32) + b_ref[...],
            0.0)

    g1 = gcn_layer(cols, wg1_ref, bg1_ref)                                 # (N, GD)
    g2 = gcn_layer(g1, wg2_ref, bg2_ref)                                   # (N, GD)

    # ---- pairwise 1x1-conv MLP ----
    # feat = [gcn; conv] per node.
    # out[i, j] = relu(w3 . relu(W2 @ relu(W1 @ [feat[:, j]; feat[:, i]] + b1) + b2) + b3)
    # W1 is split per pair-half and per branch so the (2C, N, N) pair tensor is never built.
    a = (jnp.dot(g2, w1ag_ref[...], preferred_element_type=jnp.float32) +
         jnp.dot(c2, w1ac_ref[...], preferred_element_type=jnp.float32))   # (N, H1), idx j
    bm = (jnp.dot(g2, w1bg_ref[...], preferred_element_type=jnp.float32) +
          jnp.dot(c2, w1bc_ref[...], preferred_element_type=jnp.float32))  # (N, H1), idx i
    h1 = jnp.maximum(a[None, :, :] + bm[:, None, :] + b1_ref[...], 0.0)    # (N, N, H1)
    h1f = h1.reshape(n * n, h1.shape[-1])
    h2 = jnp.maximum(
        jnp.dot(h1f, w2_ref[...], preferred_element_type=jnp.float32) + b2_ref[...],
        0.0)                                                               # (N*N, H2)
    h2r = h2.reshape(n, n, h2.shape[-1])
    out = jnp.maximum(jnp.sum(h2r * w3_ref[...], axis=-1) + b3_ref[0, 0], 0.0)  # (N, N)
    o_ref[0] = out


# ----------------------------------------------------------------------------
# Plain-JAX glue
# ----------------------------------------------------------------------------
def positional_encoding(pe_dim, n):
    # TODO(synk): PositionalEncoding source not provided — assume standard sin/cos
    # encoding whose pe_dim channels are CONCATENATED to the features (the
    # (feature_dim + pe_dim) input width of the conv/GCN layers implies concat).
    pos = jnp.arange(n, dtype=jnp.float32)[:, None]
    div = jnp.exp(jnp.arange(0, pe_dim, 2, dtype=jnp.float32) *
                  (-math.log(10000.0) / pe_dim))
    pe = jnp.zeros((n, pe_dim), dtype=jnp.float32)
    pe = pe.at[:, 0::2].set(jnp.sin(pos * div))
    pe = pe.at[:, 1::2].set(jnp.cos(pos * div))
    return pe                                                    # (n, pe_dim)


def fold_bn(w, b, gamma, beta, mean, var, eps=1e-5):
    # NOTE: BatchNorm evaluated in eval mode (running statistics), folded into conv.
    scale = gamma / jnp.sqrt(var + eps)
    return w * scale[:, None, None], (b - mean) * scale + beta


def build_norm_adj_per_graph(edge_index, edge_weight, num_graphs, nodes_per_graph):
    # TODO(synk): GCNLayer source not provided — assume Kipf-style GCN:
    # relu( D^-1/2 (A + I) D^-1/2 @ X @ W + b ), edge_attr used as edge weights.
    # Assumes PyG-style contiguous batching: global node id = g * N + local.
    n = nodes_per_graph
    g = edge_index[0] // n
    src = edge_index[0] % n
    dst = edge_index[1] % n
    a = jnp.zeros((num_graphs, n, n), dtype=jnp.float32)
    a = a.at[g, src, dst].add(edge_weight.astype(jnp.float32))
    a = a + jnp.eye(n, dtype=jnp.float32)[None]
    deg = a.sum(axis=2)
    d_inv = 1.0 / jnp.sqrt(jnp.maximum(deg, 1e-12))
    return a * d_inv[:, :, None] * d_inv[:, None, :]


def prepare_pallas_params(params):
    """One-time weight prep (transposes, pads, flattenings) hoisted out of the forward."""
    (w1c, b1c), (w2c, b2c) = params["conv"]          # BN already folded
    conv_dim, cin, K = w1c.shape
    gc_dim = params["gc"][0][0].shape[1]
    pad = (K - 1) // 2
    kcp = ((K * cin + 127) // 128) * 128             # lane-pad flattened contraction

    # conv layer 1: taps flattened into the contraction dim -> (K*cin, conv_dim), row-padded.
    wc1 = jnp.transpose(w1c, (2, 1, 0)).reshape(K * cin, conv_dim).astype(jnp.float32)
    wc1 = jnp.pad(wc1, ((0, kcp - K * cin), (0, 0)))

    # conv layer 2: tap-major (K, cin, cout) for the in-kernel shifted-tap loop.
    wc2 = jnp.transpose(w2c, (2, 1, 0)).astype(jnp.float32)

    (wg1, bg1), (wg2, bg2) = params["gc"]
    # GCN layer 1 weight lifted onto the im2col row space (center tap == raw features),
    # so the same kernel input drives both the conv and GCN branches.
    wg1_full = jnp.zeros((kcp, gc_dim), jnp.float32)
    wg1_full = wg1_full.at[pad * cin:pad * cin + cin, :].set(wg1.astype(jnp.float32))

    (m1, mb1), (m2, mb2), (m3, mb3) = params["mlp"]
    c_tot = gc_dim + conv_dim
    w1a = jnp.transpose(m1[:, :c_tot]).astype(jnp.float32)     # (C, H1) node_i (x[:, j]) half
    w1b = jnp.transpose(m1[:, c_tot:]).astype(jnp.float32)     # (C, H1) node_j (x[:, i]) half

    return dict(
        wc1=wc1,                                               # (kcp, conv_dim)
        bc1=b1c.reshape(1, -1).astype(jnp.float32),
        wc2=wc2,                                               # (15, conv_dim, conv_dim)
        bc2=b2c.reshape(1, -1).astype(jnp.float32),
        wg1=wg1_full,                                          # (kcp, gc_dim)
        bg1=bg1.reshape(1, -1).astype(jnp.float32),
        wg2=wg2.astype(jnp.float32),
        bg2=bg2.reshape(1, -1).astype(jnp.float32),
        w1a_g=w1a[:gc_dim], w1a_c=w1a[gc_dim:],
        w1b_g=w1b[:gc_dim], w1b_c=w1b[gc_dim:],
        b1=mb1.reshape(1, -1).astype(jnp.float32),
        w2=jnp.transpose(m2).astype(jnp.float32),              # (H1, H2)
        b2=mb2.reshape(1, -1).astype(jnp.float32),
        w3=m3.reshape(1, -1).astype(jnp.float32),              # (1, H2)
        b3=mb3.reshape(1, 1).astype(jnp.float32),              # SMEM scalar
    )


def caesar_forward_pallas(prepped, features, edge_index, edge_attr, cfg):
    res = cfg["resolution"]
    N = cfg["window_size"] // res
    pe_dim = cfg["pe_dim"]
    B, F, L = features.shape
    K = prepped["wc2"].shape[0]
    KCP = prepped["wc1"].shape[0]
    CD = prepped["wc2"].shape[2]
    pad = (K - 1) // 2
    cin = F + pe_dim

    # AvgPool1d(kernel=stride=resolution) + positional-encoding concat (channel-last).
    x = features[:, :, :N * res].reshape(B, F, N, res).mean(axis=-1)   # (B, F, N)
    x = jnp.transpose(x, (0, 2, 1)).astype(jnp.float32)                # (B, N, F)
    pe = positional_encoding(pe_dim, N)
    x = jnp.concatenate([x, jnp.broadcast_to(pe[None], (B, N, pe_dim))], axis=-1)

    # im2col of the 15-tap conv neighborhood (done once, in XLA).  The center-tap
    # columns are the raw node features consumed by GCN layer 1.  Lane-padded to KCP.
    xpad = jnp.pad(x, ((0, 0), (pad, pad), (0, 0)))                    # (B, N+K-1, cin)
    cols = jnp.concatenate([xpad[:, k:k + N, :] for k in range(K)], axis=-1)
    cols = jnp.pad(cols, ((0, 0), (0, 0), (0, KCP - K * cin)))         # (B, N, KCP)

    if edge_attr is None:
        edge_attr = jnp.ones((edge_index.shape[1],), dtype=jnp.float32)
    a_hat = build_norm_adj_per_graph(edge_index, edge_attr, B, N)

    # Graph count is taken statically from the leading batch dim (PyG-style contiguous
    # batching with N nodes per graph) -- no device->host sync on batch.max().

    def full2d(arr):
        return pl.BlockSpec(arr.shape, lambda b: (0, 0))

    def full3d(arr):
        return pl.BlockSpec(arr.shape, lambda b: (0, 0, 0))

    return pl.pallas_call(
        _caesar_fused_kernel,
        out_shape=jax.ShapeDtypeStruct((B, N, N), jnp.float32),
        grid=(B,),
        in_specs=[
            pl.BlockSpec((1, N, KCP), lambda b: (b, 0, 0)),
            pl.BlockSpec((1, N, N), lambda b: (b, 0, 0)),
            full2d(prepped["wc1"]), full2d(prepped["bc1"]),
            full3d(prepped["wc2"]), full2d(prepped["bc2"]),
            full2d(prepped["wg1"]), full2d(prepped["bg1"]),
            full2d(prepped["wg2"]), full2d(prepped["bg2"]),
            full2d(prepped["w1a_g"]), full2d(prepped["w1a_c"]),
            full2d(prepped["w1b_g"]), full2d(prepped["w1b_c"]),
            full2d(prepped["b1"]),
            full2d(prepped["w2"]), full2d(prepped["b2"]),
            full2d(prepped["w3"]),
            pl.BlockSpec(memory_space=pltpu.MemorySpace.SMEM),   # b3 scalar
        ],
        out_specs=pl.BlockSpec((1, N, N), lambda b: (b, 0, 0)),
        scratch_shapes=[pltpu.VMEM((N + K - 1, CD), jnp.float32)],
        compiler_params=pltpu.CompilerParams(
            dimension_semantics=("parallel",),
            vmem_limit_bytes=32 * 1024 * 1024),
    )(cols, a_hat,
      prepped["wc1"], prepped["bc1"], prepped["wc2"], prepped["bc2"],
      prepped["wg1"], prepped["bg1"], prepped["wg2"], prepped["bg2"],
      prepped["w1a_g"], prepped["w1a_c"], prepped["w1b_g"], prepped["w1b_c"],
      prepped["b1"], prepped["w2"], prepped["b2"], prepped["w3"], prepped["b3"])


# ----------------------------------------------------------------------------
# Pure-JAX reference (mirrors the PyTorch forward)
# ----------------------------------------------------------------------------
def im2col_1d(x, k, pad):
    B, C, L = x.shape
    xp = jnp.pad(x, ((0, 0), (0, 0), (pad, pad)))
    cols = jnp.stack([xp[:, :, t:t + L] for t in range(k)], axis=-1)   # (B, C, L, k)
    return jnp.transpose(cols, (0, 2, 1, 3)).reshape(B * L, C * k)


def build_norm_adj_global(edge_index, edge_weight, num_nodes):
    a = jnp.zeros((num_nodes, num_nodes), dtype=jnp.float32)
    a = a.at[edge_index[0], edge_index[1]].add(edge_weight.astype(jnp.float32))
    a = a + jnp.eye(num_nodes, dtype=jnp.float32)
    deg = a.sum(axis=1)
    d_inv = 1.0 / jnp.sqrt(jnp.maximum(deg, 1e-12))
    return a * d_inv[:, None] * d_inv[None, :]


def ref_pair_mlp(feat, mlp_params):
    hp = jax.lax.Precision.HIGHEST
    (w1, b1), (w2, b2), (w3, b3) = mlp_params
    B, C, N = feat.shape
    node_i = jnp.broadcast_to(feat[:, :, None, :], (B, C, N, N))
    node_j = jnp.broadcast_to(feat[:, :, :, None], (B, C, N, N))
    pair = jnp.concatenate([node_i, node_j], axis=1)
    h = jnp.maximum(jnp.einsum("oc,bcij->boij", w1, pair, precision=hp)
                    + b1[None, :, None, None], 0.0)
    h = jnp.maximum(jnp.einsum("oc,bcij->boij", w2, h, precision=hp)
                    + b2[None, :, None, None], 0.0)
    h = jnp.maximum(jnp.einsum("oc,bcij->boij", w3, h, precision=hp)
                    + b3[None, :, None, None], 0.0)
    return h[:, 0]


def caesar_forward_reference(params, features, edge_index, edge_attr, batch, cfg):
    del batch  # graph count assumed == leading batch dim (contiguous PyG batching)
    hp = jax.lax.Precision.HIGHEST
    res = cfg["resolution"]
    N = cfg["window_size"] // res
    B, F, L = features.shape

    x = features[:, :, :N * res].reshape(B, F, N, res).mean(axis=-1)   # (B, F, N)
    pe = positional_encoding(cfg["pe_dim"], N)
    pe_b = jnp.broadcast_to(pe.T[None], (B, cfg["pe_dim"], N))
    x = jnp.concatenate([x, pe_b], axis=1)                             # (B, F+pe, N)

    conv_out = x
    for (w_f, b_f) in params["conv"]:
        cin = conv_out.shape[1]
        cols = im2col_1d(conv_out, 15, 7)
        wt = w_f.reshape(w_f.shape[0], cin * 15).T
        y = jnp.maximum(jnp.dot(cols, wt, precision=hp) + b_f, 0.0)
        conv_out = jnp.transpose(y.reshape(B, N, -1), (0, 2, 1))

    xg = jnp.transpose(x, (0, 2, 1)).reshape(B * N, -1)
    if edge_attr is None:
        edge_attr = jnp.ones((edge_index.shape[1],), dtype=jnp.float32)
    a_hat = build_norm_adj_global(edge_index, edge_attr, B * N)
    for (w, b) in params["gc"]:
        h = jnp.dot(a_hat, xg, precision=hp)
        xg = jnp.maximum(jnp.dot(h, w, precision=hp) + b, 0.0)
    xg = jnp.transpose(xg.reshape(B, N, -1), (0, 2, 1))

    feat = jnp.concatenate([xg, conv_out], axis=1)
    return ref_pair_mlp(feat, params["mlp"])


# ----------------------------------------------------------------------------
# Parameter init (PyTorch-layout weights, BN folded into conv)
# ----------------------------------------------------------------------------
def init_params(key, feature_dim, pe_dim, gc_dim, conv_dim, n_gc=2, n_conv=2):
    keys = iter(jax.random.split(key, 16))

    def w_init(k, shape, scale=0.1):
        return scale * jax.random.normal(k, shape, dtype=jnp.float32)

    in_dim = feature_dim + pe_dim

    conv = []
    cin = in_dim
    for _ in range(n_conv):
        w = w_init(next(keys), (conv_dim, cin, 15))
        b = w_init(next(keys), (conv_dim,), 0.05)
        gamma = jnp.ones((conv_dim,), jnp.float32)
        beta = jnp.zeros((conv_dim,), jnp.float32)
        mean = jnp.zeros((conv_dim,), jnp.float32)
        var = jnp.ones((conv_dim,), jnp.float32)
        conv.append(fold_bn(w, b, gamma, beta, mean, var))
        cin = conv_dim

    gc = []
    gin = in_dim
    for _ in range(n_gc):
        gc.append((w_init(next(keys), (gin, gc_dim)),
                   w_init(next(keys), (gc_dim,), 0.05)))
        gin = gc_dim

    mlp_in = (conv_dim + gc_dim) * 2
    mlp = [
        (w_init(next(keys), (mlp_in, mlp_in)), w_init(next(keys), (mlp_in,), 0.05)),
        (w_init(next(keys), (mlp_in // 2, mlp_in)), w_init(next(keys), (mlp_in // 2,), 0.05)),
        (w_init(next(keys), (1, mlp_in // 2)), w_init(next(keys), (1,), 0.05)),
    ]
    return {"conv": conv, "gc": gc, "mlp": mlp}


if __name__ == "__main__":
    resolution = 4
    window_size = 64
    feature_dim = 1
    pe_dim = 8
    gc_dim = 32
    conv_dim = 32
    B = 2
    N = window_size // resolution

    cfg = dict(resolution=resolution, window_size=window_size,
               pe_dim=pe_dim, feature_dim=feature_dim)

    key = jax.random.PRNGKey(0)
    k_feat, k_edge, k_param = jax.random.split(key, 3)
    params = init_params(k_param, feature_dim, pe_dim, gc_dim, conv_dim)
    prepped = prepare_pallas_params(params)

    features = jax.random.normal(k_feat, (B, feature_dim, window_size), dtype=jnp.float32)

    # bidirectional chain graph inside each of the B graphs (PyG-style global node ids)
    src, dst = [], []
    for g in range(B):
        for i in range(N - 1):
            a_id, b_id = g * N + i, g * N + i + 1
            src += [a_id, b_id]
            dst += [b_id, a_id]
    edge_index = jnp.array([src, dst], dtype=jnp.int32)
    edge_attr = 0.5 + jax.random.uniform(k_edge, (edge_index.shape[1],), dtype=jnp.float32)
    batch = jnp.repeat(jnp.arange(B, dtype=jnp.int32), N)

    fwd = jax.jit(functools.partial(caesar_forward_pallas, cfg=cfg))
    out = jax.block_until_ready(fwd(prepped, features, edge_index, edge_attr))

    ref = caesar_forward_reference(params, features, edge_index, edge_attr, batch, cfg)
    ref = jax.block_until_ready(ref)

    assert out.shape == (B, N, N), out.shape
    assert bool(jnp.all(jnp.isfinite(out)))
    assert bool(jnp.max(jnp.abs(out - ref)) < 5e-2), float(jnp.max(jnp.abs(out - ref)))
    print("KERNEL_OK")
</pallas_src>

<mosaic_0001>
module attributes {stable_mosaic.version = 11 : i64} {
  func.func @_caesar_fused_kernel(%arg0: i32, %arg1: memref<1x16x256xf32, #tpu.memory_space<vmem>>, %arg2: memref<1x16x16xf32, #tpu.memory_space<vmem>>, %arg3: memref<256x32xf32, #tpu.memory_space<vmem>>, %arg4: memref<1x32xf32, #tpu.memory_space<vmem>>, %arg5: memref<15x32x32xf32, #tpu.memory_space<vmem>>, %arg6: memref<1x32xf32, #tpu.memory_space<vmem>>, %arg7: memref<256x32xf32, #tpu.memory_space<vmem>>, %arg8: memref<1x32xf32, #tpu.memory_space<vmem>>, %arg9: memref<32x32xf32, #tpu.memory_space<vmem>>, %arg10: memref<1x32xf32, #tpu.memory_space<vmem>>, %arg11: memref<32x128xf32, #tpu.memory_space<vmem>>, %arg12: memref<32x128xf32, #tpu.memory_space<vmem>>, %arg13: memref<32x128xf32, #tpu.memory_space<vmem>>, %arg14: memref<32x128xf32, #tpu.memory_space<vmem>>, %arg15: memref<1x128xf32, #tpu.memory_space<vmem>>, %arg16: memref<128x64xf32, #tpu.memory_space<vmem>>, %arg17: memref<1x64xf32, #tpu.memory_space<vmem>>, %arg18: memref<1x64xf32, #tpu.memory_space<vmem>>, %arg19: memref<1x1xf32, #tpu.memory_space<smem>>, %arg20: memref<1x16x16xf32, #tpu.memory_space<vmem>>, %arg21: memref<30x32xf32, #tpu.memory_space<vmem>>) attributes {dimension_semantics = [#tpu.dimension_semantics<parallel>], iteration_bounds = array<i64: 2>, scalar_prefetch = 0 : i64, scratch_operands = 1 : i64, tpu.core_type = #tpu.core_type<tc>, window_params = [{transform_indices = @transform_0, window_bounds = array<i64: 1, 16, 256>}, {transform_indices = @transform_1, window_bounds = array<i64: 1, 16, 16>}, {pipeline_mode = #tpu.pipeline_mode<synchronous>, transform_indices = @transform_2, window_bounds = array<i64: 256, 32>}, {pipeline_mode = #tpu.pipeline_mode<synchronous>, transform_indices = @transform_3, window_bounds = array<i64: 1, 32>}, {pipeline_mode = #tpu.pipeline_mode<synchronous>, transform_indices = @transform_4, window_bounds = array<i64: 15, 32, 32>}, {pipeline_mode = #tpu.pipeline_mode<synchronous>, transform_indices = @transform_5, window_bounds = array<i64: 1, 32>}, {pipeline_mode = #tpu.pipeline_mode<synchronous>, transform_indices = @transform_6, window_bounds = array<i64: 256, 32>}, {pipeline_mode = #tpu.pipeline_mode<synchronous>, transform_indices = @transform_7, window_bounds = array<i64: 1, 32>}, {pipeline_mode = #tpu.pipeline_mode<synchronous>, transform_indices = @transform_8, window_bounds = array<i64: 32, 32>}, {pipeline_mode = #tpu.pipeline_mode<synchronous>, transform_indices = @transform_9, window_bounds = array<i64: 1, 32>}, {pipeline_mode = #tpu.pipeline_mode<synchronous>, transform_indices = @transform_10, window_bounds = array<i64: 32, 128>}, {pipeline_mode = #tpu.pipeline_mode<synchronous>, transform_indices = @transform_11, window_bounds = array<i64: 32, 128>}, {pipeline_mode = #tpu.pipeline_mode<synchronous>, transform_indices = @transform_12, window_bounds = array<i64: 32, 128>}, {pipeline_mode = #tpu.pipeline_mode<synchronous>, transform_indices = @transform_13, window_bounds = array<i64: 32, 128>}, {pipeline_mode = #tpu.pipeline_mode<synchronous>, transform_indices = @transform_14, window_bounds = array<i64: 1, 128>}, {pipeline_mode = #tpu.pipeline_mode<synchronous>, transform_indices = @transform_15, window_bounds = array<i64: 128, 64>}, {pipeline_mode = #tpu.pipeline_mode<synchronous>, transform_indices = @transform_16, window_bounds = array<i64: 1, 64>}, {pipeline_mode = #tpu.pipeline_mode<synchronous>, transform_indices = @transform_17, window_bounds = array<i64: 1, 64>}, {transform_indices = @transform_18, window_bounds = array<i64: 1, 1>}, {transform_indices = @transform_19, window_bounds = array<i64: 1, 16, 16>}]} {
    %c0 = arith.constant 0 : index
    %c0_0 = arith.constant 0 : index
    %c0_1 = arith.constant 0 : index
    %0 = vector.load %arg1[%c0, %c0_0, %c0_1] : memref<1x16x256xf32, #tpu.memory_space<vmem>>, vector<1x16x256xf32>
    %1 = vector.shape_cast %0 : vector<1x16x256xf32> to vector<16x256xf32>
    %c0_2 = arith.constant 0 : index
    %c0_3 = arith.constant 0 : index
    %c0_4 = arith.constant 0 : index
    %2 = vector.load %arg2[%c0_2, %c0_3, %c0_4] : memref<1x16x16xf32, #tpu.memory_space<vmem>>, vector<1x16x16xf32>
    %3 = vector.shape_cast %2 : vector<1x16x16xf32> to vector<16x16xf32>
    %c0_5 = arith.constant 0 : index
    %c0_6 = arith.constant 0 : index
    %4 = vector.load %arg3[%c0_5, %c0_6] : memref<256x32xf32, #tpu.memory_space<vmem>>, vector<256x32xf32>
    %cst = arith.constant dense<0.000000e+00> : vector<16x32xf32>
    %5 = tpu.matmul %1, %4, %cst {dimension_numbers = #tpu.dot_dimension_numbers<[1], [0], [0], [1], [0, 0, 1, 1], [], []>} : vector<16x256xf32>, vector<256x32xf32>, vector<16x32xf32> -> vector<16x32xf32>
    %c0_7 = arith.constant 0 : index
    %c0_8 = arith.constant 0 : index
    %6 = vector.load %arg4[%c0_7, %c0_8] : memref<1x32xf32, #tpu.memory_space<vmem>>, vector<1x32xf32>
    %7 = vector.broadcast %6 : vector<1x32xf32> to vector<16x32xf32>
    %8 = arith.addf %5, %7 : vector<16x32xf32>
    %cst_9 = arith.constant 0.000000e+00 : f32
    %9 = vector.broadcast %cst_9 : f32 to vector<16x32xf32>
    %10 = arith.maximumf %8, %9 : vector<16x32xf32>
    %cst_10 = arith.constant 0.000000e+00 : f32
    %11 = vector.broadcast %cst_10 : f32 to vector<30x32xf32>
    %c0_11 = arith.constant 0 : index
    %c0_12 = arith.constant 0 : index
    %12 = vector.load %arg21[%c0_11, %c0_12] : memref<30x32xf32, #tpu.memory_space<vmem>>, vector<30x32xf32>
    tpu.vector_store %arg21[%c0_11, %c0_12], %11 {strides = array<i32>} : memref<30x32xf32, #tpu.memory_space<vmem>>, vector<30x32xf32>,
    %c7 = arith.constant 7 : index
    %c0_13 = arith.constant 0 : index
    %13 = vector.load %arg21[%c7, %c0_13] : memref<30x32xf32, #tpu.memory_space<vmem>>, vector<16x32xf32>
    tpu.vector_store %arg21[%c7, %c0_13], %10 {strides = array<i32>} : memref<30x32xf32, #tpu.memory_space<vmem>>, vector<16x32xf32>,
    %c0_14 = arith.constant 0 : index
    %c0_15 = arith.constant 0 : index
    %14 = vector.load %arg21[%c0_14, %c0_15] : memref<30x32xf32, #tpu.memory_space<vmem>>, vector<16x32xf32>
    %c0_16 = arith.constant 0 : index
    %c0_17 = arith.constant 0 : index
    %c0_18 = arith.constant 0 : index
    %15 = vector.load %arg5[%c0_16, %c0_17, %c0_18] : memref<15x32x32xf32, #tpu.memory_space<vmem>>, vector<1x32x32xf32>
    %16 = vector.shape_cast %15 : vector<1x32x32xf32> to vector<32x32xf32>
    %cst_19 = arith.constant dense<0.000000e+00> : vector<16x32xf32>
    %17 = tpu.matmul %14, %16, %cst_19 {dimension_numbers = #tpu.dot_dimension_numbers<[1], [0], [0], [1], [0, 0, 1, 1], [], []>} : vector<16x32xf32>, vector<32x32xf32>, vector<16x32xf32> -> vector<16x32xf32>
    %c1 = arith.constant 1 : index
    %c0_20 = arith.constant 0 : index
    %18 = vector.load %arg21[%c1, %c0_20] : memref<30x32xf32, #tpu.memory_space<vmem>>, vector<16x32xf32>
    %c1_21 = arith.constant 1 : index
    %c0_22 = arith.constant 0 : index
    %c0_23 = arith.constant 0 : index
    %19 = vector.load %arg5[%c1_21, %c0_22, %c0_23] : memref<15x32x32xf32, #tpu.memory_space<vmem>>, vector<1x32x32xf32>
    %20 = vector.shape_cast %19 : vector<1x32x32xf32> to vector<32x32xf32>
    %cst_24 = arith.constant dense<0.000000e+00> : vector<16x32xf32>
    %21 = tpu.matmul %18, %20, %cst_24 {dimension_numbers = #tpu.dot_dimension_numbers<[1], [0], [0], [1], [0, 0, 1, 1], [], []>} : vector<16x32xf32>, vector<32x32xf32>, vector<16x32xf32> -> vector<16x32xf32>
    %22 = arith.addf %17, %21 : vector<16x32xf32>
    %c2 = arith.constant 2 : index
    %c0_25 = arith.constant 0 : index
    %23 = vector.load %arg21[%c2, %c0_25] : memref<30x32xf32, #tpu.memory_space<vmem>>, vector<16x32xf32>
    %c2_26 = arith.constant 2 : index
    %c0_27 = arith.constant 0 : index
    %c0_28 = arith.constant 0 : index
    %24 = vector.load %arg5[%c2_26, %c0_27, %c0_28] : memref<15x32x32xf32, #tpu.memory_space<vmem>>, vector<1x32x32xf32>
    %25 = vector.shape_cast %24 : vector<1x32x32xf32> to vector<32x32xf32>
    %cst_29 = arith.constant dense<0.000000e+00> : vector<16x32xf32>
    %26 = tpu.matmul %23, %25, %cst_29 {dimension_numbers = #tpu.dot_dimension_numbers<[1], [0], [0], [1], [0, 0, 1, 1], [], []>} : vector<16x32xf32>, vector<32x32xf32>, vector<16x32xf32> -> vector<16x32xf32>
    %27 = arith.addf %22, %26 : vector<16x32xf32>
    %c3 = arith.constant 3 : index
    %c0_30 = arith.constant 0 : index
    %28 = vector.load %arg21[%c3, %c0_30] : memref<30x32xf32, #tpu.memory_space<vmem>>, vector<16x32xf32>
    %c3_31 = arith.constant 3 : index
    %c0_32 = arith.constant 0 : index
    %c0_33 = arith.constant 0 : index
    %29 = vector.load %arg5[%c3_31, %c0_32, %c0_33] : memref<15x32x32xf32, #tpu.memory_space<vmem>>, vector<1x32x32xf32>
    %30 = vector.shape_cast %29 : vector<1x32x32xf32> to vector<32x32xf32>
    %cst_34 = arith.constant dense<0.000000e+00> : vector<16x32xf32>
    %31 = tpu.matmul %28, %30, %cst_34 {dimension_numbers = #tpu.dot_dimension_numbers<[1], [0], [0], [1], [0, 0, 1, 1], [], []>} : vector<16x32xf32>, vector<32x32xf32>, vector<16x32xf32> -> vector<16x32xf32>
    %32 = arith.addf %27, %31 : vector<16x32xf32>
    %c4 = arith.constant 4 : index
    %c0_35 = arith.constant 0 : index
    %33 = vector.load %arg21[%c4, %c0_35] : memref<30x32xf32, #tpu.memory_space<vmem>>, vector<16x32xf32>
    %c4_36 = arith.constant 4 : index
    %c0_37 = arith.constant 0 : index
    %c0_38 = arith.constant 0 : index
    %34 = vector.load %arg5[%c4_36, %c0_37, %c0_38] : memref<15x32x32xf32, #tpu.memory_space<vmem>>, vector<1x32x32xf32>
    %35 = vector.shape_cast %34 : vector<1x32x32xf32> to vector<32x32xf32>
    %cst_39 = arith.constant dense<0.000000e+00> : vector<16x32xf32>
    %36 = tpu.matmul %33, %35, %cst_39 {dimension_numbers = #tpu.dot_dimension_numbers<[1], [0], [0], [1], [0, 0, 1, 1], [], []>} : vector<16x32xf32>, vector<32x32xf32>, vector<16x32xf32> -> vector<16x32xf32>
    %37 = arith.addf %32, %36 : vector<16x32xf32>
    %c5 = arith.constant 5 : index
    %c0_40 = arith.constant 0 : index
    %38 = vector.load %arg21[%c5, %c0_40] : memref<30x32xf32, #tpu.memory_space<vmem>>, vector<16x32xf32>
    %c5_41 = arith.constant 5 : index
    %c0_42 = arith.constant 0 : index
    %c0_43 = arith.constant 0 : index
    %39 = vector.load %arg5[%c5_41, %c0_42, %c0_43] : memref<15x32x32xf32, #tpu.memory_space<vmem>>, vector<1x32x32xf32>
    %40 = vector.shape_cast %39 : vector<1x32x32xf32> to vector<32x32xf32>
    %cst_44 = arith.constant dense<0.000000e+00> : vector<16x32xf32>
    %41 = tpu.matmul %38, %40, %cst_44 {dimension_numbers = #tpu.dot_dimension_numbers<[1], [0], [0], [1], [0, 0, 1, 1], [], []>} : vector<16x32xf32>, vector<32x32xf32>, vector<16x32xf32> -> vector<16x32xf32>
    %42 = arith.addf %37, %41 : vector<16x32xf32>
    %c6 = arith.constant 6 : index
    %c0_45 = arith.constant 0 : index
    %43 = vector.load %arg21[%c6, %c0_45] : memref<30x32xf32, #tpu.memory_space<vmem>>, vector<16x32xf32>
    %c6_46 = arith.constant 6 : index
    %c0_47 = arith.constant 0 : index
    %c0_48 = arith.constant 0 : index
    %44 = vector.load %arg5[%c6_46, %c0_47, %c0_48] : memref<15x32x32xf32, #tpu.memory_space<vmem>>, vector<1x32x32xf32>
    %45 = vector.shape_cast %44 : vector<1x32x32xf32> to vector<32x32xf32>
    %cst_49 = arith.constant dense<0.000000e+00> : vector<16x32xf32>
    %46 = tpu.matmul %43, %45, %cst_49 {dimension_numbers = #tpu.dot_dimension_numbers<[1], [0], [0], [1], [0, 0, 1, 1], [], []>} : vector<16x32xf32>, vector<32x32xf32>, vector<16x32xf32> -> vector<16x32xf32>
    %47 = arith.addf %42, %46 : vector<16x32xf32>
    %c7_50 = arith.constant 7 : index
    %c0_51 = arith.constant 0 : index
    %48 = vector.load %arg21[%c7_50, %c0_51] : memref<30x32xf32, #tpu.memory_space<vmem>>, vector<16x32xf32>
    %c7_52 = arith.constant 7 : index
    %c0_53 = arith.constant 0 : index
    %c0_54 = arith.constant 0 : index
    %49 = vector.load %arg5[%c7_52, %c0_53, %c0_54] : memref<15x32x32xf32, #tpu.memory_space<vmem>>, vector<1x32x32xf32>
    %50 = vector.shape_cast %49 : vector<1x32x32xf32> to vector<32x32xf32>
    %cst_55 = arith.constant dense<0.000000e+00> : vector<16x32xf32>
    %51 = tpu.matmul %48, %50, %cst_55 {dimension_numbers = #tpu.dot_dimension_numbers<[1], [0], [0], [1], [0, 0, 1, 1], [], []>} : vector<16x32xf32>, vector<32x32xf32>, vector<16x32xf32> -> vector<16x32xf32>
    %52 = arith.addf %47, %51 : vector<16x32xf32>
    %c8 = arith.constant 8 : index
    %c0_56 = arith.constant 0 : index
    %53 = vector.load %arg21[%c8, %c0_56] : memref<30x32xf32, #tpu.memory_space<vmem>>, vector<16x32xf32>
    %c8_57 = arith.constant 8 : index
    %c0_58 = arith.constant 0 : index
    %c0_59 = arith.constant 0 : index
    %54 = vector.load %arg5[%c8_57, %c0_58, %c0_59] : memref<15x32x32xf32, #tpu.memory_space<vmem>>, vector<1x32x32xf32>
    %55 = vector.shape_cast %54 : vector<1x32x32xf32> to vector<32x32xf32>
    %cst_60 = arith.constant dense<0.000000e+00> : vector<16x32xf32>
    %56 = tpu.matmul %53, %55, %cst_60 {dimension_numbers = #tpu.dot_dimension_numbers<[1], [0], [0], [1], [0, 0, 1, 1], [], []>} : vector<16x32xf32>, vector<32x32xf32>, vector<16x32xf32> -> vector<16x32xf32>
    %57 = arith.addf %52, %56 : vector<16x32xf32>
    %c9 = arith.constant 9 : index
    %c0_61 = arith.constant 0 : index
    %58 = vector.load %arg21[%c9, %c0_61] : memref<30x32xf32, #tpu.memory_space<vmem>>, vector<16x32xf32>
    %c9_62 = arith.constant 9 : index
    %c0_63 = arith.constant 0 : index
    %c0_64 = arith.constant 0 : index
    %59 = vector.load %arg5[%c9_62, %c0_63, %c0_64] : memref<15x32x32xf32, #tpu.memory_space<vmem>>, vector<1x32x32xf32>
    %60 = vector.shape_cast %59 : vector<1x32x32xf32> to vector<32x32xf32>
    %cst_65 = arith.constant dense<0.000000e+00> : vector<16x32xf32>
    %61 = tpu.matmul %58, %60, %cst_65 {dimension_numbers = #tpu.dot_dimension_numbers<[1], [0], [0], [1], [0, 0, 1, 1], [], []>} : vector<16x32xf32>, vector<32x32xf32>, vector<16x32xf32> -> vector<16x32xf32>
    %62 = arith.addf %57, %61 : vector<16x32xf32>
    %c10 = arith.constant 10 : index
    %c0_66 = arith.constant 0 : index
    %63 = vector.load %arg21[%c10, %c0_66] : memref<30x32xf32, #tpu.memory_space<vmem>>, vector<16x32xf32>
    %c10_67 = arith.constant 10 : index
    %c0_68 = arith.constant 0 : index
    %c0_69 = arith.constant 0 : index
    %64 = vector.load %arg5[%c10_67, %c0_68, %c0_69] : memref<15x32x32xf32, #tpu.memory_space<vmem>>, vector<1x32x32xf32>
    %65 = vector.shape_cast %64 : vector<1x32x32xf32> to vector<32x32xf32>
    %cst_70 = arith.constant dense<0.000000e+00> : vector<16x32xf32>
    %66 = tpu.matmul %63, %65, %cst_70 {dimension_numbers = #tpu.dot_dimension_numbers<[1], [0], [0], [1], [0, 0, 1, 1], [], []>} : vector<16x32xf32>, vector<32x32xf32>, vector<16x32xf32> -> vector<16x32xf32>
    %67 = arith.addf %62, %66 : vector<16x32xf32>
    %c11 = arith.constant 11 : index
    %c0_71 = arith.constant 0 : index
    %68 = vector.load %arg21[%c11, %c0_71] : memref<30x32xf32, #tpu.memory_space<vmem>>, vector<16x32xf32>
    %c11_72 = arith.constant 11 : index
    %c0_73 = arith.constant 0 : index
    %c0_74 = arith.constant 0 : index
    %69 = vector.load %arg5[%c11_72, %c0_73, %c0_74] : memref<15x32x32xf32, #tpu.memory_space<vmem>>, vector<1x32x32xf32>
    %70 = vector.shape_cast %69 : vector<1x32x32xf32> to vector<32x32xf32>
    %cst_75 = arith.constant dense<0.000000e+00> : vector<16x32xf32>
    %71 = tpu.matmul %68, %70, %cst_75 {dimension_numbers = #tpu.dot_dimension_numbers<[1], [0], [0], [1], [0, 0, 1, 1], [], []>} : vector<16x32xf32>, vector<32x32xf32>, vector<16x32xf32> -> vector<16x32xf32>
    %72 = arith.addf %67, %71 : vector<16x32xf32>
    %c12 = arith.constant 12 : index
    %c0_76 = arith.constant 0 : index
    %73 = vector.load %arg21[%c12, %c0_76] : memref<30x32xf32, #tpu.memory_space<vmem>>, vector<16x32xf32>
    %c12_77 = arith.constant 12 : index
    %c0_78 = arith.constant 0 : index
    %c0_79 = arith.constant 0 : index
    %74 = vector.load %arg5[%c12_77, %c0_78, %c0_79] : memref<15x32x32xf32, #tpu.memory_space<vmem>>, vector<1x32x32xf32>
    %75 = vector.shape_cast %74 : vector<1x32x32xf32> to vector<32x32xf32>
    %cst_80 = arith.constant dense<0.000000e+00> : vector<16x32xf32>
    %76 = tpu.matmul %73, %75, %cst_80 {dimension_numbers = #tpu.dot_dimension_numbers<[1], [0], [0], [1], [0, 0, 1, 1], [], []>} : vector<16x32xf32>, vector<32x32xf32>, vector<16x32xf32> -> vector<16x32xf32>
    %77 = arith.addf %72, %76 : vector<16x32xf32>
    %c13 = arith.constant 13 : index
    %c0_81 = arith.constant 0 : index
    %78 = vector.load %arg21[%c13, %c0_81] : memref<30x32xf32, #tpu.memory_space<vmem>>, vector<16x32xf32>
    %c13_82 = arith.constant 13 : index
    %c0_83 = arith.constant 0 : index
    %c0_84 = arith.constant 0 : index
    %79 = vector.load %arg5[%c13_82, %c0_83, %c0_84] : memref<15x32x32xf32, #tpu.memory_space<vmem>>, vector<1x32x32xf32>
    %80 = vector.shape_cast %79 : vector<1x32x32xf32> to vector<32x32xf32>
    %cst_85 = arith.constant dense<0.000000e+00> : vector<16x32xf32>
    %81 = tpu.matmul %78, %80, %cst_85 {dimension_numbers = #tpu.dot_dimension_numbers<[1], [0], [0], [1], [0, 0, 1, 1], [], []>} : vector<16x32xf32>, vector<32x32xf32>, vector<16x32xf32> -> vector<16x32xf32>
    %82 = arith.addf %77, %81 : vector<16x32xf32>
    %c14 = arith.constant 14 : index
    %c0_86 = arith.constant 0 : index
    %83 = vector.load %arg21[%c14, %c0_86] : memref<30x32xf32, #tpu.memory_space<vmem>>, vector<16x32xf32>
    %c14_87 = arith.constant 14 : index
    %c0_88 = arith.constant 0 : index
    %c0_89 = arith.constant 0 : index
    %84 = vector.load %arg5[%c14_87, %c0_88, %c0_89] : memref<15x32x32xf32, #tpu.memory_space<vmem>>, vector<1x32x32xf32>
    %85 = vector.shape_cast %84 : vector<1x32x32xf32> to vector<32x32xf32>
    %cst_90 = arith.constant dense<0.000000e+00> : vector<16x32xf32>
    %86 = tpu.matmul %83, %85, %cst_90 {dimension_numbers = #tpu.dot_dimension_numbers<[1], [0], [0], [1], [0, 0, 1, 1], [], []>} : vector<16x32xf32>, vector<32x32xf32>, vector<16x32xf32> -> vector<16x32xf32>
    %87 = arith.addf %82, %86 : vector<16x32xf32>
    %c0_91 = arith.constant 0 : index
    %c0_92 = arith.constant 0 : index
    %88 = vector.load %arg6[%c0_91, %c0_92] : memref<1x32xf32, #tpu.memory_space<vmem>>, vector<1x32xf32>
    %89 = vector.broadcast %88 : vector<1x32xf32> to vector<16x32xf32>
    %90 = arith.addf %87, %89 : vector<16x32xf32>
    %cst_93 = arith.constant 0.000000e+00 : f32
    %91 = vector.broadcast %cst_93 : f32 to vector<16x32xf32>
    %92 = arith.maximumf %90, %91 : vector<16x32xf32>
    %c0_94 = arith.constant 0 : index
    %c0_95 = arith.constant 0 : index
    %93 = vector.load %arg7[%c0_94, %c0_95] : memref<256x32xf32, #tpu.memory_space<vmem>>, vector<256x32xf32>
    %cst_96 = arith.constant dense<0.000000e+00> : vector<16x32xf32>
    %94 = tpu.matmul %1, %93, %cst_96 {dimension_numbers = #tpu.dot_dimension_numbers<[1], [0], [0], [1], [0, 0, 1, 1], [], []>} : vector<16x256xf32>, vector<256x32xf32>, vector<16x32xf32> -> vector<16x32xf32>
    %cst_97 = arith.constant dense<0.000000e+00> : vector<16x32xf32>
    %95 = tpu.matmul %3, %94, %cst_97 {dimension_numbers = #tpu.dot_dimension_numbers<[1], [0], [0], [1], [0, 0, 1, 1], [], []>} : vector<16x16xf32>, vector<16x32xf32>, vector<16x32xf32> -> vector<16x32xf32>
    %c0_98 = arith.constant 0 : index
    %c0_99 = arith.constant 0 : index
    %96 = vector.load %arg8[%c0_98, %c0_99] : memref<1x32xf32, #tpu.memory_space<vmem>>, vector<1x32xf32>
    %97 = vector.broadcast %96 : vector<1x32xf32> to vector<16x32xf32>
    %98 = arith.addf %95, %97 : vector<16x32xf32>
    %cst_100 = arith.constant 0.000000e+00 : f32
    %99 = vector.broadcast %cst_100 : f32 to vector<16x32xf32>
    %100 = arith.maximumf %98, %99 : vector<16x32xf32>
    %c0_101 = arith.constant 0 : index
    %c0_102 = arith.constant 0 : index
    %101 = vector.load %arg9[%c0_101, %c0_102] : memref<32x32xf32, #tpu.memory_space<vmem>>, vector<32x32xf32>
    %cst_103 = arith.constant dense<0.000000e+00> : vector<16x32xf32>
    %102 = tpu.matmul %100, %101, %cst_103 {dimension_numbers = #tpu.dot_dimension_numbers<[1], [0], [0], [1], [0, 0, 1, 1], [], []>} : vector<16x32xf32>, vector<32x32xf32>, vector<16x32xf32> -> vector<16x32xf32>
    %cst_104 = arith.constant dense<0.000000e+00> : vector<16x32xf32>
    %103 = tpu.matmul %3, %102, %cst_104 {dimension_numbers = #tpu.dot_dimension_numbers<[1], [0], [0], [1], [0, 0, 1, 1], [], []>} : vector<16x16xf32>, vector<16x32xf32>, vector<16x32xf32> -> vector<16x32xf32>
    %c0_105 = arith.constant 0 : index
    %c0_106 = arith.constant 0 : index
    %104 = vector.load %arg10[%c0_105, %c0_106] : memref<1x32xf32, #tpu.memory_space<vmem>>, vector<1x32xf32>
    %105 = vector.broadcast %104 : vector<1x32xf32> to vector<16x32xf32>
    %106 = arith.addf %103, %105 : vector<16x32xf32>
    %cst_107 = arith.constant 0.000000e+00 : f32
    %107 = vector.broadcast %cst_107 : f32 to vector<16x32xf32>
    %108 = arith.maximumf %106, %107 : vector<16x32xf32>
    %c0_108 = arith.constant 0 : index
    %c0_109 = arith.constant 0 : index
    %109 = vector.load %arg11[%c0_108, %c0_109] : memref<32x128xf32, #tpu.memory_space<vmem>>, vector<32x128xf32>
    %cst_110 = arith.constant dense<0.000000e+00> : vector<16x128xf32>
    %110 = tpu.matmul %108, %109, %cst_110 {dimension_numbers = #tpu.dot_dimension_numbers<[1], [0], [0], [1], [0, 0, 1, 1], [], []>} : vector<16x32xf32>, vector<32x128xf32>, vector<16x128xf32> -> vector<16x128xf32>
    %c0_111 = arith.constant 0 : index
    %c0_112 = arith.constant 0 : index
    %111 = vector.load %arg12[%c0_111, %c0_112] : memref<32x128xf32, #tpu.memory_space<vmem>>, vector<32x128xf32>
    %cst_113 = arith.constant dense<0.000000e+00> : vector<16x128xf32>
    %112 = tpu.matmul %92, %111, %cst_113 {dimension_numbers = #tpu.dot_dimension_numbers<[1], [0], [0], [1], [0, 0, 1, 1], [], []>} : vector<16x32xf32>, vector<32x128xf32>, vector<16x128xf32> -> vector<16x128xf32>
    %113 = arith.addf %110, %112 : vector<16x128xf32>
    %c0_114 = arith.constant 0 : index
    %c0_115 = arith.constant 0 : index
    %114 = vector.load %arg13[%c0_114, %c0_115] : memref<32x128xf32, #tpu.memory_space<vmem>>, vector<32x128xf32>
    %cst_116 = arith.constant dense<0.000000e+00> : vector<16x128xf32>
    %115 = tpu.matmul %108, %114, %cst_116 {dimension_numbers = #tpu.dot_dimension_numbers<[1], [0], [0], [1], [0, 0, 1, 1], [], []>} : vector<16x32xf32>, vector<32x128xf32>, vector<16x128xf32> -> vector<16x128xf32>
    %c0_117 = arith.constant 0 : index
    %c0_118 = arith.constant 0 : index
    %116 = vector.load %arg14[%c0_117, %c0_118] : memref<32x128xf32, #tpu.memory_space<vmem>>, vector<32x128xf32>
    %cst_119 = arith.constant dense<0.000000e+00> : vector<16x128xf32>
    %117 = tpu.matmul %92, %116, %cst_119 {dimension_numbers = #tpu.dot_dimension_numbers<[1], [0], [0], [1], [0, 0, 1, 1], [], []>} : vector<16x32xf32>, vector<32x128xf32>, vector<16x128xf32> -> vector<16x128xf32>
    %118 = arith.addf %115, %117 : vector<16x128xf32>
    %119 = vector.shape_cast %113 : vector<16x128xf32> to vector<1x16x128xf32>
    %120 = vector.shape_cast %118 : vector<16x128xf32> to vector<16x1x128xf32>
    %121 = vector.broadcast %119 : vector<1x16x128xf32> to vector<16x16x128xf32>
    %122 = vector.broadcast %120 : vector<16x1x128xf32> to vector<16x16x128xf32>
    %123 = arith.addf %121, %122 : vector<16x16x128xf32>
    %c0_120 = arith.constant 0 : index
    %c0_121 = arith.constant 0 : index
    %124 = vector.load %arg15[%c0_120, %c0_121] : memref<1x128xf32, #tpu.memory_space<vmem>>, vector<1x128xf32>
    %125 = vector.shape_cast %124 : vector<1x128xf32> to vector<1x1x128xf32>
    %126 = vector.broadcast %125 : vector<1x1x128xf32> to vector<16x16x128xf32>
    %127 = arith.addf %123, %126 : vector<16x16x128xf32>
    %cst_122 = arith.constant 0.000000e+00 : f32
    %128 = vector.broadcast %cst_122 : f32 to vector<16x16x128xf32>
    %129 = arith.maximumf %127, %128 : vector<16x16x128xf32>
    %130 = vector.shape_cast %129 : vector<16x16x128xf32> to vector<256x128xf32>
    %c0_123 = arith.constant 0 : index
    %c0_124 = arith.constant 0 : index
    %131 = vector.load %arg16[%c0_123, %c0_124] : memref<128x64xf32, #tpu.memory_space<vmem>>, vector<128x64xf32>
    %cst_125 = arith.constant dense<0.000000e+00> : vector<256x64xf32>
    %132 = tpu.matmul %130, %131, %cst_125 {dimension_numbers = #tpu.dot_dimension_numbers<[1], [0], [0], [1], [0, 0, 1, 1], [], []>} : vector<256x128xf32>, vector<128x64xf32>, vector<256x64xf32> -> vector<256x64xf32>
    %c0_126 = arith.constant 0 : index
    %c0_127 = arith.constant 0 : index
    %133 = vector.load %arg17[%c0_126, %c0_127] : memref<1x64xf32, #tpu.memory_space<vmem>>, vector<1x64xf32>
    %134 = vector.broadcast %133 : vector<1x64xf32> to vector<256x64xf32>
    %135 = arith.addf %132, %134 : vector<256x64xf32>
    %cst_128 = arith.constant 0.000000e+00 : f32
    %136 = vector.broadcast %cst_128 : f32 to vector<256x64xf32>
    %137 = arith.maximumf %135, %136 : vector<256x64xf32>
    %138 = vector.shape_cast %137 : vector<256x64xf32> to vector<16x16x64xf32>
    %c0_129 = arith.constant 0 : index
    %c0_130 = arith.constant 0 : index
    %139 = vector.load %arg18[%c0_129, %c0_130] : memref<1x64xf32, #tpu.memory_space<vmem>>, vector<1x64xf32>
    %140 = vector.shape_cast %139 : vector<1x64xf32> to vector<1x1x64xf32>
    %141 = vector.broadcast %140 : vector<1x1x64xf32> to vector<16x16x64xf32>
    %142 = arith.mulf %138, %141 : vector<16x16x64xf32>
    %cst_131 = arith.constant dense<0.000000e+00> : vector<16x16xf32>
    %143 = vector.multi_reduction <add>, %142, %cst_131 [2] : vector<16x16x64xf32> to vector<16x16xf32>
    %c0_132 = arith.constant 0 : index
    %c0_133 = arith.constant 0 : index
    %144 = memref.load %arg19[%c0_132, %c0_133] : memref<1x1xf32, #tpu.memory_space<smem>>
    %145 = vector.broadcast %144 : f32 to vector<16x16xf32>
    %146 = arith.addf %143, %145 : vector<16x16xf32>
    %cst_134 = arith.constant 0.000000e+00 : f32
    %147 = vector.broadcast %cst_134 : f32 to vector<16x16xf32>
    %148 = arith.maximumf %146, %147 : vector<16x16xf32>
    %c0_135 = arith.constant 0 : index
    %c0_136 = arith.constant 0 : index
    %c0_137 = arith.constant 0 : index
    %149 = vector.load %arg20[%c0_135, %c0_136, %c0_137] : memref<1x16x16xf32, #tpu.memory_space<vmem>>, vector<1x16x16xf32>
    %150 = vector.shape_cast %149 : vector<1x16x16xf32> to vector<16x16xf32>
    %151 = vector.shape_cast %148 : vector<16x16xf32> to vector<1x16x16xf32>
    tpu.vector_store %arg20[%c0_135, %c0_136, %c0_137], %151 {strides = array<i32>} : memref<1x16x16xf32, #tpu.memory_space<vmem>>, vector<1x16x16xf32>,
    return
  }
  func.func @transform_0(%arg0: i32) -> (i32, i32, i32) {
    %c0_i32 = arith.constant 0 : i32
    %c0_i32_0 = arith.constant 0 : i32
    %c0_i32_1 = arith.constant 0 : i32
    return %arg0, %c0_i32, %c0_i32_0 : i32, i32, i32
  }
  func.func @transform_1(%arg0: i32) -> (i32, i32, i32) {
    %c0_i32 = arith.constant 0 : i32
    %c0_i32_0 = arith.constant 0 : i32
    %c0_i32_1 = arith.constant 0 : i32
    return %arg0, %c0_i32, %c0_i32_0 : i32, i32, i32
  }
  func.func @transform_2(%arg0: i32) -> (i32, i32) {
    %c0_i32 = arith.constant 0 : i32
    %c0_i32_0 = arith.constant 0 : i32
    %c0_i32_1 = arith.constant 0 : i32
    return %c0_i32, %c0_i32_0 : i32, i32
  }
  func.func @transform_3(%arg0: i32) -> (i32, i32) {
    %c0_i32 = arith.constant 0 : i32
    %c0_i32_0 = arith.constant 0 : i32
    %c0_i32_1 = arith.constant 0 : i32
    return %c0_i32, %c0_i32_0 : i32, i32
  }
  func.func @transform_4(%arg0: i32) -> (i32, i32, i32) {
    %c0_i32 = arith.constant 0 : i32
    %c0_i32_0 = arith.constant 0 : i32
    %c0_i32_1 = arith.constant 0 : i32
    %c0_i32_2 = arith.constant 0 : i32
    return %c0_i32, %c0_i32_0, %c0_i32_1 : i32, i32, i32
  }
  func.func @transform_5(%arg0: i32) -> (i32, i32) {
    %c0_i32 = arith.constant 0 : i32
    %c0_i32_0 = arith.constant 0 : i32
    %c0_i32_1 = arith.constant 0 : i32
    return %c0_i32, %c0_i32_0 : i32, i32
  }
  func.func @transform_6(%arg0: i32) -> (i32, i32) {
    %c0_i32 = arith.constant 0 : i32
    %c0_i32_0 = arith.constant 0 : i32
    %c0_i32_1 = arith.constant 0 : i32
    return %c0_i32, %c0_i32_0 : i32, i32
  }
  func.func @transform_7(%arg0: i32) -> (i32, i32) {
    %c0_i32 = arith.constant 0 : i32
    %c0_i32_0 = arith.constant 0 : i32
    %c0_i32_1 = arith.constant 0 : i32
    return %c0_i32, %c0_i32_0 : i32, i32
  }
  func.func @transform_8(%arg0: i32) -> (i32, i32) {
    %c0_i32 = arith.constant 0 : i32
    %c0_i32_0 = arith.constant 0 : i32
    %c0_i32_1 = arith.constant 0 : i32
    return %c0_i32, %c0_i32_0 : i32, i32
  }
  func.func @transform_9(%arg0: i32) -> (i32, i32) {
    %c0_i32 = arith.constant 0 : i32
    %c0_i32_0 = arith.constant 0 : i32
    %c0_i32_1 = arith.constant 0 : i32
    return %c0_i32, %c0_i32_0 : i32, i32
  }
  func.func @transform_10(%arg0: i32) -> (i32, i32) {
    %c0_i32 = arith.constant 0 : i32
    %c0_i32_0 = arith.constant 0 : i32
    %c0_i32_1 = arith.constant 0 : i32
    return %c0_i32, %c0_i32_0 : i32, i32
  }
  func.func @transform_11(%arg0: i32) -> (i32, i32) {
    %c0_i32 = arith.constant 0 : i32
    %c0_i32_0 = arith.constant 0 : i32
    %c0_i32_1 = arith.constant 0 : i32
    return %c0_i32, %c0_i32_0 : i32, i32
  }
  func.func @transform_12(%arg0: i32) -> (i32, i32) {
    %c0_i32 = arith.constant 0 : i32
    %c0_i32_0 = arith.constant 0 : i32
    %c0_i32_1 = arith.constant 0 : i32
    return %c0_i32, %c0_i32_0 : i32, i32
  }
  func.func @transform_13(%arg0: i32) -> (i32, i32) {
    %c0_i32 = arith.constant 0 : i32
    %c0_i32_0 = arith.constant 0 : i32
    %c0_i32_1 = arith.constant 0 : i32
    return %c0_i32, %c0_i32_0 : i32, i32
  }
  func.func @transform_14(%arg0: i32) -> (i32, i32) {
    %c0_i32 = arith.constant 0 : i32
    %c0_i32_0 = arith.constant 0 : i32
    %c0_i32_1 = arith.constant 0 : i32
    return %c0_i32, %c0_i32_0 : i32, i32
  }
  func.func @transform_15(%arg0: i32) -> (i32, i32) {
    %c0_i32 = arith.constant 0 : i32
    %c0_i32_0 = arith.constant 0 : i32
    %c0_i32_1 = arith.constant 0 : i32
    return %c0_i32, %c0_i32_0 : i32, i32
  }
  func.func @transform_16(%arg0: i32) -> (i32, i32) {
    %c0_i32 = arith.constant 0 : i32
    %c0_i32_0 = arith.constant 0 : i32
    %c0_i32_1 = arith.constant 0 : i32
    return %c0_i32, %c0_i32_0 : i32, i32
  }
  func.func @transform_17(%arg0: i32) -> (i32, i32) {
    %c0_i32 = arith.constant 0 : i32
    %c0_i32_0 = arith.constant 0 : i32
    %c0_i32_1 = arith.constant 0 : i32
    return %c0_i32, %c0_i32_0 : i32, i32
  }
  func.func @transform_18(%arg0: i32) -> (i32, i32) {
    %c0_i32 = arith.constant 0 : i32
    %c0_i32_0 = arith.constant 0 : i32
    %c0_i32_1 = arith.constant 0 : i32
    return %c0_i32, %c0_i32_0 : i32, i32
  }
  func.func @transform_19(%arg0: i32) -> (i32, i32, i32) {
    %c0_i32 = arith.constant 0 : i32
    %c0_i32_0 = arith.constant 0 : i32
    %c0_i32_1 = arith.constant 0 : i32
    return %arg0, %c0_i32, %c0_i32_0 : i32, i32, i32
  }
}

</mosaic_0001>

<llo_original>
// kernel: caesar_forward_pallas.1
$region0: #{caesar_forward_pallas.1}
  #allocation0 [shape = 'u32[]', space=smem, size = 0x4, offset = 0x4, fixed_abs, tag = 'smem constant byte address 0x4 - core index']
  #allocation1 [shape = 'u32[144,128]{1,0:T(1,128)}', space=vmem, size = 0x12000, scoped, tag = 'internal scratch']
  #allocation2 [shape = 'f32[30,32]{1,0:T(8,128)}', space=vmem, size = 0x4000, scoped, tag = 'scratch operand']
  #allocation3 [shape = 'f32[1,1]{1,0:T(1,128)S(6)}', space=smem, size = 0x200, scoped, tag = 'scoped memory for caesar_forward_pallas.1']
  %s0 = inlined_call_operand.vmem [shape: f32[2,16,256], index: 0, kind: input, shape index: {}]
  %s1 = inlined_call_operand.vmem [shape: f32[2,16,16], index: 1, kind: input, shape index: {}]
  %s2 = inlined_call_operand.vmem [shape: f32[256,32], index: 2, kind: input, shape index: {}]
  %s3 = inlined_call_operand.vmem [shape: f32[1,32], index: 3, kind: input, shape index: {}]
  %s4 = inlined_call_operand.vmem [shape: f32[15,32,32], index: 4, kind: input, shape index: {}]
  %s5 = inlined_call_operand.vmem [shape: f32[1,32], index: 5, kind: input, shape index: {}]
  %s6 = inlined_call_operand.vmem [shape: f32[256,32], index: 6, kind: input, shape index: {}]
  %s7 = inlined_call_operand.vmem [shape: f32[1,32], index: 7, kind: input, shape index: {}]
  %s8 = inlined_call_operand.vmem [shape: f32[32,32], index: 8, kind: input, shape index: {}]
  %s9 = inlined_call_operand.vmem [shape: f32[1,32], index: 9, kind: input, shape index: {}]
  %s10 = inlined_call_operand.vmem [shape: f32[32,128], index: 10, kind: input, shape index: {}]
  %s11 = inlined_call_operand.vmem [shape: f32[32,128], index: 11, kind: input, shape index: {}]
  %s12 = inlined_call_operand.vmem [shape: f32[32,128], index: 12, kind: input, shape index: {}]
  %s13 = inlined_call_operand.vmem [shape: f32[32,128], index: 13, kind: input, shape index: {}]
  %s14 = inlined_call_operand.vmem [shape: f32[1,128], index: 14, kind: input, shape index: {}]
  %s15 = inlined_call_operand.vmem [shape: f32[128,64], index: 15, kind: input, shape index: {}]
  %s16 = inlined_call_operand.vmem [shape: f32[1,64], index: 16, kind: input, shape index: {}]
  %s17 = inlined_call_operand.vmem [shape: f32[1,64], index: 17, kind: input, shape index: {}]
  %s18 = inlined_call_operand.<no memory space> [shape: f32[1,1], index: 18, kind: input, shape index: {}]
  %s19 = inlined_call_operand.hbm [shape: f32[2,16,16], index: 19, kind: output, shape index: {}]
  %s20 = sld [smem:[#allocation0]]
  $region109: #{caesar_forward_pallas.1} parent=0
    _
  %s22 = ssub.s32 1, %s20
  %s23 = scalar_select 0, %s22, %s20
  %24 = sst [smem:[#allocation3]] %s18
  $region1: #{caesar_forward_pallas.1} parent=0
    #allocation4 [shape = 'u8[16384]{0}', space=vmem, size = 0x4000, scoped, tag = 'output window, operand 0']
    #allocation5 [shape = 's32[2]{0}', space=sflag, size = 0x8, scoped, tag = 'scoped memory for caesar_forward_pallas.1']
    %25 = vsyncpa [#allocation5], 0
    %s26 = scalar_lea.sflag [#allocation5], 1
    %27 = vsyncpa %s26, 0
    loop: start=0, step=1, limit=4
    $region2: #{caesar_forward_pallas.1} parent=1 // loop_pre_header
      _
    $region3: #{caesar_forward_pallas.1} parent=1 // loop_header
      %s29 = sphi 0, %s33
      %p30 = scmp.ge.s32.totalorder %s29, 4
      %s39 = sphi 0, %s41
      %s42 = sphi 0, %s39
      %s43 = sphi 0, %s42
      %s59 = sphi 0, %s43
      %s65 = sphi 0, %s67
      %s68 = sphi 0, %s65
      %s69 = sphi 0, %s68
      %s85 = sphi 0, %s69
      %s89 = sphi 0, %s89
      %s91 = sphi 0, %s89
      %s92 = sphi 0, %s91
      %s106 = sphi 0, %s92
      %s110 = sphi 0, %s110
      %s112 = sphi 0, %s110
      %s113 = sphi 0, %s112
      %s127 = sphi 0, %s113
      %s131 = sphi 0, %s131
      %s133 = sphi 0, %s131
      %s134 = sphi 0, %s133
      %s148 = sphi 0, %s134
      %s152 = sphi 0, %s152
      %s154 = sphi 0, %s152
      %s155 = sphi 0, %s154
      %s169 = sphi 0, %s155
      %s173 = sphi 0, %s173
      %s175 = sphi 0, %s173
      %s176 = sphi 0, %s175
      %s190 = sphi 0, %s176
      %s194 = sphi 0, %s194
      %s196 = sphi 0, %s194
      %s197 = sphi 0, %s196
      %s211 = sphi 0, %s197
      %s215 = sphi 0, %s215
      %s217 = sphi 0, %s215
      %s218 = sphi 0, %s217
      %s232 = sphi 0, %s218
      %s236 = sphi 0, %s236
      %s238 = sphi 0, %s236
      %s239 = sphi 0, %s238
      %s253 = sphi 0, %s239
      %s257 = sphi 0, %s257
      %s259 = sphi 0, %s257
      %s260 = sphi 0, %s259
      %s274 = sphi 0, %s260
      %s278 = sphi 0, %s278
      %s280 = sphi 0, %s278
      %s281 = sphi 0, %s280
      %s295 = sphi 0, %s281
      %s299 = sphi 0, %s299
      %s301 = sphi 0, %s299
      %s302 = sphi 0, %s301
      %s316 = sphi 0, %s302
      %s320 = sphi 0, %s320
      %s322 = sphi 0, %s320
      %s323 = sphi 0, %s322
      %s337 = sphi 0, %s323
      %s341 = sphi 0, %s341
      %s343 = sphi 0, %s341
      %s344 = sphi 0, %s343
      %s358 = sphi 0, %s344
      %s362 = sphi 0, %s362
      %s364 = sphi 0, %s362
      %s365 = sphi 0, %s364
      %s379 = sphi 0, %s365
      %s383 = sphi 0, %s383
      %s385 = sphi 0, %s383
      %s386 = sphi 0, %s385
      %s400 = sphi 0, %s386
      %s404 = sphi 0, %s404
      %s406 = sphi 0, %s404
      %s407 = sphi 0, %s406
      %s421 = sphi 0, %s407
      %s425 = sphi 0, %s425
      %s427 = sphi 0, %s425
      %s428 = sphi 0, %s427
      %s442 = sphi 0, %s428
      %s448 = sphi 0, %s450
      %s451 = sphi 0, %s448
      %s452 = sphi 0, %s451
      %s468 = sphi 0, %s452
    $region4: #{caesar_forward_pallas.1} parent=1 // loop_header_branch
      %32 = sbr.rel (%p30) target = $region8
    $region5: #{caesar_forward_pallas.1} parent=1 // loop_body
      %s34 = ssub.s32 %s29, 1
      %s35 = ssub.s32 %s29, 2
      %s36 = sadd.s32 %s29, 1
      %s37 = ssub.s32 %s29, %s36
      %p38 = scmp.eq.s32.totalorder %s37, 0
      %s40 = sadd.s32 %s39, 1
      %s41 = scalar_select %p38, %s39, %s40
      %p44 = pneg %p38
      %p45 = scmp.eq.s32.totalorder %s29, 1
      %p46 = por %p44, %p45
      %p47 = scmp.ne.s32.totalorder %s39, %s42
      %p48 = scmp.eq.s32.totalorder %s29, 0
      %p49 = por %p47, %p48
      %p50 = scmp.ne.s32.totalorder %s39, %s42
      %p51 = scmp.eq.s32.totalorder %s34, 1
      %p52 = por %p50, %p51
      %p53 = scmp.ne.s32.totalorder %s42, %s43
      %p54 = scmp.eq.s32.totalorder %s34, 0
      %p55 = por %p53, %p54
      %p56 = scmp.ne.s32.totalorder %s42, %s43
      %p57 = scmp.eq.s32.totalorder %s35, 1
      %p58 = por %p56, %p57
      %p60 = scmp.ne.s32.totalorder %s43, %s59
      %p61 = scmp.eq.s32.totalorder %s35, 0
      %p62 = por %p60, %p61
      %s63 = ssub.s32 %s29, %s36
      %p64 = scmp.eq.s32.totalorder %s63, 0
      %s66 = sadd.s32 %s65, 1
      %s67 = scalar_select %p64, %s65, %s66
      %p70 = pneg %p64
      %p71 = scmp.eq.s32.totalorder %s29, 1
      %p72 = por %p70, %p71
      %p73 = scmp.ne.s32.totalorder %s65, %s68
      %p74 = scmp.eq.s32.totalorder %s29, 0
      %p75 = por %p73, %p74
      %p76 = scmp.ne.s32.totalorder %s65, %s68
      %p77 = scmp.eq.s32.totalorder %s34, 1
      %p78 = por %p76, %p77
      %p79 = scmp.ne.s32.totalorder %s68, %s69
      %p80 = scmp.eq.s32.totalorder %s34, 0
      %p81 = por %p79, %p80
      %p82 = scmp.ne.s32.totalorder %s68, %s69
      %p83 = scmp.eq.s32.totalorder %s35, 1
      %p84 = por %p82, %p83
      %p86 = scmp.ne.s32.totalorder %s69, %s85
      %p87 = scmp.eq.s32.totalorder %s35, 0
      %p88 = por %p86, %p87
      %s90 = sadd.s32 %s89, 1
      %p93 = scmp.eq.s32.totalorder %s29, 1
      %p94 = scmp.ne.s32.totalorder %s89, %s91
      %p95 = scmp.eq.s32.totalorder %s29, 0
      %p96 = por %p94, %p95
      %p97 = scmp.ne.s32.totalorder %s89, %s91
      %p98 = scmp.eq.s32.totalorder %s34, 1
      %p99 = por %p97, %p98
      %p100 = scmp.ne.s32.totalorder %s91, %s92
      %p101 = scmp.eq.s32.totalorder %s34, 0
      %p102 = por %p100, %p101
      %p103 = scmp.ne.s32.totalorder %s91, %s92
      %p104 = scmp.eq.s32.totalorder %s35, 1
      %p105 = por %p103, %p104
      %p107 = scmp.ne.s32.totalorder %s92, %s106
      %p108 = scmp.eq.s32.totalorder %s35, 0
      %p109 = por %p107, %p108
      %s111 = sadd.s32 %s110, 1
      %p114 = scmp.eq.s32.totalorder %s29, 1
      %p115 = scmp.ne.s32.totalorder %s110, %s112
      %p116 = scmp.eq.s32.totalorder %s29, 0
      %p117 = por %p115, %p116
      %p118 = scmp.ne.s32.totalorder %s110, %s112
      %p119 = scmp.eq.s32.totalorder %s34, 1
      %p120 = por %p118, %p119
      %p121 = scmp.ne.s32.totalorder %s112, %s113
      %p122 = scmp.eq.s32.totalorder %s34, 0
      %p123 = por %p121, %p122
      %p124 = scmp.ne.s32.totalorder %s112, %s113
      %p125 = scmp.eq.s32.totalorder %s35, 1
      %p126 = por %p124, %p125
      %p128 = scmp.ne.s32.totalorder %s113, %s127
      %p129 = scmp.eq.s32.totalorder %s35, 0
      %p130 = por %p128, %p129
      %s132 = sadd.s32 %s131, 1
      %p135 = scmp.eq.s32.totalorder %s29, 1
      %p136 = scmp.ne.s32.totalorder %s131, %s133
      %p137 = scmp.eq.s32.totalorder %s29, 0
      %p138 = por %p136, %p137
      %p139 = scmp.ne.s32.totalorder %s131, %s133
      %p140 = scmp.eq.s32.totalorder %s34, 1
      %p141 = por %p139, %p140
      %p142 = scmp.ne.s32.totalorder %s133, %s134
      %p143 = scmp.eq.s32.totalorder %s34, 0
      %p144 = por %p142, %p143
      %p145 = scmp.ne.s32.totalorder %s133, %s134
      %p146 = scmp.eq.s32.totalorder %s35, 1
      %p147 = por %p145, %p146
      %p149 = scmp.ne.s32.totalorder %s134, %s148
      %p150 = scmp.eq.s32.totalorder %s35, 0
      %p151 = por %p149, %p150
      %s153 = sadd.s32 %s152, 1
      %p156 = scmp.eq.s32.totalorder %s29, 1
      %p157 = scmp.ne.s32.totalorder %s152, %s154
      %p158 = scmp.eq.s32.totalorder %s29, 0
      %p159 = por %p157, %p158
      %p160 = scmp.ne.s32.totalorder %s152, %s154
      %p161 = scmp.eq.s32.totalorder %s34, 1
      %p162 = por %p160, %p161
      %p163 = scmp.ne.s32.totalorder %s154, %s155
      %p164 = scmp.eq.s32.totalorder %s34, 0
      %p165 = por %p163, %p164
      %p166 = scmp.ne.s32.totalorder %s154, %s155
      %p167 = scmp.eq.s32.totalorder %s35, 1
      %p168 = por %p166, %p167
      %p170 = scmp.ne.s32.totalorder %s155, %s169
      %p171 = scmp.eq.s32.totalorder %s35, 0
      %p172 = por %p170, %p171
      %s174 = sadd.s32 %s173, 1
      %p177 = scmp.eq.s32.totalorder %s29, 1
      %p178 = scmp.ne.s32.totalorder %s173, %s175
      %p179 = scmp.eq.s32.totalorder %s29, 0
      %p180 = por %p178, %p179
      %p181 = scmp.ne.s32.totalorder %s173, %s175
      %p182 = scmp.eq.s32.totalorder %s34, 1
      %p183 = por %p181, %p182
      %p184 = scmp.ne.s32.totalorder %s175, %s176
      %p185 = scmp.eq.s32.totalorder %s34, 0
      %p186 = por %p184, %p185
      %p187 = scmp.ne.s32.totalorder %s175, %s176
      %p188 = scmp.eq.s32.totalorder %s35, 1
      %p189 = por %p187, %p188
      %p191 = scmp.ne.s32.totalorder %s176, %s190
      %p192 = scmp.eq.s32.totalorder %s35, 0
      %p193 = por %p191, %p192
      %s195 = sadd.s32 %s194, 1
      %p198 = scmp.eq.s32.totalorder %s29, 1
      %p199 = scmp.ne.s32.totalorder %s194, %s196
      %p200 = scmp.eq.s32.totalorder %s29, 0
      %p201 = por %p199, %p200
      %p202 = scmp.ne.s32.totalorder %s194, %s196
      %p203 = scmp.eq.s32.totalorder %s34, 1
      %p204 = por %p202, %p203
      %p205 = scmp.ne.s32.totalorder %s196, %s197
      %p206 = scmp.eq.s32.totalorder %s34, 0
      %p207 = por %p205, %p206
      %p208 = scmp.ne.s32.totalorder %s196, %s197
      %p209 = scmp.eq.s32.totalorder %s35, 1
      %p210 = por %p208, %p209
      %p212 = scmp.ne.s32.totalorder %s197, %s211
      %p213 = scmp.eq.s32.totalorder %s35, 0
      %p214 = por %p212, %p213
      %s216 = sadd.s32 %s215, 1
      %p219 = scmp.eq.s32.totalorder %s29, 1
      %p220 = scmp.ne.s32.totalorder %s215, %s217
      %p221 = scmp.eq.s32.totalorder %s29, 0
      %p222 = por %p220, %p221
      %p223 = scmp.ne.s32.totalorder %s215, %s217
      %p224 = scmp.eq.s32.totalorder %s34, 1
      %p225 = por %p223, %p224
      %p226 = scmp.ne.s32.totalorder %s217, %s218
      %p227 = scmp.eq.s32.totalorder %s34, 0
      %p228 = por %p226, %p227
      %p229 = scmp.ne.s32.totalorder %s217, %s218
      %p230 = scmp.eq.s32.totalorder %s35, 1
      %p231 = por %p229, %p230
      %p233 = scmp.ne.s32.totalorder %s218, %s232
      %p234 = scmp.eq.s32.totalorder %s35, 0
      %p235 = por %p233, %p234
      %s237 = sadd.s32 %s236, 1
      %p240 = scmp.eq.s32.totalorder %s29, 1
      %p241 = scmp.ne.s32.totalorder %s236, %s238
      %p242 = scmp.eq.s32.totalorder %s29, 0
      %p243 = por %p241, %p242
      %p244 = scmp.ne.s32.totalorder %s236, %s238
      %p245 = scmp.eq.s32.totalorder %s34, 1
      %p246 = por %p244, %p245
      %p247 = scmp.ne.s32.totalorder %s238, %s239
      %p248 = scmp.eq.s32.totalorder %s34, 0
      %p249 = por %p247, %p248
      %p250 = scmp.ne.s32.totalorder %s238, %s239
      %p251 = scmp.eq.s32.totalorder %s35, 1
      %p252 = por %p250, %p251
      %p254 = scmp.ne.s32.totalorder %s239, %s253
      %p255 = scmp.eq.s32.totalorder %s35, 0
      %p256 = por %p254, %p255
      %s258 = sadd.s32 %s257, 1
      %p261 = scmp.eq.s32.totalorder %s29, 1
      %p262 = scmp.ne.s32.totalorder %s257, %s259
      %p263 = scmp.eq.s32.totalorder %s29, 0
      %p264 = por %p262, %p263
      %p265 = scmp.ne.s32.totalorder %s257, %s259
      %p266 = scmp.eq.s32.totalorder %s34, 1
      %p267 = por %p265, %p266
      %p268 = scmp.ne.s32.totalorder %s259, %s260
      %p269 = scmp.eq.s32.totalorder %s34, 0
      %p270 = por %p268, %p269
      %p271 = scmp.ne.s32.totalorder %s259, %s260
      %p272 = scmp.eq.s32.totalorder %s35, 1
      %p273 = por %p271, %p272
      %p275 = scmp.ne.s32.totalorder %s260, %s274
      %p276 = scmp.eq.s32.totalorder %s35, 0
      %p277 = por %p275, %p276
      %s279 = sadd.s32 %s278, 1
      %p282 = scmp.eq.s32.totalorder %s29, 1
      %p283 = scmp.ne.s32.totalorder %s278, %s280
      %p284 = scmp.eq.s32.totalorder %s29, 0
      %p285 = por %p283, %p284
      %p286 = scmp.ne.s32.totalorder %s278, %s280
      %p287 = scmp.eq.s32.totalorder %s34, 1
      %p288 = por %p286, %p287
      %p289 = scmp.ne.s32.totalorder %s280, %s281
      %p290 = scmp.eq.s32.totalorder %s34, 0
      %p291 = por %p289, %p290
      %p292 = scmp.ne.s32.totalorder %s280, %s281
      %p293 = scmp.eq.s32.totalorder %s35, 1
      %p294 = por %p292, %p293
      %p296 = scmp.ne.s32.totalorder %s281, %s295
      %p297 = scmp.eq.s32.totalorder %s35, 0
      %p298 = por %p296, %p297
      %s300 = sadd.s32 %s299, 1
      %p303 = scmp.eq.s32.totalorder %s29, 1
      %p304 = scmp.ne.s32.totalorder %s299, %s301
      %p305 = scmp.eq.s32.totalorder %s29, 0
      %p306 = por %p304, %p305
      %p307 = scmp.ne.s32.totalorder %s299, %s301
      %p308 = scmp.eq.s32.totalorder %s34, 1
      %p309 = por %p307, %p308
      %p310 = scmp.ne.s32.totalorder %s301, %s302
      %p311 = scmp.eq.s32.totalorder %s34, 0
      %p312 = por %p310, %p311
      %p313 = scmp.ne.s32.totalorder %s301, %s302
      %p314 = scmp.eq.s32.totalorder %s35, 1
      %p315 = por %p313, %p314
      %p317 = scmp.ne.s32.totalorder %s302, %s316
      %p318 = scmp.eq.s32.totalorder %s35, 0
      %p319 = por %p317, %p318
      %s321 = sadd.s32 %s320, 1
      %p324 = scmp.eq.s32.totalorder %s29, 1
      %p325 = scmp.ne.s32.totalorder %s320, %s322
      %p326 = scmp.eq.s32.totalorder %s29, 0
      %p327 = por %p325, %p326
      %p328 = scmp.ne.s32.totalorder %s320, %s322
      %p329 = scmp.eq.s32.totalorder %s34, 1
      %p330 = por %p328, %p329
      %p331 = scmp.ne.s32.totalorder %s322, %s323
      %p332 = scmp.eq.s32.totalorder %s34, 0
      %p333 = por %p331, %p332
      %p334 = scmp.ne.s32.totalorder %s322, %s323
      %p335 = scmp.eq.s32.totalorder %s35, 1
      %p336 = por %p334, %p335
      %p338 = scmp.ne.s32.totalorder %s323, %s337
      %p339 = scmp.eq.s32.totalorder %s35, 0
      %p340 = por %p338, %p339
      %s342 = sadd.s32 %s341, 1
      %p345 = scmp.eq.s32.totalorder %s29, 1
      %p346 = scmp.ne.s32.totalorder %s341, %s343
      %p347 = scmp.eq.s32.totalorder %s29, 0
      %p348 = por %p346, %p347
      %p349 = scmp.ne.s32.totalorder %s341, %s343
      %p350 = scmp.eq.s32.totalorder %s34, 1
      %p351 = por %p349, %p350
      %p352 = scmp.ne.s32.totalorder %s343, %s344
      %p353 = scmp.eq.s32.totalorder %s34, 0
      %p354 = por %p352, %p353
      %p355 = scmp.ne.s32.totalorder %s343, %s344
      %p356 = scmp.eq.s32.totalorder %s35, 1
      %p357 = por %p355, %p356
      %p359 = scmp.ne.s32.totalorder %s344, %s358
      %p360 = scmp.eq.s32.totalorder %s35, 0
      %p361 = por %p359, %p360
      %s363 = sadd.s32 %s362, 1
      %p366 = scmp.eq.s32.totalorder %s29, 1
      %p367 = scmp.ne.s32.totalorder %s362, %s364
      %p368 = scmp.eq.s32.totalorder %s29, 0
      %p369 = por %p367, %p368
      %p370 = scmp.ne.s32.totalorder %s362, %s364
      %p371 = scmp.eq.s32.totalorder %s34, 1
      %p372 = por %p370, %p371
      %p373 = scmp.ne.s32.totalorder %s364, %s365
      %p374 = scmp.eq.s32.totalorder %s34, 0
      %p375 = por %p373, %p374
      %p376 = scmp.ne.s32.totalorder %s364, %s365
      %p377 = scmp.eq.s32.totalorder %s35, 1
      %p378 = por %p376, %p377
      %p380 = scmp.ne.s32.totalorder %s365, %s379
      %p381 = scmp.eq.s32.totalorder %s35, 0
      %p382 = por %p380, %p381
      %s384 = sadd.s32 %s383, 1
      %p387 = scmp.eq.s32.totalorder %s29, 1
      %p388 = scmp.ne.s32.totalorder %s383, %s385
      %p389 = scmp.eq.s32.totalorder %s29, 0
      %p390 = por %p388, %p389
      %p391 = scmp.ne.s32.totalorder %s383, %s385
      %p392 = scmp.eq.s32.totalorder %s34, 1
      %p393 = por %p391, %p392
      %p394 = scmp.ne.s32.totalorder %s385, %s386
      %p395 = scmp.eq.s32.totalorder %s34, 0
      %p396 = por %p394, %p395
      %p397 = scmp.ne.s32.totalorder %s385, %s386
      %p398 = scmp.eq.s32.totalorder %s35, 1
      %p399 = por %p397, %p398
      %p401 = scmp.ne.s32.totalorder %s386, %s400
      %p402 = scmp.eq.s32.totalorder %s35, 0
      %p403 = por %p401, %p402
      %s405 = sadd.s32 %s404, 1
      %p408 = scmp.eq.s32.totalorder %s29, 1
      %p409 = scmp.ne.s32.totalorder %s404, %s406
      %p410 = scmp.eq.s32.totalorder %s29, 0
      %p411 = por %p409, %p410
      %p412 = scmp.ne.s32.totalorder %s404, %s406
      %p413 = scmp.eq.s32.totalorder %s34, 1
      %p414 = por %p412, %p413
      %p415 = scmp.ne.s32.totalorder %s406, %s407
      %p416 = scmp.eq.s32.totalorder %s34, 0
      %p417 = por %p415, %p416
      %p418 = scmp.ne.s32.totalorder %s406, %s407
      %p419 = scmp.eq.s32.totalorder %s35, 1
      %p420 = por %p418, %p419
      %p422 = scmp.ne.s32.totalorder %s407, %s421
      %p423 = scmp.eq.s32.totalorder %s35, 0
      %p424 = por %p422, %p423
      %s426 = sadd.s32 %s425, 1
      %p429 = scmp.eq.s32.totalorder %s29, 1
      %p430 = scmp.ne.s32.totalorder %s425, %s427
      %p431 = scmp.eq.s32.totalorder %s29, 0
      %p432 = por %p430, %p431
      %p433 = scmp.ne.s32.totalorder %s425, %s427
      %p434 = scmp.eq.s32.totalorder %s34, 1
      %p435 = por %p433, %p434
      %p436 = scmp.ne.s32.totalorder %s427, %s428
      %p437 = scmp.eq.s32.totalorder %s34, 0
      %p438 = por %p436, %p437
      %p439 = scmp.ne.s32.totalorder %s427, %s428
      %p440 = scmp.eq.s32.totalorder %s35, 1
      %p441 = por %p439, %p440
      %p443 = scmp.ne.s32.totalorder %s428, %s442
      %p444 = scmp.eq.s32.totalorder %s35, 0
      %p445 = por %p443, %p444
      %s446 = ssub.s32 %s29, %s36
      %p447 = scmp.eq.s32.totalorder %s446, 0
      %s449 = sadd.s32 %s448, 1
      %s450 = scalar_select %p447, %s448, %s449
      %p453 = pneg %p447
      %p454 = scmp.eq.s32.totalorder %s29, 1
      %p455 = por %p453, %p454
      %p456 = scmp.ne.s32.totalorder %s448, %s451
      %p457 = scmp.eq.s32.totalorder %s29, 0
      %p458 = por %p456, %p457
      %p459 = scmp.ne.s32.totalorder %s448, %s451
      %p460 = scmp.eq.s32.totalorder %s34, 1
      %p461 = por %p459, %p460
      %p462 = scmp.ne.s32.totalorder %s451, %s452
      %p463 = scmp.eq.s32.totalorder %s34, 0
      %p464 = por %p462, %p463
      %p465 = scmp.ne.s32.totalorder %s451, %s452
      %p466 = scmp.eq.s32.totalorder %s35, 1
      %p467 = por %p465, %p466
      %p469 = scmp.ne.s32.totalorder %s452, %s468
      %p470 = scmp.eq.s32.totalorder %s35, 0
      %p471 = por %p469, %p470
      %p472 = scmp.le.s32.totalorder 1, %s29
      %p473 = scmp.lt.s32.totalorder %s29, 3
      %p474 = pnand %p472, %p473
      %p475 = pneg %p474
      // Predicated region
      $region9: #{caesar_forward_pallas.1} parent=5 // pred_check
        _
      $region10: #{caesar_forward_pallas.1} parent=5 // pred_check_branch
        %477 = sbr.rel (%p474) target = $region12
      $region11: #{caesar_forward_pallas.1} parent=5 // pred_region
        %s478 = ssub.s32 %s29, 1
        // Predicated region
        $region13: #{caesar_forward_pallas.1} parent=11 // pred_check
          %p479 = pneg %p102
        $region14: #{caesar_forward_pallas.1} parent=11 // pred_check_branch
          %481 = sbr.rel (%p479) target = $region16
        $region15: #{caesar_forward_pallas.1} parent=11 // pred_region
          _
        $region16: #{caesar_forward_pallas.1} parent=11 // pred_fallthru
          _
        // Predicated region
        $region17: #{caesar_forward_pallas.1} parent=11 // pred_check
          %p482 = pneg %p123
        $region18: #{caesar_forward_pallas.1} parent=11 // pred_check_branch
          %484 = sbr.rel (%p482) target = $region20
        $region19: #{caesar_forward_pallas.1} parent=11 // pred_region
          _
        $region20: #{caesar_forward_pallas.1} parent=11 // pred_fallthru
          _
        // Predicated region
        $region21: #{caesar_forward_pallas.1} parent=11 // pred_check
          %p485 = pneg %p144
        $region22: #{caesar_forward_pallas.1} parent=11 // pred_check_branch
          %487 = sbr.rel (%p485) target = $region24
        $region23: #{caesar_forward_pallas.1} parent=11 // pred_region
          _
        $region24: #{caesar_forward_pallas.1} parent=11 // pred_fallthru
          _
        // Predicated region
        $region25: #{caesar_forward_pallas.1} parent=11 // pred_check
          %p488 = pneg %p165
        $region26: #{caesar_forward_pallas.1} parent=11 // pred_check_branch
          %490 = sbr.rel (%p488) target = $region28
        $region27: #{caesar_forward_pallas.1} parent=11 // pred_region
          _
        $region28: #{caesar_forward_pallas.1} parent=11 // pred_fallthru
          _
        // Predicated region
        $region29: #{caesar_forward_pallas.1} parent=11 // pred_check
          %p491 = pneg %p186
        $region30: #{caesar_forward_pallas.1} parent=11 // pred_check_branch
          %493 = sbr.rel (%p491) target = $region32
        $region31: #{caesar_forward_pallas.1} parent=11 // pred_region
          _
        $region32: #{caesar_forward_pallas.1} parent=11 // pred_fallthru
          _
        // Predicated region
        $region33: #{caesar_forward_pallas.1} parent=11 // pred_check
          %p494 = pneg %p207
        $region34: #{caesar_forward_pallas.1} parent=11 // pred_check_branch
          %496 = sbr.rel (%p494) target = $region36
        $region35: #{caesar_forward_pallas.1} parent=11 // pred_region
          _
        $region36: #{caesar_forward_pallas.1} parent=11 // pred_fallthru
          _
        // Predicated region
        $region37: #{caesar_forward_pallas.1} parent=11 // pred_check
          %p497 = pneg %p228
        $region38: #{caesar_forward_pallas.1} parent=11 // pred_check_branch
          %499 = sbr.rel (%p497) target = $region40
        $region39: #{caesar_forward_pallas.1} parent=11 // pred_region
          _
        $region40: #{caesar_forward_pallas.1} parent=11 // pred_fallthru
          _
        // Predicated region
        $region41: #{caesar_forward_pallas.1} parent=11 // pred_check
          %p500 = pneg %p249
        $region42: #{caesar_forward_pallas.1} parent=11 // pred_check_branch
          %502 = sbr.rel (%p500) target = $region44
        $region43: #{caesar_forward_pallas.1} parent=11 // pred_region
          _
        $region44: #{caesar_forward_pallas.1} parent=11 // pred_fallthru
          _
        // Predicated region
        $region45: #{caesar_forward_pallas.1} parent=11 // pred_check
          %p503 = pneg %p270
        $region46: #{caesar_forward_pallas.1} parent=11 // pred_check_branch
          %505 = sbr.rel (%p503) target = $region48
        $region47: #{caesar_forward_pallas.1} parent=11 // pred_region
          _
        $region48: #{caesar_forward_pallas.1} parent=11 // pred_fallthru
          _
        // Predicated region
        $region49: #{caesar_forward_pallas.1} parent=11 // pred_check
          %p506 = pneg %p291
        $region50: #{caesar_forward_pallas.1} parent=11 // pred_check_branch
          %508 = sbr.rel (%p506) target = $region52
        $region51: #{caesar_forward_pallas.1} parent=11 // pred_region
          _
        $region52: #{caesar_forward_pallas.1} parent=11 // pred_fallthru
          _
        // Predicated region
        $region53: #{caesar_forward_pallas.1} parent=11 // pred_check
          %p509 = pneg %p312
        $region54: #{caesar_forward_pallas.1} parent=11 // pred_check_branch
          %511 = sbr.rel (%p509) target = $region56
        $region55: #{caesar_forward_pallas.1} parent=11 // pred_region
          _
        $region56: #{caesar_forward_pallas.1} parent=11 // pred_fallthru
          _
        // Predicated region
        $region57: #{caesar_forward_pallas.1} parent=11 // pred_check
          %p512 = pneg %p333
        $region58: #{caesar_forward_pallas.1} parent=11 // pred_check_branch
          %514 = sbr.rel (%p512) target = $region60
        $region59: #{caesar_forward_pallas.1} parent=11 // pred_region
          _
        $region60: #{caesar_forward_pallas.1} parent=11 // pred_fallthru
          _
        // Predicated region
        $region61: #{caesar_forward_pallas.1} parent=11 // pred_check
          %p515 = pneg %p354
        $region62: #{caesar_forward_pallas.1} parent=11 // pred_check_branch
          %517 = sbr.rel (%p515) target = $region64
        $region63: #{caesar_forward_pallas.1} parent=11 // pred_region
          _
        $region64: #{caesar_forward_pallas.1} parent=11 // pred_fallthru
          _
        // Predicated region
        $region65: #{caesar_forward_pallas.1} parent=11 // pred_check
          %p518 = pneg %p375
        $region66: #{caesar_forward_pallas.1} parent=11 // pred_check_branch
          %520 = sbr.rel (%p518) target = $region68
        $region67: #{caesar_forward_pallas.1} parent=11 // pred_region
          _
        $region68: #{caesar_forward_pallas.1} parent=11 // pred_fallthru
          _
        // Predicated region
        $region69: #{caesar_forward_pallas.1} parent=11 // pred_check
          %p521 = pneg %p396
        $region70: #{caesar_forward_pallas.1} parent=11 // pred_check_branch
          %523 = sbr.rel (%p521) target = $region72
        $region71: #{caesar_forward_pallas.1} parent=11 // pred_region
          _
        $region72: #{caesar_forward_pallas.1} parent=11 // pred_fallthru
          _
        // Predicated region
        $region73: #{caesar_forward_pallas.1} parent=11 // pred_check
          %p524 = pneg %p417
        $region74: #{caesar_forward_pallas.1} parent=11 // pred_check_branch
          %526 = sbr.rel (%p524) target = $region76
        $region75: #{caesar_forward_pallas.1} parent=11 // pred_region
          _
        $region76: #{caesar_forward_pallas.1} parent=11 // pred_fallthru
          _
        // Predicated region
        $region77: #{caesar_forward_pallas.1} parent=11 // pred_check
          %p527 = pneg %p438
        $region78: #{caesar_forward_pallas.1} parent=11 // pred_check_branch
          %529 = sbr.rel (%p527) target = $region80
        $region79: #{caesar_forward_pallas.1} parent=11 // pred_region
          _
        $region80: #{caesar_forward_pallas.1} parent=11 // pred_fallthru
          _
      $region12: #{caesar_forward_pallas.1} parent=5 // pred_fallthru
        _
      %p530 = scmp.lt.s32.totalorder %s29, 2
      // Predicated region
      $region81: #{caesar_forward_pallas.1} parent=5 // pred_check
        %p531 = pneg %p530
      $region82: #{caesar_forward_pallas.1} parent=5 // pred_check_branch
        %533 = sbr.rel (%p531) target = $region84
      $region83: #{caesar_forward_pallas.1} parent=5 // pred_region
        // Predicated region
        $region85: #{caesar_forward_pallas.1} parent=83 // pred_check
          %p534 = pneg %p49
        $region86: #{caesar_forward_pallas.1} parent=83 // pred_check_branch
          %536 = sbr.rel (%p534) target = $region88
        $region87: #{caesar_forward_pallas.1} parent=83 // pred_region
          %p537 = scmp.lt.s32.totalorder %s29, 1
          %s538 = scalar_select %p537, %s29, 1
          %s539 = smul.addr %s538, 4
          %s540 = smul.addr %s539, 8
          %s541 = scalar_lea.vmem %s0, %s540
        $region88: #{caesar_forward_pallas.1} parent=83 // pred_fallthru
          _
        // Predicated region
        $region89: #{caesar_forward_pallas.1} parent=83 // pred_check
          %p542 = pneg %p75
        $region90: #{caesar_forward_pallas.1} parent=83 // pred_check_branch
          %544 = sbr.rel (%p542) target = $region92
        $region91: #{caesar_forward_pallas.1} parent=83 // pred_region
          %p545 = scmp.lt.s32.totalorder %s29, 1
          %s546 = scalar_select %p545, %s29, 1
          %s547 = smul.addr %s546, 2
          %s548 = smul.addr %s547, 8
          %s549 = scalar_lea.vmem %s1, %s548
        $region92: #{caesar_forward_pallas.1} parent=83 // pred_fallthru
          _
      $region84: #{caesar_forward_pallas.1} parent=5 // pred_fallthru
        _
      %p550 = scmp.le.s32.totalorder 1, %s29
      %p551 = scmp.lt.s32.totalorder %s29, 3
      %p552 = pnand %p550, %p551
      %p553 = pneg %p552
      // Predicated region
      $region93: #{caesar_forward_pallas.1} parent=5 // pred_check
        _
      $region94: #{caesar_forward_pallas.1} parent=5 // pred_check_branch
        %555 = sbr.rel (%p552) target = $region96
      $region95: #{caesar_forward_pallas.1} parent=5 // pred_region
        %s556 = ssub.s32 %s29, 1
        %p557 = scmp.lt.s32.totalorder %s34, 1
        %s558 = scalar_select %p557, %s34, 1
        %s559 = smul.addr %s558, 4
        %s560 = smul.addr %s559, 8
        %s561 = scalar_lea.vmem %s0, %s560
        %p562 = pneg %p55
        %p563 = pneg %p52
        %p564 = scmp.lt.s32.totalorder %s34, 1
        %s565 = scalar_select %p564, %s34, 1
        %s566 = smul.addr %s565, 2
        %s567 = smul.addr %s566, 8
        %s568 = scalar_lea.vmem %s1, %s567
        %p569 = pneg %p81
        %p570 = pneg %p78
        %p571 = pneg %p102
        %p572 = pneg %p99
        %p573 = pneg %p123
        %p574 = pneg %p120
        %p575 = pneg %p144
        %p576 = pneg %p141
        %p577 = pneg %p165
        %p578 = pneg %p162
        %p579 = pneg %p186
        %p580 = pneg %p183
        %p581 = pneg %p207
        %p582 = pneg %p204
        %p583 = pneg %p228
        %p584 = pneg %p225
        %p585 = pneg %p249
        %p586 = pneg %p246
        %p587 = pneg %p270
        %p588 = pneg %p267
        %p589 = pneg %p291
        %p590 = pneg %p288
        %p591 = pneg %p312
        %p592 = pneg %p309
        %p593 = pneg %p333
        %p594 = pneg %p330
        %p595 = pneg %p354
        %p596 = pneg %p351
        %p597 = pneg %p375
        %p598 = pneg %p372
        %p599 = pneg %p396
        %p600 = pneg %p393
        %p601 = pneg %p417
        %p602 = pneg %p414
        %p603 = pneg %p438
        %p604 = pneg %p435
        %p605 = pneg %p464
        %p606 = pneg %p461
        %s607 = sand.u32 %s451, 1
        %s608 = scalar_lea.sflag [#allocation5], %s607
        %s609 = sand.u32 %s451, 1
        %s610 = smul.addr %s609, 16
        %s611 = scalar_lea.vmem [#allocation4], %s610
        %p612 = scmp.lt.s32.totalorder %s34, 1
        %s613 = scalar_select %p612, %s34, 1
        %s614 = smul.addr %s613, 4
        %s615 = smul.addr %s614, 8
        %s616 = scalar_lea.vmem %s0, %s615
        %p617 = scmp.lt.s32.totalorder %s34, 1
        %s618 = scalar_select %p617, %s34, 1
        %s619 = smul.addr %s618, 2
        %s620 = smul.addr %s619, 8
        %s621 = scalar_lea.vmem %s1, %s620
        %v622 = vld [vmem:[%s616] sm:$0xff]
        %v623 = vld [vmem:[%s616 + $0x8] sm:$0xff]
        %v624 = vld [vmem:[%s616 + $0x10] sm:$0xff]
        %v625 = vld [vmem:[%s616 + $0x18] sm:$0xff]
        %v626 = vld [vmem:[%s621] sm:$0xff]
        %v627 = vld [vmem:[%s621 + $0x8] sm:$0xff]
        %v628 = vld [vmem:[%s2] sm:$0xff]
        %v629 = vld [vmem:[%s2 + $0x8] sm:$0xff]
        %v630 = vld [vmem:[%s2 + $0x10] sm:$0xff]
        %v631 = vld [vmem:[%s2 + $0x18] sm:$0xff]
        %v632 = vld [vmem:[%s2 + $0x20] sm:$0xff]
        %v633 = vld [vmem:[%s2 + $0x28] sm:$0xff]
        %v634 = vld [vmem:[%s2 + $0x30] sm:$0xff]
        %v635 = vld [vmem:[%s2 + $0x38] sm:$0xff]
        %v636 = vld [vmem:[%s2 + $0x40] sm:$0xff]
        %v637 = vld [vmem:[%s2 + $0x48] sm:$0xff]
        %v638 = vld [vmem:[%s2 + $0x50] sm:$0xff]
        %v639 = vld [vmem:[%s2 + $0x58] sm:$0xff]
        %v640 = vld [vmem:[%s2 + $0x60] sm:$0xff]
        %v641 = vld [vmem:[%s2 + $0x68] sm:$0xff]
        %v642 = vld [vmem:[%s2 + $0x70] sm:$0xff]
        %v643 = vld [vmem:[%s2 + $0x78] sm:$0xff]
        %v644 = vld [vmem:[%s2 + $0x80] sm:$0xff]
        %v645 = vld [vmem:[%s2 + $0x88] sm:$0xff]
        %v646 = vld [vmem:[%s2 + $0x90] sm:$0xff]
        %v647 = vld [vmem:[%s2 + $0x98] sm:$0xff]
        %v648 = vld [vmem:[%s2 + $0xa0] sm:$0xff]
        %v649 = vld [vmem:[%s2 + $0xa8] sm:$0xff]
        %v650 = vld [vmem:[%s2 + $0xb0] sm:$0xff]
        %v651 = vld [vmem:[%s2 + $0xb8] sm:$0xff]
        %v652 = vld [vmem:[%s2 + $0xc0] sm:$0xff]
        %v653 = vld [vmem:[%s2 + $0xc8] sm:$0xff]
        %v654 = vld [vmem:[%s2 + $0xd0] sm:$0xff]
        %v655 = vld [vmem:[%s2 + $0xd8] sm:$0xff]
        %v656 = vld [vmem:[%s2 + $0xe0] sm:$0xff]
        %v657 = vld [vmem:[%s2 + $0xe8] sm:$0xff]
        %v658 = vld [vmem:[%s2 + $0xf0] sm:$0xff]
        %v659 = vld [vmem:[%s2 + $0xf8] sm:$0xff]
        %v660 = vld [vmem:[%s3] sm:$0x1]
        %v662 = vlaneseq
        %v663 = vshrl.u32 %v662, 7
        %v664 = vsub.s32 0, %v663
        %v665 = vrot.slane %v660, %v664
        %667 = vmatprep.subr.mxu0 0.0
        %668 = vmatpush1.msra.mxu0 %v628
        %669 = vmatprep.subr.mxu0 0.0
        %670 = vmatpush1.msra.mxu0 %v629
        %671 = vmatprep.subr.mxu0 0.0
        %672 = vmatpush1.msra.mxu0 %v630
        %673 = vmatprep.subr.mxu0 0.0
        %674 = vmatpush1.msra.mxu0 %v631
        %675 = vmatprep.subr.mxu0 0.0
        %676 = vmatpush1.msra.mxu0 %v632
        %677 = vmatprep.subr.mxu0 0.0
        %678 = vmatpush1.msra.mxu0 %v633
        %679 = vmatprep.subr.mxu0 0.0
        %680 = vmatpush1.msra.mxu0 %v634
        %681 = vmatprep.subr.mxu0 0.0
        %682 = vmatpush1.msra.mxu0 %v635
        %683 = vmatprep.subr.mxu0 0.0
        %684 = vmatpush1.msra.mxu0 %v636
        %685 = vmatprep.subr.mxu0 0.0
        %686 = vmatpush1.msra.mxu0 %v637
        %687 = vmatprep.subr.mxu0 0.0
        %688 = vmatpush1.msra.mxu0 %v638
        %689 = vmatprep.subr.mxu0 0.0
        %690 = vmatpush1.msra.mxu0 %v639
        %691 = vmatprep.subr.mxu0 0.0
        %692 = vmatpush1.msra.mxu0 %v640
        %693 = vmatprep.subr.mxu0 0.0
        %694 = vmatpush1.msra.mxu0 %v641
        %695 = vmatprep.subr.mxu0 0.0
        %696 = vmatpush1.msra.mxu0 %v642
        %697 = vmatprep.subr.mxu0 0.0
        %698 = vmatpush1.msra.mxu0 %v643
        %699 = vmatprep.subr.mxu0 0.0
        %700 = vmatpush1.msra.mxu0 %v644
        %701 = vmatprep.subr.mxu0 0.0
        %702 = vmatpush1.msra.mxu0 %v645
        %703 = vmatprep.subr.mxu0 0.0
        %704 = vmatpush1.msra.mxu0 %v646
        %705 = vmatprep.subr.mxu0 0.0
        %706 = vmatpush1.msra.mxu0 %v647
        %707 = vmatprep.subr.mxu0 0.0
        %708 = vmatpush1.msra.mxu0 %v648
        %709 = vmatprep.subr.mxu0 0.0
        %710 = vmatpush1.msra.mxu0 %v649
        %711 = vmatprep.subr.mxu0 0.0
        %712 = vmatpush1.msra.mxu0 %v650
        %713 = vmatprep.subr.mxu0 0.0
        %714 = vmatpush1.msra.mxu0 %v651
        %715 = vmatprep.subr.mxu0 0.0
        %716 = vmatpush1.msra.mxu0 %v652
        %717 = vmatprep.subr.mxu0 0.0
        %718 = vmatpush1.msra.mxu0 %v653
        %719 = vmatprep.subr.mxu0 0.0
        %720 = vmatpush1.msra.mxu0 %v654
        %721 = vmatprep.subr.mxu0 0.0
        %722 = vmatpush1.msra.mxu0 %v655
        %723 = vmatprep.subr.mxu0 0.0
        %724 = vmatpush1.msra.mxu0 %v656
        %725 = vmatprep.subr.mxu0 0.0
        %726 = vmatpush1.msra.mxu0 %v657
        %727 = vmatprep.subr.mxu0 0.0
        %728 = vmatpush1.msra.mxu0 %v658
        %729 = vmatprep.subr.mxu0 0.0
        %730 = vmatpush1.msra.mxu0 %v659
        %731 = vmatprep.mubr.f32.mxu0 %v623
        %732 = vmatmul.mubr.f32.gmra.mrb[0].mxu0 %v622
        %v733 = vpop.f32.mrb[0].mxu0
        %v734 = vadd.f32 %v665, %v733
        %v735 = vpop.f32.mrb[0].mxu0
        %736 = vmatprep.mubr.f32.mxu0 %v625
        %737 = vmatmul.mubr.f32.gmra.mrb[0].mxu0 %v624
        %v738 = vpop.f32.mrb[0].mxu0
        %v739 = vadd.f32 %v665, %v738
        %v740 = vpop.f32.mrb[0].mxu0
        %741 = vdwg.mxu0
        %v742 = vmax.f32 %v734, 0.0
        %v743 = vmax.f32 %v739, 0.0
        %vm744 = vcmask 261120
        %745 = vst.msk [vmem:[#allocation2] sm:$0xff] %vm744, 0.0
        %746 = vst.msk [vmem:[#allocation2 + $0x8] sm:$0xff] %vm744, 0.0
        %747 = vst.msk [vmem:[#allocation2 + $0x10] sm:$0xff] %vm744, 0.0
        %vm748 = vcmask 259072
        %749 = vst.msk [vmem:[#allocation2 + $0x18] sm:$0x3f] %vm748, 0.0
        %750 = vst.msk [vmem:[#allocation2 + $0x7] sm:$0xff] %vm744, %v742
        %751 = vst.msk [vmem:[#allocation2 + $0xf] sm:$0xff] %vm744, %v743
        %v752 = vld [vmem:[#allocation2] sm:$0xff]
        %v753 = vld [vmem:[#allocation2 + $0x8] sm:$0xff]
        %v754 = vld [vmem:[%s4] sm:$0xff]
        %v755 = vld [vmem:[%s4 + $0x8] sm:$0xff]
        %v756 = vld [vmem:[%s4 + $0x10] sm:$0xff]
        %v757 = vld [vmem:[%s4 + $0x18] sm:$0xff]
        %v758 = vld [vmem:[#allocation2 + $0x1] sm:$0xff]
        %v759 = vld [vmem:[#allocation2 + $0x9] sm:$0xff]
        %s760 = scalar_lea.vmem %s4, 32
        %v761 = vld [vmem:[%s760] sm:$0xff]
        %v762 = vld [vmem:[%s760 + $0x8] sm:$0xff]
        %v763 = vld [vmem:[%s760 + $0x10] sm:$0xff]
        %v764 = vld [vmem:[%s760 + $0x18] sm:$0xff]
        %v766 = vsel %vm744, %v758, 0
        %v769 = vsel %vm744, %v759, 0
        %771 = vmatprep.subr.mxu0 0.0
        %772 = vmatpush1.msra.mxu0 %v761
        %773 = vmatprep.subr.mxu0 0.0
        %774 = vmatpush1.msra.mxu0 %v762
        %775 = vmatprep.subr.mxu0 0.0
        %776 = vmatpush1.msra.mxu0 %v763
        %777 = vmatprep.subr.mxu0 0.0
        %778 = vmatpush1.msra.mxu0 %v764
        %779 = vmatprep.subr.mxu0 0.0
        %780 = vmatpush1.msra.mxu0 0.0
        %781 = vmatprep.subr.mxu0 0.0
        %782 = vmatpush1.msra.mxu0 0.0
        %783 = vmatprep.subr.mxu0 0.0
        %784 = vmatpush1.msra.mxu0 0.0
        %785 = vmatprep.subr.mxu0 0.0
        %786 = vmatpush1.msra.mxu0 0.0
        %787 = vmatprep.subr.mxu0 0.0
        %788 = vmatpush1.msra.mxu0 0.0
        %789 = vmatprep.subr.mxu0 0.0
        %790 = vmatpush1.msra.mxu0 0.0
        %791 = vmatprep.subr.mxu0 0.0
        %792 = vmatpush1.msra.mxu0 0.0
        %793 = vmatprep.subr.mxu0 0.0
        %794 = vmatpush1.msra.mxu0 0.0
        %795 = vmatprep.subr.mxu0 0.0
        %796 = vmatpush1.msra.mxu0 0.0
        %797 = vmatprep.subr.mxu0 0.0
        %798 = vmatpush1.msra.mxu0 0.0
        %799 = vmatprep.subr.mxu0 0.0
        %800 = vmatpush1.msra.mxu0 0.0
        %801 = vmatprep.subr.mxu0 0.0
        %802 = vmatpush1.msra.mxu0 0.0
        %803 = vmatprep.subr.mxu0 0.0
        %804 = vmatpush1.msra.mxu0 0.0
        %805 = vmatprep.subr.mxu0 0.0
        %806 = vmatpush1.msra.mxu0 0.0
        %807 = vmatprep.subr.mxu0 0.0
        %808 = vmatpush1.msra.mxu0 0.0
        %809 = vmatprep.subr.mxu0 0.0
        %810 = vmatpush1.msra.mxu0 0.0
        %811 = vmatprep.subr.mxu0 0.0
        %812 = vmatpush1.msra.mxu0 0.0
        %813 = vmatprep.subr.mxu0 0.0
        %814 = vmatpush1.msra.mxu0 0.0
        %815 = vmatprep.subr.mxu0 0.0
        %816 = vmatpush1.msra.mxu0 0.0
        %817 = vmatprep.subr.mxu0 0.0
        %818 = vmatpush1.msra.mxu0 0.0
        %819 = vmatprep.subr.mxu0 0.0
        %820 = vmatpush1.msra.mxu0 0.0
        %821 = vmatprep.subr.mxu0 0.0
        %822 = vmatpush1.msra.mxu0 0.0
        %823 = vmatprep.subr.mxu0 0.0
        %824 = vmatpush1.msra.mxu0 0.0
        %825 = vmatprep.subr.mxu0 0.0
        %826 = vmatpush1.msra.mxu0 0.0
        %827 = vmatprep.subr.mxu0 0.0
        %828 = vmatpush1.msra.mxu0 0.0
        %829 = vmatprep.subr.mxu0 0.0
        %830 = vmatpush1.msra.mxu0 0.0
        %831 = vmatprep.subr.mxu0 0.0
        %832 = vmatpush1.msra.mxu0 0.0
        %833 = vmatprep.subr.mxu0 0.0
        %834 = vmatpush1.msra.mxu0 0.0
        %835 = vmatprep.mubr.f32.mxu0 0.0
        %836 = vmatmul.mubr.f32.gmra.mrb[0].mxu0 %v766
        %v837 = vpop.f32.mrb[0].mxu0
        %v838 = vadd.f32 0.0, %v837
        %v839 = vpop.f32.mrb[0].mxu0
        %840 = vmatprep.mubr.f32.mxu0 0.0
        %841 = vmatmul.mubr.f32.gmra.mrb[0].mxu0 %v769
        %v842 = vpop.f32.mrb[0].mxu0
        %v843 = vadd.f32 0.0, %v842
        %v844 = vpop.f32.mrb[0].mxu0
        %845 = vdwg.mxu0
        %v847 = vsel %vm744, %v752, 0
        %v850 = vsel %vm744, %v753, 0
        %852 = vmatprep.subr.mxu0 0.0
        %853 = vmatpush1.msra.mxu0 %v754
        %854 = vmatprep.subr.mxu0 0.0
        %855 = vmatpush1.msra.mxu0 %v755
        %856 = vmatprep.subr.mxu0 0.0
        %857 = vmatpush1.msra.mxu0 %v756
        %858 = vmatprep.subr.mxu0 0.0
        %859 = vmatpush1.msra.mxu0 %v757
        %860 = vmatprep.subr.mxu0 0.0
        %861 = vmatpush1.msra.mxu0 0.0
        %862 = vmatprep.subr.mxu0 0.0
        %863 = vmatpush1.msra.mxu0 0.0
        %864 = vmatprep.subr.mxu0 0.0
        %865 = vmatpush1.msra.mxu0 0.0
        %866 = vmatprep.subr.mxu0 0.0
        %867 = vmatpush1.msra.mxu0 0.0
        %868 = vmatprep.subr.mxu0 0.0
        %869 = vmatpush1.msra.mxu0 0.0
        %870 = vmatprep.subr.mxu0 0.0
        %871 = vmatpush1.msra.mxu0 0.0
        %872 = vmatprep.subr.mxu0 0.0
        %873 = vmatpush1.msra.mxu0 0.0
        %874 = vmatprep.subr.mxu0 0.0
        %875 = vmatpush1.msra.mxu0 0.0
        %876 = vmatprep.subr.mxu0 0.0
        %877 = vmatpush1.msra.mxu0 0.0
        %878 = vmatprep.subr.mxu0 0.0
        %879 = vmatpush1.msra.mxu0 0.0
        %880 = vmatprep.subr.mxu0 0.0
        %881 = vmatpush1.msra.mxu0 0.0
        %882 = vmatprep.subr.mxu0 0.0
        %883 = vmatpush1.msra.mxu0 0.0
        %884 = vmatprep.subr.mxu0 0.0
        %885 = vmatpush1.msra.mxu0 0.0
        %886 = vmatprep.subr.mxu0 0.0
        %887 = vmatpush1.msra.mxu0 0.0
        %888 = vmatprep.subr.mxu0 0.0
        %889 = vmatpush1.msra.mxu0 0.0
        %890 = vmatprep.subr.mxu0 0.0
        %891 = vmatpush1.msra.mxu0 0.0
        %892 = vmatprep.subr.mxu0 0.0
        %893 = vmatpush1.msra.mxu0 0.0
        %894 = vmatprep.subr.mxu0 0.0
        %895 = vmatpush1.msra.mxu0 0.0
        %896 = vmatprep.subr.mxu0 0.0
        %897 = vmatpush1.msra.mxu0 0.0
        %898 = vmatprep.subr.mxu0 0.0
        %899 = vmatpush1.msra.mxu0 0.0
        %900 = vmatprep.subr.mxu0 0.0
        %901 = vmatpush1.msra.mxu0 0.0
        %902 = vmatprep.subr.mxu0 0.0
        %903 = vmatpush1.msra.mxu0 0.0
        %904 = vmatprep.subr.mxu0 0.0
        %905 = vmatpush1.msra.mxu0 0.0
        %906 = vmatprep.subr.mxu0 0.0
        %907 = vmatpush1.msra.mxu0 0.0
        %908 = vmatprep.subr.mxu0 0.0
        %909 = vmatpush1.msra.mxu0 0.0
        %910 = vmatprep.subr.mxu0 0.0
        %911 = vmatpush1.msra.mxu0 0.0
        %912 = vmatprep.subr.mxu0 0.0
        %913 = vmatpush1.msra.mxu0 0.0
        %914 = vmatprep.subr.mxu0 0.0
        %915 = vmatpush1.msra.mxu0 0.0
        %916 = vmatprep.mubr.f32.mxu0 0.0
        %917 = vmatmul.mubr.f32.gmra.mrb[0].mxu0 %v847
        %v918 = vpop.f32.mrb[0].mxu0
        %v919 = vadd.f32 %v838, %v918
        %v920 = vpop.f32.mrb[0].mxu0
        %921 = vmatprep.mubr.f32.mxu0 0.0
        %922 = vmatmul.mubr.f32.gmra.mrb[0].mxu0 %v850
        %v923 = vpop.f32.mrb[0].mxu0
        %v924 = vadd.f32 %v843, %v923
        %v925 = vpop.f32.mrb[0].mxu0
        %926 = vdwg.mxu0
        %v927 = vld [vmem:[#allocation2 + $0x2] sm:$0xff]
        %v928 = vld [vmem:[#allocation2 + $0xa] sm:$0xff]
        %s929 = scalar_lea.vmem %s4, 64
        %v930 = vld [vmem:[%s929] sm:$0xff]
        %v931 = vld [vmem:[%s929 + $0x8] sm:$0xff]
        %v932 = vld [vmem:[%s929 + $0x10] sm:$0xff]
        %v933 = vld [vmem:[%s929 + $0x18] sm:$0xff]
        %v935 = vsel %vm744, %v927, 0
        %v938 = vsel %vm744, %v928, 0
        %940 = vmatprep.subr.mxu0 0.0
        %941 = vmatpush1.msra.mxu0 %v930
        %942 = vmatprep.subr.mxu0 0.0
        %943 = vmatpush1.msra.mxu0 %v931
        %944 = vmatprep.subr.mxu0 0.0
        %945 = vmatpush1.msra.mxu0 %v932
        %946 = vmatprep.subr.mxu0 0.0
        %947 = vmatpush1.msra.mxu0 %v933
        %948 = vmatprep.subr.mxu0 0.0
        %949 = vmatpush1.msra.mxu0 0.0
        %950 = vmatprep.subr.mxu0 0.0
        %951 = vmatpush1.msra.mxu0 0.0
        %952 = vmatprep.subr.mxu0 0.0
        %953 = vmatpush1.msra.mxu0 0.0
        %954 = vmatprep.subr.mxu0 0.0
        %955 = vmatpush1.msra.mxu0 0.0
        %956 = vmatprep.subr.mxu0 0.0
        %957 = vmatpush1.msra.mxu0 0.0
        %958 = vmatprep.subr.mxu0 0.0
        %959 = vmatpush1.msra.mxu0 0.0
        %960 = vmatprep.subr.mxu0 0.0
        %961 = vmatpush1.msra.mxu0 0.0
        %962 = vmatprep.subr.mxu0 0.0
        %963 = vmatpush1.msra.mxu0 0.0
        %964 = vmatprep.subr.mxu0 0.0
        %965 = vmatpush1.msra.mxu0 0.0
        %966 = vmatprep.subr.mxu0 0.0
        %967 = vmatpush1.msra.mxu0 0.0
        %968 = vmatprep.subr.mxu0 0.0
        %969 = vmatpush1.msra.mxu0 0.0
        %970 = vmatprep.subr.mxu0 0.0
        %971 = vmatpush1.msra.mxu0 0.0
        %972 = vmatprep.subr.mxu0 0.0
        %973 = vmatpush1.msra.mxu0 0.0
        %974 = vmatprep.subr.mxu0 0.0
        %975 = vmatpush1.msra.mxu0 0.0
        %976 = vmatprep.subr.mxu0 0.0
        %977 = vmatpush1.msra.mxu0 0.0
        %978 = vmatprep.subr.mxu0 0.0
        %979 = vmatpush1.msra.mxu0 0.0
        %980 = vmatprep.subr.mxu0 0.0
        %981 = vmatpush1.msra.mxu0 0.0
        %982 = vmatprep.subr.mxu0 0.0
        %983 = vmatpush1.msra.mxu0 0.0
        %984 = vmatprep.subr.mxu0 0.0
        %985 = vmatpush1.msra.mxu0 0.0
        %986 = vmatprep.subr.mxu0 0.0
        %987 = vmatpush1.msra.mxu0 0.0
        %988 = vmatprep.subr.mxu0 0.0
        %989 = vmatpush1.msra.mxu0 0.0
        %990 = vmatprep.subr.mxu0 0.0
        %991 = vmatpush1.msra.mxu0 0.0
        %992 = vmatprep.subr.mxu0 0.0
        %993 = vmatpush1.msra.mxu0 0.0
        %994 = vmatprep.subr.mxu0 0.0
        %995 = vmatpush1.msra.mxu0 0.0
        %996 = vmatprep.subr.mxu0 0.0
        %997 = vmatpush1.msra.mxu0 0.0
        %998 = vmatprep.subr.mxu0 0.0
        %999 = vmatpush1.msra.mxu0 0.0
        %1000 = vmatprep.subr.mxu0 0.0
        %1001 = vmatpush1.msra.mxu0 0.0
        %1002 = vmatprep.subr.mxu0 0.0
        %1003 = vmatpush1.msra.mxu0 0.0
        %1004 = vmatprep.mubr.f32.mxu0 0.0
        %1005 = vmatmul.mubr.f32.gmra.mrb[0].mxu0 %v935
        %v1006 = vpop.f32.mrb[0].mxu0
        %v1007 = vadd.f32 0.0, %v1006
        %v1008 = vpop.f32.mrb[0].mxu0
        %1009 = vmatprep.mubr.f32.mxu0 0.0
        %1010 = vmatmul.mubr.f32.gmra.mrb[0].mxu0 %v938
        %v1011 = vpop.f32.mrb[0].mxu0
        %v1012 = vadd.f32 0.0, %v1011
        %v1013 = vpop.f32.mrb[0].mxu0
        %1014 = vdwg.mxu0
        %v1015 = vadd.f32 %v919, %v1007
        %v1016 = vadd.f32 %v924, %v1012
        %v1017 = vld [vmem:[#allocation2 + $0x3] sm:$0xff]
        %v1018 = vld [vmem:[#allocation2 + $0xb] sm:$0xff]
        %s1019 = scalar_lea.vmem %s4, 96
        %v1020 = vld [vmem:[%s1019] sm:$0xff]
        %v1021 = vld [vmem:[%s1019 + $0x8] sm:$0xff]
        %v1022 = vld [vmem:[%s1019 + $0x10] sm:$0xff]
        %v1023 = vld [vmem:[%s1019 + $0x18] sm:$0xff]
        %v1025 = vsel %vm744, %v1017, 0
        %v1028 = vsel %vm744, %v1018, 0
        %1030 = vmatprep.subr.mxu0 0.0
        %1031 = vmatpush1.msra.mxu0 %v1020
        %1032 = vmatprep.subr.mxu0 0.0
        %1033 = vmatpush1.msra.mxu0 %v1021
        %1034 = vmatprep.subr.mxu0 0.0
        %1035 = vmatpush1.msra.mxu0 %v1022
        %1036 = vmatprep.subr.mxu0 0.0
        %1037 = vmatpush1.msra.mxu0 %v1023
        %1038 = vmatprep.subr.mxu0 0.0
        %1039 = vmatpush1.msra.mxu0 0.0
        %1040 = vmatprep.subr.mxu0 0.0
        %1041 = vmatpush1.msra.mxu0 0.0
        %1042 = vmatprep.subr.mxu0 0.0
        %1043 = vmatpush1.msra.mxu0 0.0
        %1044 = vmatprep.subr.mxu0 0.0
        %1045 = vmatpush1.msra.mxu0 0.0
        %1046 = vmatprep.subr.mxu0 0.0
        %1047 = vmatpush1.msra.mxu0 0.0
        %1048 = vmatprep.subr.mxu0 0.0
        %1049 = vmatpush1.msra.mxu0 0.0
        %1050 = vmatprep.subr.mxu0 0.0
        %1051 = vmatpush1.msra.mxu0 0.0
        %1052 = vmatprep.subr.mxu0 0.0
        %1053 = vmatpush1.msra.mxu0 0.0
        %1054 = vmatprep.subr.mxu0 0.0
        %1055 = vmatpush1.msra.mxu0 0.0
        %1056 = vmatprep.subr.mxu0 0.0
        %1057 = vmatpush1.msra.mxu0 0.0
        %1058 = vmatprep.subr.mxu0 0.0
        %1059 = vmatpush1.msra.mxu0 0.0
        %1060 = vmatprep.subr.mxu0 0.0
        %1061 = vmatpush1.msra.mxu0 0.0
        %1062 = vmatprep.subr.mxu0 0.0
        %1063 = vmatpush1.msra.mxu0 0.0
        %1064 = vmatprep.subr.mxu0 0.0
        %1065 = vmatpush1.msra.mxu0 0.0
        %1066 = vmatprep.subr.mxu0 0.0
        %1067 = vmatpush1.msra.mxu0 0.0
        %1068 = vmatprep.subr.mxu0 0.0
        %1069 = vmatpush1.msra.mxu0 0.0
        %1070 = vmatprep.subr.mxu0 0.0
        %1071 = vmatpush1.msra.mxu0 0.0
        %1072 = vmatprep.subr.mxu0 0.0
        %1073 = vmatpush1.msra.mxu0 0.0
        %1074 = vmatprep.subr.mxu0 0.0
        %1075 = vmatpush1.msra.mxu0 0.0
        %1076 = vmatprep.subr.mxu0 0.0
        %1077 = vmatpush1.msra.mxu0 0.0
        %1078 = vmatprep.subr.mxu0 0.0
        %1079 = vmatpush1.msra.mxu0 0.0
        %1080 = vmatprep.subr.mxu0 0.0
        %1081 = vmatpush1.msra.mxu0 0.0
        %1082 = vmatprep.subr.mxu0 0.0
        %1083 = vmatpush1.msra.mxu0 0.0
        %1084 = vmatprep.subr.mxu0 0.0
        %1085 = vmatpush1.msra.mxu0 0.0
        %1086 = vmatprep.subr.mxu0 0.0
        %1087 = vmatpush1.msra.mxu0 0.0
        %1088 = vmatprep.subr.mxu0 0.0
        %1089 = vmatpush1.msra.mxu0 0.0
        %1090 = vmatprep.subr.mxu0 0.0
        %1091 = vmatpush1.msra.mxu0 0.0
        %1092 = vmatprep.subr.mxu0 0.0
        %1093 = vmatpush1.msra.mxu0 0.0
        %1094 = vmatprep.mubr.f32.mxu0 0.0
        %1095 = vmatmul.mubr.f32.gmra.mrb[0].mxu0 %v1025
        %v1096 = vpop.f32.mrb[0].mxu0
        %v1097 = vadd.f32 0.0, %v1096
        %v1098 = vpop.f32.mrb[0].mxu0
        %1099 = vmatprep.mubr.f32.mxu0 0.0
        %1100 = vmatmul.mubr.f32.gmra.mrb[0].mxu0 %v1028
        %v1101 = vpop.f32.mrb[0].mxu0
        %v1102 = vadd.f32 0.0, %v1101
        %v1103 = vpop.f32.mrb[0].mxu0
        %1104 = vdwg.mxu0
        %v1105 = vadd.f32 %v1015, %v1097
        %v1106 = vadd.f32 %v1016, %v1102
        %v1107 = vld [vmem:[#allocation2 + $0x4] sm:$0xff]
        %v1108 = vld [vmem:[#allocation2 + $0xc] sm:$0xff]
        %s1109 = scalar_lea.vmem %s4, 128
        %v1110 = vld [vmem:[%s1109] sm:$0xff]
        %v1111 = vld [vmem:[%s1109 + $0x8] sm:$0xff]
        %v1112 = vld [vmem:[%s1109 + $0x10] sm:$0xff]
        %v1113 = vld [vmem:[%s1109 + $0x18] sm:$0xff]
        %v1115 = vsel %vm744, %v1107, 0
        %v1118 = vsel %vm744, %v1108, 0
        %1120 = vmatprep.subr.mxu0 0.0
        %1121 = vmatpush1.msra.mxu0 %v1110
        %1122 = vmatprep.subr.mxu0 0.0
        %1123 = vmatpush1.msra.mxu0 %v1111
        %1124 = vmatprep.subr.mxu0 0.0
        %1125 = vmatpush1.msra.mxu0 %v1112
        %1126 = vmatprep.subr.mxu0 0.0
        %1127 = vmatpush1.msra.mxu0 %v1113
        %1128 = vmatprep.subr.mxu0 0.0
        %1129 = vmatpush1.msra.mxu0 0.0
        %1130 = vmatprep.subr.mxu0 0.0
        %1131 = vmatpush1.msra.mxu0 0.0
        %1132 = vmatprep.subr.mxu0 0.0
        %1133 = vmatpush1.msra.mxu0 0.0
        %1134 = vmatprep.subr.mxu0 0.0
        %1135 = vmatpush1.msra.mxu0 0.0
        %1136 = vmatprep.subr.mxu0 0.0
        %1137 = vmatpush1.msra.mxu0 0.0
        %1138 = vmatprep.subr.mxu0 0.0
        %1139 = vmatpush1.msra.mxu0 0.0
        %1140 = vmatprep.subr.mxu0 0.0
        %1141 = vmatpush1.msra.mxu0 0.0
        %1142 = vmatprep.subr.mxu0 0.0
        %1143 = vmatpush1.msra.mxu0 0.0
        %1144 = vmatprep.subr.mxu0 0.0
        %1145 = vmatpush1.msra.mxu0 0.0
        %1146 = vmatprep.subr.mxu0 0.0
        %1147 = vmatpush1.msra.mxu0 0.0
        %1148 = vmatprep.subr.mxu0 0.0
        %1149 = vmatpush1.msra.mxu0 0.0
        %1150 = vmatprep.subr.mxu0 0.0
        %1151 = vmatpush1.msra.mxu0 0.0
        %1152 = vmatprep.subr.mxu0 0.0
        %1153 = vmatpush1.msra.mxu0 0.0
        %1154 = vmatprep.subr.mxu0 0.0
        %1155 = vmatpush1.msra.mxu0 0.0
        %1156 = vmatprep.subr.mxu0 0.0
        %1157 = vmatpush1.msra.mxu0 0.0
        %1158 = vmatprep.subr.mxu0 0.0
        %1159 = vmatpush1.msra.mxu0 0.0
        %1160 = vmatprep.subr.mxu0 0.0
        %1161 = vmatpush1.msra.mxu0 0.0
        %1162 = vmatprep.subr.mxu0 0.0
        %1163 = vmatpush1.msra.mxu0 0.0
        %1164 = vmatprep.subr.mxu0 0.0
        %1165 = vmatpush1.msra.mxu0 0.0
        %1166 = vmatprep.subr.mxu0 0.0
        %1167 = vmatpush1.msra.mxu0 0.0
        %1168 = vmatprep.subr.mxu0 0.0
        %1169 = vmatpush1.msra.mxu0 0.0
        %1170 = vmatprep.subr.mxu0 0.0
        %1171 = vmatpush1.msra.mxu0 0.0
        %1172 = vmatprep.subr.mxu0 0.0
        %1173 = vmatpush1.msra.mxu0 0.0
        %1174 = vmatprep.subr.mxu0 0.0
        %1175 = vmatpush1.msra.mxu0 0.0
        %1176 = vmatprep.subr.mxu0 0.0
        %1177 = vmatpush1.msra.mxu0 0.0
        %1178 = vmatprep.subr.mxu0 0.0
        %1179 = vmatpush1.msra.mxu0 0.0
        %1180 = vmatprep.subr.mxu0 0.0
        %1181 = vmatpush1.msra.mxu0 0.0
        %1182 = vmatprep.subr.mxu0 0.0
        %1183 = vmatpush1.msra.mxu0 0.0
        %1184 = vmatprep.mubr.f32.mxu0 0.0
        %1185 = vmatmul.mubr.f32.gmra.mrb[0].mxu0 %v1115
        %v1186 = vpop.f32.mrb[0].mxu0
        %v1187 = vadd.f32 0.0, %v1186
        %v1188 = vpop.f32.mrb[0].mxu0
        %1189 = vmatprep.mubr.f32.mxu0 0.0
        %1190 = vmatmul.mubr.f32.gmra.mrb[0].mxu0 %v1118
        %v1191 = vpop.f32.mrb[0].mxu0
        %v1192 = vadd.f32 0.0, %v1191
        %v1193 = vpop.f32.mrb[0].mxu0
        %1194 = vdwg.mxu0
        %v1195 = vadd.f32 %v1105, %v1187
        %v1196 = vadd.f32 %v1106, %v1192
        %v1197 = vld [vmem:[#allocation2 + $0x5] sm:$0xff]
        %v1198 = vld [vmem:[#allocation2 + $0xd] sm:$0xff]
        %s1199 = scalar_lea.vmem %s4, 160
        %v1200 = vld [vmem:[%s1199] sm:$0xff]
        %v1201 = vld [vmem:[%s1199 + $0x8] sm:$0xff]
        %v1202 = vld [vmem:[%s1199 + $0x10] sm:$0xff]
        %v1203 = vld [vmem:[%s1199 + $0x18] sm:$0xff]
        %v1205 = vsel %vm744, %v1197, 0
        %v1208 = vsel %vm744, %v1198, 0
        %1210 = vmatprep.subr.mxu0 0.0
        %1211 = vmatpush1.msra.mxu0 %v1200
        %1212 = vmatprep.subr.mxu0 0.0
        %1213 = vmatpush1.msra.mxu0 %v1201
        %1214 = vmatprep.subr.mxu0 0.0
        %1215 = vmatpush1.msra.mxu0 %v1202
        %1216 = vmatprep.subr.mxu0 0.0
        %1217 = vmatpush1.msra.mxu0 %v1203
        %1218 = vmatprep.subr.mxu0 0.0
        %1219 = vmatpush1.msra.mxu0 0.0
        %1220 = vmatprep.subr.mxu0 0.0
        %1221 = vmatpush1.msra.mxu0 0.0
        %1222 = vmatprep.subr.mxu0 0.0
        %1223 = vmatpush1.msra.mxu0 0.0
        %1224 = vmatprep.subr.mxu0 0.0
        %1225 = vmatpush1.msra.mxu0 0.0
        %1226 = vmatprep.subr.mxu0 0.0
        %1227 = vmatpush1.msra.mxu0 0.0
        %1228 = vmatprep.subr.mxu0 0.0
        %1229 = vmatpush1.msra.mxu0 0.0
        %1230 = vmatprep.subr.mxu0 0.0
        %1231 = vmatpush1.msra.mxu0 0.0
        %1232 = vmatprep.subr.mxu0 0.0
        %1233 = vmatpush1.msra.mxu0 0.0
        %1234 = vmatprep.subr.mxu0 0.0
        %1235 = vmatpush1.msra.mxu0 0.0
        %1236 = vmatprep.subr.mxu0 0.0
        %1237 = vmatpush1.msra.mxu0 0.0
        %1238 = vmatprep.subr.mxu0 0.0
        %1239 = vmatpush1.msra.mxu0 0.0
        %1240 = vmatprep.subr.mxu0 0.0
        %1241 = vmatpush1.msra.mxu0 0.0
        %1242 = vmatprep.subr.mxu0 0.0
        %1243 = vmatpush1.msra.mxu0 0.0
        %1244 = vmatprep.subr.mxu0 0.0
        %1245 = vmatpush1.msra.mxu0 0.0
        %1246 = vmatprep.subr.mxu0 0.0
        %1247 = vmatpush1.msra.mxu0 0.0
        %1248 = vmatprep.subr.mxu0 0.0
        %1249 = vmatpush1.msra.mxu0 0.0
        %1250 = vmatprep.subr.mxu0 0.0
        %1251 = vmatpush1.msra.mxu0 0.0
        %1252 = vmatprep.subr.mxu0 0.0
        %1253 = vmatpush1.msra.mxu0 0.0
        %1254 = vmatprep.subr.mxu0 0.0
        %1255 = vmatpush1.msra.mxu0 0.0
        %1256 = vmatprep.subr.mxu0 0.0
        %1257 = vmatpush1.msra.mxu0 0.0
        %1258 = vmatprep.subr.mxu0 0.0
        %1259 = vmatpush1.msra.mxu0 0.0
        %1260 = vmatprep.subr.mxu0 0.0
        %1261 = vmatpush1.msra.mxu0 0.0
        %1262 = vmatprep.subr.mxu0 0.0
        %1263 = vmatpush1.msra.mxu0 0.0
        %1264 = vmatprep.subr.mxu0 0.0
        %1265 = vmatpush1.msra.mxu0 0.0
        %1266 = vmatprep.subr.mxu0 0.0
        %1267 = vmatpush1.msra.mxu0 0.0
        %1268 = vmatprep.subr.mxu0 0.0
        %1269 = vmatpush1.msra.mxu0 0.0
        %1270 = vmatprep.subr.mxu0 0.0
        %1271 = vmatpush1.msra.mxu0 0.0
        %1272 = vmatprep.subr.mxu0 0.0
        %1273 = vmatpush1.msra.mxu0 0.0
        %1274 = vmatprep.mubr.f32.mxu0 0.0
        %1275 = vmatmul.mubr.f32.gmra.mrb[0].mxu0 %v1205
        %v1276 = vpop.f32.mrb[0].mxu0
        %v1277 = vadd.f32 0.0, %v1276
        %v1278 = vpop.f32.mrb[0].mxu0
        %1279 = vmatprep.mubr.f32.mxu0 0.0
        %1280 = vmatmul.mubr.f32.gmra.mrb[0].mxu0 %v1208
        %v1281 = vpop.f32.mrb[0].mxu0
        %v1282 = vadd.f32 0.0, %v1281
        %v1283 = vpop.f32.mrb[0].mxu0
        %1284 = vdwg.mxu0
        %v1285 = vadd.f32 %v1195, %v1277
        %v1286 = vadd.f32 %v1196, %v1282
        %v1287 = vld [vmem:[#allocation2 + $0x6] sm:$0xff]
        %v1288 = vld [vmem:[#allocation2 + $0xe] sm:$0xff]
        %s1289 = scalar_lea.vmem %s4, 192
        %v1290 = vld [vmem:[%s1289] sm:$0xff]
        %v1291 = vld [vmem:[%s1289 + $0x8] sm:$0xff]
        %v1292 = vld [vmem:[%s1289 + $0x10] sm:$0xff]
        %v1293 = vld [vmem:[%s1289 + $0x18] sm:$0xff]
        %v1295 = vsel %vm744, %v1287, 0
        %v1298 = vsel %vm744, %v1288, 0
        %1300 = vmatprep.subr.mxu0 0.0
        %1301 = vmatpush1.msra.mxu0 %v1290
        %1302 = vmatprep.subr.mxu0 0.0
        %1303 = vmatpush1.msra.mxu0 %v1291
        %1304 = vmatprep.subr.mxu0 0.0
        %1305 = vmatpush1.msra.mxu0 %v1292
        %1306 = vmatprep.subr.mxu0 0.0
        %1307 = vmatpush1.msra.mxu0 %v1293
        %1308 = vmatprep.subr.mxu0 0.0
        %1309 = vmatpush1.msra.mxu0 0.0
        %1310 = vmatprep.subr.mxu0 0.0
        %1311 = vmatpush1.msra.mxu0 0.0
        %1312 = vmatprep.subr.mxu0 0.0
        %1313 = vmatpush1.msra.mxu0 0.0
        %1314 = vmatprep.subr.mxu0 0.0
        %1315 = vmatpush1.msra.mxu0 0.0
        %1316 = vmatprep.subr.mxu0 0.0
        %1317 = vmatpush1.msra.mxu0 0.0
        %1318 = vmatprep.subr.mxu0 0.0
        %1319 = vmatpush1.msra.mxu0 0.0
        %1320 = vmatprep.subr.mxu0 0.0
        %1321 = vmatpush1.msra.mxu0 0.0
        %1322 = vmatprep.subr.mxu0 0.0
        %1323 = vmatpush1.msra.mxu0 0.0
        %1324 = vmatprep.subr.mxu0 0.0
        %1325 = vmatpush1.msra.mxu0 0.0
        %1326 = vmatprep.subr.mxu0 0.0
        %1327 = vmatpush1.msra.mxu0 0.0
        %1328 = vmatprep.subr.mxu0 0.0
        %1329 = vmatpush1.msra.mxu0 0.0
        %1330 = vmatprep.subr.mxu0 0.0
        %1331 = vmatpush1.msra.mxu0 0.0
        %1332 = vmatprep.subr.mxu0 0.0
        %1333 = vmatpush1.msra.mxu0 0.0
        %1334 = vmatprep.subr.mxu0 0.0
        %1335 = vmatpush1.msra.mxu0 0.0
        %1336 = vmatprep.subr.mxu0 0.0
        %1337 = vmatpush1.msra.mxu0 0.0
        %1338 = vmatprep.subr.mxu0 0.0
        %1339 = vmatpush1.msra.mxu0 0.0
        %1340 = vmatprep.subr.mxu0 0.0
        %1341 = vmatpush1.msra.mxu0 0.0
        %1342 = vmatprep.subr.mxu0 0.0
        %1343 = vmatpush1.msra.mxu0 0.0
        %1344 = vmatprep.subr.mxu0 0.0
        %1345 = vmatpush1.msra.mxu0 0.0
        %1346 = vmatprep.subr.mxu0 0.0
        %1347 = vmatpush1.msra.mxu0 0.0
        %1348 = vmatprep.subr.mxu0 0.0
        %1349 = vmatpush1.msra.mxu0 0.0
        %1350 = vmatprep.subr.mxu0 0.0
        %1351 = vmatpush1.msra.mxu0 0.0
        %1352 = vmatprep.subr.mxu0 0.0
        %1353 = vmatpush1.msra.mxu0 0.0
        %1354 = vmatprep.subr.mxu0 0.0
        %1355 = vmatpush1.msra.mxu0 0.0
        %1356 = vmatprep.subr.mxu0 0.0
        %1357 = vmatpush1.msra.mxu0 0.0
        %1358 = vmatprep.subr.mxu0 0.0
        %1359 = vmatpush1.msra.mxu0 0.0
        %1360 = vmatprep.subr.mxu0 0.0
        %1361 = vmatpush1.msra.mxu0 0.0
        %1362 = vmatprep.subr.mxu0 0.0
        %1363 = vmatpush1.msra.mxu0 0.0
        %1364 = vmatprep.mubr.f32.mxu0 0.0
        %1365 = vmatmul.mubr.f32.gmra.mrb[0].mxu0 %v1295
        %v1366 = vpop.f32.mrb[0].mxu0
        %v1367 = vadd.f32 0.0, %v1366
        %v1368 = vpop.f32.mrb[0].mxu0
        %1369 = vmatprep.mubr.f32.mxu0 0.0
        %1370 = vmatmul.mubr.f32.gmra.mrb[0].mxu0 %v1298
        %v1371 = vpop.f32.mrb[0].mxu0
        %v1372 = vadd.f32 0.0, %v1371
        %v1373 = vpop.f32.mrb[0].mxu0
        %1374 = vdwg.mxu0
        %v1375 = vadd.f32 %v1285, %v1367
        %v1376 = vadd.f32 %v1286, %v1372
        %v1377 = vld [vmem:[#allocation2 + $0x7] sm:$0xff]
        %v1378 = vld [vmem:[#allocation2 + $0xf] sm:$0xff]
        %s1379 = scalar_lea.vmem %s4, 224
        %v1380 = vld [vmem:[%s1379] sm:$0xff]
        %v1381 = vld [vmem:[%s1379 + $0x8] sm:$0xff]
        %v1382 = vld [vmem:[%s1379 + $0x10] sm:$0xff]
        %v1383 = vld [vmem:[%s1379 + $0x18] sm:$0xff]
        %v1385 = vsel %vm744, %v1377, 0
        %v1388 = vsel %vm744, %v1378, 0
        %1390 = vmatprep.subr.mxu0 0.0
        %1391 = vmatpush1.msra.mxu0 %v1380
        %1392 = vmatprep.subr.mxu0 0.0
        %1393 = vmatpush1.msra.mxu0 %v1381
        %1394 = vmatprep.subr.mxu0 0.0
        %1395 = vmatpush1.msra.mxu0 %v1382
        %1396 = vmatprep.subr.mxu0 0.0
        %1397 = vmatpush1.msra.mxu0 %v1383
        %1398 = vmatprep.subr.mxu0 0.0
        %1399 = vmatpush1.msra.mxu0 0.0
        %1400 = vmatprep.subr.mxu0 0.0
        %1401 = vmatpush1.msra.mxu0 0.0
        %1402 = vmatprep.subr.mxu0 0.0
        %1403 = vmatpush1.msra.mxu0 0.0
        %1404 = vmatprep.subr.mxu0 0.0
        %1405 = vmatpush1.msra.mxu0 0.0
        %1406 = vmatprep.subr.mxu0 0.0
        %1407 = vmatpush1.msra.mxu0 0.0
        %1408 = vmatprep.subr.mxu0 0.0
        %1409 = vmatpush1.msra.mxu0 0.0
        %1410 = vmatprep.subr.mxu0 0.0
        %1411 = vmatpush1.msra.mxu0 0.0
        %1412 = vmatprep.subr.mxu0 0.0
        %1413 = vmatpush1.msra.mxu0 0.0
        %1414 = vmatprep.subr.mxu0 0.0
        %1415 = vmatpush1.msra.mxu0 0.0
        %1416 = vmatprep.subr.mxu0 0.0
        %1417 = vmatpush1.msra.mxu0 0.0
        %1418 = vmatprep.subr.mxu0 0.0
        %1419 = vmatpush1.msra.mxu0 0.0
        %1420 = vmatprep.subr.mxu0 0.0
        %1421 = vmatpush1.msra.mxu0 0.0
        %1422 = vmatprep.subr.mxu0 0.0
        %1423 = vmatpush1.msra.mxu0 0.0
        %1424 = vmatprep.subr.mxu0 0.0
        %1425 = vmatpush1.msra.mxu0 0.0
        %1426 = vmatprep.subr.mxu0 0.0
        %1427 = vmatpush1.msra.mxu0 0.0
        %1428 = vmatprep.subr.mxu0 0.0
        %1429 = vmatpush1.msra.mxu0 0.0
        %1430 = vmatprep.subr.mxu0 0.0
        %1431 = vmatpush1.msra.mxu0 0.0
        %1432 = vmatprep.subr.mxu0 0.0
        %1433 = vmatpush1.msra.mxu0 0.0
        %1434 = vmatprep.subr.mxu0 0.0
        %1435 = vmatpush1.msra.mxu0 0.0
        %1436 = vmatprep.subr.mxu0 0.0
        %1437 = vmatpush1.msra.mxu0 0.0
        %1438 = vmatprep.subr.mxu0 0.0
        %1439 = vmatpush1.msra.mxu0 0.0
        %1440 = vmatprep.subr.mxu0 0.0
        %1441 = vmatpush1.msra.mxu0 0.0
        %1442 = vmatprep.subr.mxu0 0.0
        %1443 = vmatpush1.msra.mxu0 0.0
        %1444 = vmatprep.subr.mxu0 0.0
        %1445 = vmatpush1.msra.mxu0 0.0
        %1446 = vmatprep.subr.mxu0 0.0
        %1447 = vmatpush1.msra.mxu0 0.0
        %1448 = vmatprep.subr.mxu0 0.0
        %1449 = vmatpush1.msra.mxu0 0.0
        %1450 = vmatprep.subr.mxu0 0.0
        %1451 = vmatpush1.msra.mxu0 0.0
        %1452 = vmatprep.subr.mxu0 0.0
        %1453 = vmatpush1.msra.mxu0 0.0
        %1454 = vmatprep.mubr.f32.mxu0 0.0
        %1455 = vmatmul.mubr.f32.gmra.mrb[0].mxu0 %v1385
        %v1456 = vpop.f32.mrb[0].mxu0
        %v1457 = vadd.f32 0.0, %v1456
        %v1458 = vpop.f32.mrb[0].mxu0
        %1459 = vmatprep.mubr.f32.mxu0 0.0
        %1460 = vmatmul.mubr.f32.gmra.mrb[0].mxu0 %v1388
        %v1461 = vpop.f32.mrb[0].mxu0
        %v1462 = vadd.f32 0.0, %v1461
        %v1463 = vpop.f32.mrb[0].mxu0
        %1464 = vdwg.mxu0
        %v1465 = vadd.f32 %v1375, %v1457
        %v1466 = vadd.f32 %v1376, %v1462
        %v1467 = vld [vmem:[#allocation2 + $0x8] sm:$0xff]
        %v1468 = vld [vmem:[#allocation2 + $0x10] sm:$0xff]
        %s1469 = scalar_lea.vmem %s4, 256
        %v1470 = vld [vmem:[%s1469] sm:$0xff]
        %v1471 = vld [vmem:[%s1469 + $0x8] sm:$0xff]
        %v1472 = vld [vmem:[%s1469 + $0x10] sm:$0xff]
        %v1473 = vld [vmem:[%s1469 + $0x18] sm:$0xff]
        %v1475 = vsel %vm744, %v1467, 0
        %v1478 = vsel %vm744, %v1468, 0
        %1480 = vmatprep.subr.mxu0 0.0
        %1481 = vmatpush1.msra.mxu0 %v1470
        %1482 = vmatprep.subr.mxu0 0.0
        %1483 = vmatpush1.msra.mxu0 %v1471
        %1484 = vmatprep.subr.mxu0 0.0
        %1485 = vmatpush1.msra.mxu0 %v1472
        %1486 = vmatprep.subr.mxu0 0.0
        %1487 = vmatpush1.msra.mxu0 %v1473
        %1488 = vmatprep.subr.mxu0 0.0
        %1489 = vmatpush1.msra.mxu0 0.0
        %1490 = vmatprep.subr.mxu0 0.0
        %1491 = vmatpush1.msra.mxu0 0.0
        %1492 = vmatprep.subr.mxu0 0.0
        %1493 = vmatpush1.msra.mxu0 0.0
        %1494 = vmatprep.subr.mxu0 0.0
        %1495 = vmatpush1.msra.mxu0 0.0
        %1496 = vmatprep.subr.mxu0 0.0
        %1497 = vmatpush1.msra.mxu0 0.0
        %1498 = vmatprep.subr.mxu0 0.0
        %1499 = vmatpush1.msra.mxu0 0.0
        %1500 = vmatprep.subr.mxu0 0.0
        %1501 = vmatpush1.msra.mxu0 0.0
        %1502 = vmatprep.subr.mxu0 0.0
        %1503 = vmatpush1.msra.mxu0 0.0
        %1504 = vmatprep.subr.mxu0 0.0
        %1505 = vmatpush1.msra.mxu0 0.0
        %1506 = vmatprep.subr.mxu0 0.0
        %1507 = vmatpush1.msra.mxu0 0.0
        %1508 = vmatprep.subr.mxu0 0.0
        %1509 = vmatpush1.msra.mxu0 0.0
        %1510 = vmatprep.subr.mxu0 0.0
        %1511 = vmatpush1.msra.mxu0 0.0
        %1512 = vmatprep.subr.mxu0 0.0
        %1513 = vmatpush1.msra.mxu0 0.0
        %1514 = vmatprep.subr.mxu0 0.0
        %1515 = vmatpush1.msra.mxu0 0.0
        %1516 = vmatprep.subr.mxu0 0.0
        %1517 = vmatpush1.msra.mxu0 0.0
        %1518 = vmatprep.subr.mxu0 0.0
        %1519 = vmatpush1.msra.mxu0 0.0
        %1520 = vmatprep.subr.mxu0 0.0
        %1521 = vmatpush1.msra.mxu0 0.0
        %1522 = vmatprep.subr.mxu0 0.0
        %1523 = vmatpush1.msra.mxu0 0.0
        %1524 = vmatprep.subr.mxu0 0.0
        %1525 = vmatpush1.msra.mxu0 0.0
        %1526 = vmatprep.subr.mxu0 0.0
        %1527 = vmatpush1.msra.mxu0 0.0
        %1528 = vmatprep.subr.mxu0 0.0
        %1529 = vmatpush1.msra.mxu0 0.0
        %1530 = vmatprep.subr.mxu0 0.0
        %1531 = vmatpush1.msra.mxu0 0.0
        %1532 = vmatprep.subr.mxu0 0.0
        %1533 = vmatpush1.msra.mxu0 0.0
        %1534 = vmatprep.subr.mxu0 0.0
        %1535 = vmatpush1.msra.mxu0 0.0
        %1536 = vmatprep.subr.mxu0 0.0
        %1537 = vmatpush1.msra.mxu0 0.0
        %1538 = vmatprep.subr.mxu0 0.0
        %1539 = vmatpush1.msra.mxu0 0.0
        %1540 = vmatprep.subr.mxu0 0.0
        %1541 = vmatpush1.msra.mxu0 0.0
        %1542 = vmatprep.subr.mxu0 0.0
        %1543 = vmatpush1.msra.mxu0 0.0
        %1544 = vmatprep.mubr.f32.mxu0 0.0
        %1545 = vmatmul.mubr.f32.gmra.mrb[0].mxu0 %v1475
        %v1546 = vpop.f32.mrb[0].mxu0
        %v1547 = vadd.f32 0.0, %v1546
        %v1548 = vpop.f32.mrb[0].mxu0
        %1549 = vmatprep.mubr.f32.mxu0 0.0
        %1550 = vmatmul.mubr.f32.gmra.mrb[0].mxu0 %v1478
        %v1551 = vpop.f32.mrb[0].mxu0
        %v1552 = vadd.f32 0.0, %v1551
        %v1553 = vpop.f32.mrb[0].mxu0
        %1554 = vdwg.mxu0
        %v1555 = vadd.f32 %v1465, %v1547
        %v1556 = vadd.f32 %v1466, %v1552
        %v1557 = vld [vmem:[#allocation2 + $0x9] sm:$0xff]
        %v1558 = vld [vmem:[#allocation2 + $0x11] sm:$0xff]
        %s1559 = scalar_lea.vmem %s4, 288
        %v1560 = vld [vmem:[%s1559] sm:$0xff]
        %v1561 = vld [vmem:[%s1559 + $0x8] sm:$0xff]
        %v1562 = vld [vmem:[%s1559 + $0x10] sm:$0xff]
        %v1563 = vld [vmem:[%s1559 + $0x18] sm:$0xff]
        %v1565 = vsel %vm744, %v1557, 0
        %v1568 = vsel %vm744, %v1558, 0
        %1570 = vmatprep.subr.mxu0 0.0
        %1571 = vmatpush1.msra.mxu0 %v1560
        %1572 = vmatprep.subr.mxu0 0.0
        %1573 = vmatpush1.msra.mxu0 %v1561
        %1574 = vmatprep.subr.mxu0 0.0
        %1575 = vmatpush1.msra.mxu0 %v1562
        %1576 = vmatprep.subr.mxu0 0.0
        %1577 = vmatpush1.msra.mxu0 %v1563
        %1578 = vmatprep.subr.mxu0 0.0
        %1579 = vmatpush1.msra.mxu0 0.0
        %1580 = vmatprep.subr.mxu0 0.0
        %1581 = vmatpush1.msra.mxu0 0.0
        %1582 = vmatprep.subr.mxu0 0.0
        %1583 = vmatpush1.msra.mxu0 0.0
        %1584 = vmatprep.subr.mxu0 0.0
        %1585 = vmatpush1.msra.mxu0 0.0
        %1586 = vmatprep.subr.mxu0 0.0
        %1587 = vmatpush1.msra.mxu0 0.0
        %1588 = vmatprep.subr.mxu0 0.0
        %1589 = vmatpush1.msra.mxu0 0.0
        %1590 = vmatprep.subr.mxu0 0.0
        %1591 = vmatpush1.msra.mxu0 0.0
        %1592 = vmatprep.subr.mxu0 0.0
        %1593 = vmatpush1.msra.mxu0 0.0
        %1594 = vmatprep.subr.mxu0 0.0
        %1595 = vmatpush1.msra.mxu0 0.0
        %1596 = vmatprep.subr.mxu0 0.0
        %1597 = vmatpush1.msra.mxu0 0.0
        %1598 = vmatprep.subr.mxu0 0.0
        %1599 = vmatpush1.msra.mxu0 0.0
        %1600 = vmatprep.subr.mxu0 0.0
        %1601 = vmatpush1.msra.mxu0 0.0
        %1602 = vmatprep.subr.mxu0 0.0
        %1603 = vmatpush1.msra.mxu0 0.0
        %1604 = vmatprep.subr.mxu0 0.0
        %1605 = vmatpush1.msra.mxu0 0.0
        %1606 = vmatprep.subr.mxu0 0.0
        %1607 = vmatpush1.msra.mxu0 0.0
        %1608 = vmatprep.subr.mxu0 0.0
        %1609 = vmatpush1.msra.mxu0 0.0
        %1610 = vmatprep.subr.mxu0 0.0
        %1611 = vmatpush1.msra.mxu0 0.0
        %1612 = vmatprep.subr.mxu0 0.0
        %1613 = vmatpush1.msra.mxu0 0.0
        %1614 = vmatprep.subr.mxu0 0.0
        %1615 = vmatpush1.msra.mxu0 0.0
        %1616 = vmatprep.subr.mxu0 0.0
        %1617 = vmatpush1.msra.mxu0 0.0
        %1618 = vmatprep.subr.mxu0 0.0
        %1619 = vmatpush1.msra.mxu0 0.0
        %1620 = vmatprep.subr.mxu0 0.0
        %1621 = vmatpush1.msra.mxu0 0.0
        %1622 = vmatprep.subr.mxu0 0.0
        %1623 = vmatpush1.msra.mxu0 0.0
        %1624 = vmatprep.subr.mxu0 0.0
        %1625 = vmatpush1.msra.mxu0 0.0
        %1626 = vmatprep.subr.mxu0 0.0
        %1627 = vmatpush1.msra.mxu0 0.0
        %1628 = vmatprep.subr.mxu0 0.0
        %1629 = vmatpush1.msra.mxu0 0.0
        %1630 = vmatprep.subr.mxu0 0.0
        %1631 = vmatpush1.msra.mxu0 0.0
        %1632 = vmatprep.subr.mxu0 0.0
        %1633 = vmatpush1.msra.mxu0 0.0
        %1634 = vmatprep.mubr.f32.mxu0 0.0
        %1635 = vmatmul.mubr.f32.gmra.mrb[0].mxu0 %v1565
        %v1636 = vpop.f32.mrb[0].mxu0
        %v1637 = vadd.f32 0.0, %v1636
        %v1638 = vpop.f32.mrb[0].mxu0
        %1639 = vmatprep.mubr.f32.mxu0 0.0
        %1640 = vmatmul.mubr.f32.gmra.mrb[0].mxu0 %v1568
        %v1641 = vpop.f32.mrb[0].mxu0
        %v1642 = vadd.f32 0.0, %v1641
        %v1643 = vpop.f32.mrb[0].mxu0
        %1644 = vdwg.mxu0
        %v1645 = vadd.f32 %v1555, %v1637
        %v1646 = vadd.f32 %v1556, %v1642
        %v1647 = vld [vmem:[#allocation2 + $0xa] sm:$0xff]
        %v1648 = vld [vmem:[#allocation2 + $0x12] sm:$0xff]
        %s1649 = scalar_lea.vmem %s4, 320
        %v1650 = vld [vmem:[%s1649] sm:$0xff]
        %v1651 = vld [vmem:[%s1649 + $0x8] sm:$0xff]
        %v1652 = vld [vmem:[%s1649 + $0x10] sm:$0xff]
        %v1653 = vld [vmem:[%s1649 + $0x18] sm:$0xff]
        %v1655 = vsel %vm744, %v1647, 0
        %v1658 = vsel %vm744, %v1648, 0
        %1660 = vmatprep.subr.mxu0 0.0
        %1661 = vmatpush1.msra.mxu0 %v1650
        %1662 = vmatprep.subr.mxu0 0.0
        %1663 = vmatpush1.msra.mxu0 %v1651
        %1664 = vmatprep.subr.mxu0 0.0
        %1665 = vmatpush1.msra.mxu0 %v1652
        %1666 = vmatprep.subr.mxu0 0.0
        %1667 = vmatpush1.msra.mxu0 %v1653
        %1668 = vmatprep.subr.mxu0 0.0
        %1669 = vmatpush1.msra.mxu0 0.0
        %1670 = vmatprep.subr.mxu0 0.0
        %1671 = vmatpush1.msra.mxu0 0.0
        %1672 = vmatprep.subr.mxu0 0.0
        %1673 = vmatpush1.msra.mxu0 0.0
        %1674 = vmatprep.subr.mxu0 0.0
        %1675 = vmatpush1.msra.mxu0 0.0
        %1676 = vmatprep.subr.mxu0 0.0
        %1677 = vmatpush1.msra.mxu0 0.0
        %1678 = vmatprep.subr.mxu0 0.0
        %1679 = vmatpush1.msra.mxu0 0.0
        %1680 = vmatprep.subr.mxu0 0.0
        %1681 = vmatpush1.msra.mxu0 0.0
        %1682 = vmatprep.subr.mxu0 0.0
        %1683 = vmatpush1.msra.mxu0 0.0
        %1684 = vmatprep.subr.mxu0 0.0
        %1685 = vmatpush1.msra.mxu0 0.0
        %1686 = vmatprep.subr.mxu0 0.0
        %1687 = vmatpush1.msra.mxu0 0.0
        %1688 = vmatprep.subr.mxu0 0.0
        %1689 = vmatpush1.msra.mxu0 0.0
        %1690 = vmatprep.subr.mxu0 0.0
        %1691 = vmatpush1.msra.mxu0 0.0
        %1692 = vmatprep.subr.mxu0 0.0
        %1693 = vmatpush1.msra.mxu0 0.0
        %1694 = vmatprep.subr.mxu0 0.0
        %1695 = vmatpush1.msra.mxu0 0.0
        %1696 = vmatprep.subr.mxu0 0.0
        %1697 = vmatpush1.msra.mxu0 0.0
        %1698 = vmatprep.subr.mxu0 0.0
        %1699 = vmatpush1.msra.mxu0 0.0
        %1700 = vmatprep.subr.mxu0 0.0
        %1701 = vmatpush1.msra.mxu0 0.0
        %1702 = vmatprep.subr.mxu0 0.0
        %1703 = vmatpush1.msra.mxu0 0.0
        %1704 = vmatprep.subr.mxu0 0.0
        %1705 = vmatpush1.msra.mxu0 0.0
        %1706 = vmatprep.subr.mxu0 0.0
        %1707 = vmatpush1.msra.mxu0 0.0
        %1708 = vmatprep.subr.mxu0 0.0
        %1709 = vmatpush1.msra.mxu0 0.0
        %1710 = vmatprep.subr.mxu0 0.0
        %1711 = vmatpush1.msra.mxu0 0.0
        %1712 = vmatprep.subr.mxu0 0.0
        %1713 = vmatpush1.msra.mxu0 0.0
        %1714 = vmatprep.subr.mxu0 0.0
        %1715 = vmatpush1.msra.mxu0 0.0
        %1716 = vmatprep.subr.mxu0 0.0
        %1717 = vmatpush1.msra.mxu0 0.0
        %1718 = vmatprep.subr.mxu0 0.0
        %1719 = vmatpush1.msra.mxu0 0.0
        %1720 = vmatprep.subr.mxu0 0.0
        %1721 = vmatpush1.msra.mxu0 0.0
        %1722 = vmatprep.subr.mxu0 0.0
        %1723 = vmatpush1.msra.mxu0 0.0
        %1724 = vmatprep.mubr.f32.mxu0 0.0
        %1725 = vmatmul.mubr.f32.gmra.mrb[0].mxu0 %v1655
        %v1726 = vpop.f32.mrb[0].mxu0
        %v1727 = vadd.f32 0.0, %v1726
        %v1728 = vpop.f32.mrb[0].mxu0
        %1729 = vmatprep.mubr.f32.mxu0 0.0
        %1730 = vmatmul.mubr.f32.gmra.mrb[0].mxu0 %v1658
        %v1731 = vpop.f32.mrb[0].mxu0
        %v1732 = vadd.f32 0.0, %v1731
        %v1733 = vpop.f32.mrb[0].mxu0
        %1734 = vdwg.mxu0
        %v1735 = vadd.f32 %v1645, %v1727
        %v1736 = vadd.f32 %v1646, %v1732
        %v1737 = vld [vmem:[#allocation2 + $0xb] sm:$0xff]
        %v1738 = vld [vmem:[#allocation2 + $0x13] sm:$0xff]
        %s1739 = scalar_lea.vmem %s4, 352
        %v1740 = vld [vmem:[%s1739] sm:$0xff]
        %v1741 = vld [vmem:[%s1739 + $0x8] sm:$0xff]
        %v1742 = vld [vmem:[%s1739 + $0x10] sm:$0xff]
        %v1743 = vld [vmem:[%s1739 + $0x18] sm:$0xff]
        %v1745 = vsel %vm744, %v1737, 0
        %v1748 = vsel %vm744, %v1738, 0
        %1750 = vmatprep.subr.mxu0 0.0
        %1751 = vmatpush1.msra.mxu0 %v1740
        %1752 = vmatprep.subr.mxu0 0.0
        %1753 = vmatpush1.msra.mxu0 %v1741
        %1754 = vmatprep.subr.mxu0 0.0
        %1755 = vmatpush1.msra.mxu0 %v1742
        %1756 = vmatprep.subr.mxu0 0.0
        %1757 = vmatpush1.msra.mxu0 %v1743
        %1758 = vmatprep.subr.mxu0 0.0
        %1759 = vmatpush1.msra.mxu0 0.0
        %1760 = vmatprep.subr.mxu0 0.0
        %1761 = vmatpush1.msra.mxu0 0.0
        %1762 = vmatprep.subr.mxu0 0.0
        %1763 = vmatpush1.msra.mxu0 0.0
        %1764 = vmatprep.subr.mxu0 0.0
        %1765 = vmatpush1.msra.mxu0 0.0
        %1766 = vmatprep.subr.mxu0 0.0
        %1767 = vmatpush1.msra.mxu0 0.0
        %1768 = vmatprep.subr.mxu0 0.0
        %1769 = vmatpush1.msra.mxu0 0.0
        %1770 = vmatprep.subr.mxu0 0.0
        %1771 = vmatpush1.msra.mxu0 0.0
        %1772 = vmatprep.subr.mxu0 0.0
        %1773 = vmatpush1.msra.mxu0 0.0
        %1774 = vmatprep.subr.mxu0 0.0
        %1775 = vmatpush1.msra.mxu0 0.0
        %1776 = vmatprep.subr.mxu0 0.0
        %1777 = vmatpush1.msra.mxu0 0.0
        %1778 = vmatprep.subr.mxu0 0.0
        %1779 = vmatpush1.msra.mxu0 0.0
        %1780 = vmatprep.subr.mxu0 0.0
        %1781 = vmatpush1.msra.mxu0 0.0
        %1782 = vmatprep.subr.mxu0 0.0
        %1783 = vmatpush1.msra.mxu0 0.0
        %1784 = vmatprep.subr.mxu0 0.0
        %1785 = vmatpush1.msra.mxu0 0.0
        %1786 = vmatprep.subr.mxu0 0.0
        %1787 = vmatpush1.msra.mxu0 0.0
        %1788 = vmatprep.subr.mxu0 0.0
        %1789 = vmatpush1.msra.mxu0 0.0
        %1790 = vmatprep.subr.mxu0 0.0
        %1791 = vmatpush1.msra.mxu0 0.0
        %1792 = vmatprep.subr.mxu0 0.0
        %1793 = vmatpush1.msra.mxu0 0.0
        %1794 = vmatprep.subr.mxu0 0.0
        %1795 = vmatpush1.msra.mxu0 0.0
        %1796 = vmatprep.subr.mxu0 0.0
        %1797 = vmatpush1.msra.mxu0 0.0
        %1798 = vmatprep.subr.mxu0 0.0
        %1799 = vmatpush1.msra.mxu0 0.0
        %1800 = vmatprep.subr.mxu0 0.0
        %1801 = vmatpush1.msra.mxu0 0.0
        %1802 = vmatprep.subr.mxu0 0.0
        %1803 = vmatpush1.msra.mxu0 0.0
        %1804 = vmatprep.subr.mxu0 0.0
        %1805 = vmatpush1.msra.mxu0 0.0
        %1806 = vmatprep.subr.mxu0 0.0
        %1807 = vmatpush1.msra.mxu0 0.0
        %1808 = vmatprep.subr.mxu0 0.0
        %1809 = vmatpush1.msra.mxu0 0.0
        %1810 = vmatprep.subr.mxu0 0.0
        %1811 = vmatpush1.msra.mxu0 0.0
        %1812 = vmatprep.subr.mxu0 0.0
        %1813 = vmatpush1.msra.mxu0 0.0
        %1814 = vmatprep.mubr.f32.mxu0 0.0
        %1815 = vmatmul.mubr.f32.gmra.mrb[0].mxu0 %v1745
        %v1816 = vpop.f32.mrb[0].mxu0
        %v1817 = vadd.f32 0.0, %v1816
        %v1818 = vpop.f32.mrb[0].mxu0
        %1819 = vmatprep.mubr.f32.mxu0 0.0
        %1820 = vmatmul.mubr.f32.gmra.mrb[0].mxu0 %v1748
        %v1821 = vpop.f32.mrb[0].mxu0
        %v1822 = vadd.f32 0.0, %v1821
        %v1823 = vpop.f32.mrb[0].mxu0
        %1824 = vdwg.mxu0
        %v1825 = vadd.f32 %v1735, %v1817
        %v1826 = vadd.f32 %v1736, %v1822
        %v1827 = vld [vmem:[#allocation2 + $0xc] sm:$0xff]
        %v1828 = vld [vmem:[#allocation2 + $0x14] sm:$0xff]
        %s1829 = scalar_lea.vmem %s4, 384
        %v1830 = vld [vmem:[%s1829] sm:$0xff]
        %v1831 = vld [vmem:[%s1829 + $0x8] sm:$0xff]
        %v1832 = vld [vmem:[%s1829 + $0x10] sm:$0xff]
        %v1833 = vld [vmem:[%s1829 + $0x18] sm:$0xff]
        %v1835 = vsel %vm744, %v1827, 0
        %v1838 = vsel %vm744, %v1828, 0
        %1840 = vmatprep.subr.mxu0 0.0
        %1841 = vmatpush1.msra.mxu0 %v1830
        %1842 = vmatprep.subr.mxu0 0.0
        %1843 = vmatpush1.msra.mxu0 %v1831
        %1844 = vmatprep.subr.mxu0 0.0
        %1845 = vmatpush1.msra.mxu0 %v1832
        %1846 = vmatprep.subr.mxu0 0.0
        %1847 = vmatpush1.msra.mxu0 %v1833
        %1848 = vmatprep.subr.mxu0 0.0
        %1849 = vmatpush1.msra.mxu0 0.0
        %1850 = vmatprep.subr.mxu0 0.0
        %1851 = vmatpush1.msra.mxu0 0.0
        %1852 = vmatprep.subr.mxu0 0.0
        %1853 = vmatpush1.msra.mxu0 0.0
        %1854 = vmatprep.subr.mxu0 0.0
        %1855 = vmatpush1.msra.mxu0 0.0
        %1856 = vmatprep.subr.mxu0 0.0
        %1857 = vmatpush1.msra.mxu0 0.0
        %1858 = vmatprep.subr.mxu0 0.0
        %1859 = vmatpush1.msra.mxu0 0.0
        %1860 = vmatprep.subr.mxu0 0.0
        %1861 = vmatpush1.msra.mxu0 0.0
        %1862 = vmatprep.subr.mxu0 0.0
        %1863 = vmatpush1.msra.mxu0 0.0
        %1864 = vmatprep.subr.mxu0 0.0
        %1865 = vmatpush1.msra.mxu0 0.0
        %1866 = vmatprep.subr.mxu0 0.0
        %1867 = vmatpush1.msra.mxu0 0.0
        %1868 = vmatprep.subr.mxu0 0.0
        %1869 = vmatpush1.msra.mxu0 0.0
        %1870 = vmatprep.subr.mxu0 0.0
        %1871 = vmatpush1.msra.mxu0 0.0
        %1872 = vmatprep.subr.mxu0 0.0
        %1873 = vmatpush1.msra.mxu0 0.0
        %1874 = vmatprep.subr.mxu0 0.0
        %1875 = vmatpush1.msra.mxu0 0.0
        %1876 = vmatprep.subr.mxu0 0.0
        %1877 = vmatpush1.msra.mxu0 0.0
        %1878 = vmatprep.subr.mxu0 0.0
        %1879 = vmatpush1.msra.mxu0 0.0
        %1880 = vmatprep.subr.mxu0 0.0
        %1881 = vmatpush1.msra.mxu0 0.0
        %1882 = vmatprep.subr.mxu0 0.0
        %1883 = vmatpush1.msra.mxu0 0.0
        %1884 = vmatprep.subr.mxu0 0.0
        %1885 = vmatpush1.msra.mxu0 0.0
        %1886 = vmatprep.subr.mxu0 0.0
        %1887 = vmatpush1.msra.mxu0 0.0
        %1888 = vmatprep.subr.mxu0 0.0
        %1889 = vmatpush1.msra.mxu0 0.0
        %1890 = vmatprep.subr.mxu0 0.0
        %1891 = vmatpush1.msra.mxu0 0.0
        %1892 = vmatprep.subr.mxu0 0.0
        %1893 = vmatpush1.msra.mxu0 0.0
        %1894 = vmatprep.subr.mxu0 0.0
        %1895 = vmatpush1.msra.mxu0 0.0
        %1896 = vmatprep.subr.mxu0 0.0
        %1897 = vmatpush1.msra.mxu0 0.0
        %1898 = vmatprep.subr.mxu0 0.0
        %1899 = vmatpush1.msra.mxu0 0.0
        %1900 = vmatprep.subr.mxu0 0.0
        %1901 = vmatpush1.msra.mxu0 0.0
        %1902 = vmatprep.subr.mxu0 0.0
        %1903 = vmatpush1.msra.mxu0 0.0
        %1904 = vmatprep.mubr.f32.mxu0 0.0
        %1905 = vmatmul.mubr.f32.gmra.mrb[0].mxu0 %v1835
        %v1906 = vpop.f32.mrb[0].mxu0
        %v1907 = vadd.f32 0.0, %v1906
        %v1908 = vpop.f32.mrb[0].mxu0
        %1909 = vmatprep.mubr.f32.mxu0 0.0
        %1910 = vmatmul.mubr.f32.gmra.mrb[0].mxu0 %v1838
        %v1911 = vpop.f32.mrb[0].mxu0
        %v1912 = vadd.f32 0.0, %v1911
        %v1913 = vpop.f32.mrb[0].mxu0
        %1914 = vdwg.mxu0
        %v1915 = vadd.f32 %v1825, %v1907
        %v1916 = vadd.f32 %v1826, %v1912
        %v1917 = vld [vmem:[#allocation2 + $0xd] sm:$0xff]
        %v1918 = vld [vmem:[#allocation2 + $0x15] sm:$0xff]
        %s1919 = scalar_lea.vmem %s4, 416
        %v1920 = vld [vmem:[%s1919] sm:$0xff]
        %v1921 = vld [vmem:[%s1919 + $0x8] sm:$0xff]
        %v1922 = vld [vmem:[%s1919 + $0x10] sm:$0xff]
        %v1923 = vld [vmem:[%s1919 + $0x18] sm:$0xff]
        %v1925 = vsel %vm744, %v1917, 0
        %v1928 = vsel %vm744, %v1918, 0
        %1930 = vmatprep.subr.mxu0 0.0
        %1931 = vmatpush1.msra.mxu0 %v1920
        %1932 = vmatprep.subr.mxu0 0.0
        %1933 = vmatpush1.msra.mxu0 %v1921
        %1934 = vmatprep.subr.mxu0 0.0
        %1935 = vmatpush1.msra.mxu0 %v1922
        %1936 = vmatprep.subr.mxu0 0.0
        %1937 = vmatpush1.msra.mxu0 %v1923
        %1938 = vmatprep.subr.mxu0 0.0
        %1939 = vmatpush1.msra.mxu0 0.0
        %1940 = vmatprep.subr.mxu0 0.0
        %1941 = vmatpush1.msra.mxu0 0.0
        %1942 = vmatprep.subr.mxu0 0.0
        %1943 = vmatpush1.msra.mxu0 0.0
        %1944 = vmatprep.subr.mxu0 0.0
        %1945 = vmatpush1.msra.mxu0 0.0
        %1946 = vmatprep.subr.mxu0 0.0
        %1947 = vmatpush1.msra.mxu0 0.0
        %1948 = vmatprep.subr.mxu0 0.0
        %1949 = vmatpush1.msra.mxu0 0.0
        %1950 = vmatprep.subr.mxu0 0.0
        %1951 = vmatpush1.msra.mxu0 0.0
        %1952 = vmatprep.subr.mxu0 0.0
        %1953 = vmatpush1.msra.mxu0 0.0
        %1954 = vmatprep.subr.mxu0 0.0
        %1955 = vmatpush1.msra.mxu0 0.0
        %1956 = vmatprep.subr.mxu0 0.0
        %1957 = vmatpush1.msra.mxu0 0.0
        %1958 = vmatprep.subr.mxu0 0.0
        %1959 = vmatpush1.msra.mxu0 0.0
        %1960 = vmatprep.subr.mxu0 0.0
        %1961 = vmatpush1.msra.mxu0 0.0
        %1962 = vmatprep.subr.mxu0 0.0
        %1963 = vmatpush1.msra.mxu0 0.0
        %1964 = vmatprep.subr.mxu0 0.0
        %1965 = vmatpush1.msra.mxu0 0.0
        %1966 = vmatprep.subr.mxu0 0.0
        %1967 = vmatpush1.msra.mxu0 0.0
        %1968 = vmatprep.subr.mxu0 0.0
        %1969 = vmatpush1.msra.mxu0 0.0
        %1970 = vmatprep.subr.mxu0 0.0
        %1971 = vmatpush1.msra.mxu0 0.0
        %1972 = vmatprep.subr.mxu0 0.0
        %1973 = vmatpush1.msra.mxu0 0.0
        %1974 = vmatprep.subr.mxu0 0.0
        %1975 = vmatpush1.msra.mxu0 0.0
        %1976 = vmatprep.subr.mxu0 0.0
        %1977 = vmatpush1.msra.mxu0 0.0
        %1978 = vmatprep.subr.mxu0 0.0
        %1979 = vmatpush1.msra.mxu0 0.0
        %1980 = vmatprep.subr.mxu0 0.0
        %1981 = vmatpush1.msra.mxu0 0.0
        %1982 = vmatprep.subr.mxu0 0.0
        %1983 = vmatpush1.msra.mxu0 0.0
        %1984 = vmatprep.subr.mxu0 0.0
        %1985 = vmatpush1.msra.mxu0 0.0
        %1986 = vmatprep.subr.mxu0 0.0
        %1987 = vmatpush1.msra.mxu0 0.0
        %1988 = vmatprep.subr.mxu0 0.0
        %1989 = vmatpush1.msra.mxu0 0.0
        %1990 = vmatprep.subr.mxu0 0.0
        %1991 = vmatpush1.msra.mxu0 0.0
        %1992 = vmatprep.subr.mxu0 0.0
        %1993 = vmatpush1.msra.mxu0 0.0
        %1994 = vmatprep.mubr.f32.mxu0 0.0
        %1995 = vmatmul.mubr.f32.gmra.mrb[0].mxu0 %v1925
        %v1996 = vpop.f32.mrb[0].mxu0
        %v1997 = vadd.f32 0.0, %v1996
        %v1998 = vpop.f32.mrb[0].mxu0
        %1999 = vmatprep.mubr.f32.mxu0 0.0
        %2000 = vmatmul.mubr.f32.gmra.mrb[0].mxu0 %v1928
        %v2001 = vpop.f32.mrb[0].mxu0
        %v2002 = vadd.f32 0.0, %v2001
        %v2003 = vpop.f32.mrb[0].mxu0
        %2004 = vdwg.mxu0
        %v2005 = vadd.f32 %v1915, %v1997
        %v2006 = vadd.f32 %v1916, %v2002
        %v2007 = vld [vmem:[#allocation2 + $0xe] sm:$0xff]
        %v2008 = vld [vmem:[#allocation2 + $0x16] sm:$0xff]
        %s2009 = scalar_lea.vmem %s4, 448
        %v2010 = vld [vmem:[%s2009] sm:$0xff]
        %v2011 = vld [vmem:[%s2009 + $0x8] sm:$0xff]
        %v2012 = vld [vmem:[%s2009 + $0x10] sm:$0xff]
        %v2013 = vld [vmem:[%s2009 + $0x18] sm:$0xff]
        %v2015 = vsel %vm744, %v2007, 0
        %v2018 = vsel %vm744, %v2008, 0
        %2020 = vmatprep.subr.mxu0 0.0
        %2021 = vmatpush1.msra.mxu0 %v2010
        %2022 = vmatprep.subr.mxu0 0.0
        %2023 = vmatpush1.msra.mxu0 %v2011
        %2024 = vmatprep.subr.mxu0 0.0
        %2025 = vmatpush1.msra.mxu0 %v2012
        %2026 = vmatprep.subr.mxu0 0.0
        %2027 = vmatpush1.msra.mxu0 %v2013
        %2028 = vmatprep.subr.mxu0 0.0
        %2029 = vmatpush1.msra.mxu0 0.0
        %2030 = vmatprep.subr.mxu0 0.0
        %2031 = vmatpush1.msra.mxu0 0.0
        %2032 = vmatprep.subr.mxu0 0.0
        %2033 = vmatpush1.msra.mxu0 0.0
        %2034 = vmatprep.subr.mxu0 0.0
        %2035 = vmatpush1.msra.mxu0 0.0
        %2036 = vmatprep.subr.mxu0 0.0
        %2037 = vmatpush1.msra.mxu0 0.0
        %2038 = vmatprep.subr.mxu0 0.0
        %2039 = vmatpush1.msra.mxu0 0.0
        %2040 = vmatprep.subr.mxu0 0.0
        %2041 = vmatpush1.msra.mxu0 0.0
        %2042 = vmatprep.subr.mxu0 0.0
        %2043 = vmatpush1.msra.mxu0 0.0
        %2044 = vmatprep.subr.mxu0 0.0
        %2045 = vmatpush1.msra.mxu0 0.0
        %2046 = vmatprep.subr.mxu0 0.0
        %2047 = vmatpush1.msra.mxu0 0.0
        %2048 = vmatprep.subr.mxu0 0.0
        %2049 = vmatpush1.msra.mxu0 0.0
        %2050 = vmatprep.subr.mxu0 0.0
        %2051 = vmatpush1.msra.mxu0 0.0
        %2052 = vmatprep.subr.mxu0 0.0
        %2053 = vmatpush1.msra.mxu0 0.0
        %2054 = vmatprep.subr.mxu0 0.0
        %2055 = vmatpush1.msra.mxu0 0.0
        %2056 = vmatprep.subr.mxu0 0.0
        %2057 = vmatpush1.msra.mxu0 0.0
        %2058 = vmatprep.subr.mxu0 0.0
        %2059 = vmatpush1.msra.mxu0 0.0
        %2060 = vmatprep.subr.mxu0 0.0
        %2061 = vmatpush1.msra.mxu0 0.0
        %2062 = vmatprep.subr.mxu0 0.0
        %2063 = vmatpush1.msra.mxu0 0.0
        %2064 = vmatprep.subr.mxu0 0.0
        %2065 = vmatpush1.msra.mxu0 0.0
        %2066 = vmatprep.subr.mxu0 0.0
        %2067 = vmatpush1.msra.mxu0 0.0
        %2068 = vmatprep.subr.mxu0 0.0
        %2069 = vmatpush1.msra.mxu0 0.0
        %2070 = vmatprep.subr.mxu0 0.0
        %2071 = vmatpush1.msra.mxu0 0.0
        %2072 = vmatprep.subr.mxu0 0.0
        %2073 = vmatpush1.msra.mxu0 0.0
        %2074 = vmatprep.subr.mxu0 0.0
        %2075 = vmatpush1.msra.mxu0 0.0
        %2076 = vmatprep.subr.mxu0 0.0
        %2077 = vmatpush1.msra.mxu0 0.0
        %2078 = vmatprep.subr.mxu0 0.0
        %2079 = vmatpush1.msra.mxu0 0.0
        %2080 = vmatprep.subr.mxu0 0.0
        %2081 = vmatpush1.msra.mxu0 0.0
        %2082 = vmatprep.subr.mxu0 0.0
        %2083 = vmatpush1.msra.mxu0 0.0
        %2084 = vmatprep.mubr.f32.mxu0 0.0
        %2085 = vmatmul.mubr.f32.gmra.mrb[0].mxu0 %v2015
        %v2086 = vpop.f32.mrb[0].mxu0
        %v2087 = vadd.f32 0.0, %v2086
        %v2088 = vpop.f32.mrb[0].mxu0
        %2089 = vmatprep.mubr.f32.mxu0 0.0
        %2090 = vmatmul.mubr.f32.gmra.mrb[0].mxu0 %v2018
        %v2091 = vpop.f32.mrb[0].mxu0
        %v2092 = vadd.f32 0.0, %v2091
        %v2093 = vpop.f32.mrb[0].mxu0
        %2094 = vdwg.mxu0
        %v2095 = vadd.f32 %v2005, %v2087
        %v2096 = vadd.f32 %v2006, %v2092
        %v2097 = vld [vmem:[%s5] sm:$0x1]
        %v2099 = vlaneseq
        %v2100 = vshrl.u32 %v2099, 7
        %v2101 = vsub.s32 0, %v2100
        %v2102 = vrot.slane %v2097, %v2101
        %v2104 = vadd.f32 %v2095, %v2102
        %v2105 = vadd.f32 %v2096, %v2102
        %v2106 = vmax.f32 %v2104, 0.0
        %v2107 = vmax.f32 %v2105, 0.0
        %v2108 = vld [vmem:[%s6] sm:$0xff]
        %v2109 = vld [vmem:[%s6 + $0x8] sm:$0xff]
        %v2110 = vld [vmem:[%s6 + $0x10] sm:$0xff]
        %v2111 = vld [vmem:[%s6 + $0x18] sm:$0xff]
        %v2112 = vld [vmem:[%s6 + $0x20] sm:$0xff]
        %v2113 = vld [vmem:[%s6 + $0x28] sm:$0xff]
        %v2114 = vld [vmem:[%s6 + $0x30] sm:$0xff]
        %v2115 = vld [vmem:[%s6 + $0x38] sm:$0xff]
        %v2116 = vld [vmem:[%s6 + $0x40] sm:$0xff]
        %v2117 = vld [vmem:[%s6 + $0x48] sm:$0xff]
        %v2118 = vld [vmem:[%s6 + $0x50] sm:$0xff]
        %v2119 = vld [vmem:[%s6 + $0x58] sm:$0xff]
        %v2120 = vld [vmem:[%s6 + $0x60] sm:$0xff]
        %v2121 = vld [vmem:[%s6 + $0x68] sm:$0xff]
        %v2122 = vld [vmem:[%s6 + $0x70] sm:$0xff]
        %v2123 = vld [vmem:[%s6 + $0x78] sm:$0xff]
        %v2124 = vld [vmem:[%s6 + $0x80] sm:$0xff]
        %v2125 = vld [vmem:[%s6 + $0x88] sm:$0xff]
        %v2126 = vld [vmem:[%s6 + $0x90] sm:$0xff]
        %v2127 = vld [vmem:[%s6 + $0x98] sm:$0xff]
        %v2128 = vld [vmem:[%s6 + $0xa0] sm:$0xff]
        %v2129 = vld [vmem:[%s6 + $0xa8] sm:$0xff]
        %v2130 = vld [vmem:[%s6 + $0xb0] sm:$0xff]
        %v2131 = vld [vmem:[%s6 + $0xb8] sm:$0xff]
        %v2132 = vld [vmem:[%s6 + $0xc0] sm:$0xff]
        %v2133 = vld [vmem:[%s6 + $0xc8] sm:$0xff]
        %v2134 = vld [vmem:[%s6 + $0xd0] sm:$0xff]
        %v2135 = vld [vmem:[%s6 + $0xd8] sm:$0xff]
        %v2136 = vld [vmem:[%s6 + $0xe0] sm:$0xff]
        %v2137 = vld [vmem:[%s6 + $0xe8] sm:$0xff]
        %v2138 = vld [vmem:[%s6 + $0xf0] sm:$0xff]
        %v2139 = vld [vmem:[%s6 + $0xf8] sm:$0xff]
        %2140 = vmatprep.subr.mxu0 0.0
        %2141 = vmatpush1.msra.mxu0 %v2108
        %2142 = vmatprep.subr.mxu0 0.0
        %2143 = vmatpush1.msra.mxu0 %v2109
        %2144 = vmatprep.subr.mxu0 0.0
        %2145 = vmatpush1.msra.mxu0 %v2110
        %2146 = vmatprep.subr.mxu0 0.0
        %2147 = vmatpush1.msra.mxu0 %v2111
        %2148 = vmatprep.subr.mxu0 0.0
        %2149 = vmatpush1.msra.mxu0 %v2112
        %2150 = vmatprep.subr.mxu0 0.0
        %2151 = vmatpush1.msra.mxu0 %v2113
        %2152 = vmatprep.subr.mxu0 0.0
        %2153 = vmatpush1.msra.mxu0 %v2114
        %2154 = vmatprep.subr.mxu0 0.0
        %2155 = vmatpush1.msra.mxu0 %v2115
        %2156 = vmatprep.subr.mxu0 0.0
        %2157 = vmatpush1.msra.mxu0 %v2116
        %2158 = vmatprep.subr.mxu0 0.0
        %2159 = vmatpush1.msra.mxu0 %v2117
        %2160 = vmatprep.subr.mxu0 0.0
        %2161 = vmatpush1.msra.mxu0 %v2118
        %2162 = vmatprep.subr.mxu0 0.0
        %2163 = vmatpush1.msra.mxu0 %v2119
        %2164 = vmatprep.subr.mxu0 0.0
        %2165 = vmatpush1.msra.mxu0 %v2120
        %2166 = vmatprep.subr.mxu0 0.0
        %2167 = vmatpush1.msra.mxu0 %v2121
        %2168 = vmatprep.subr.mxu0 0.0
        %2169 = vmatpush1.msra.mxu0 %v2122
        %2170 = vmatprep.subr.mxu0 0.0
        %2171 = vmatpush1.msra.mxu0 %v2123
        %2172 = vmatprep.subr.mxu0 0.0
        %2173 = vmatpush1.msra.mxu0 %v2124
        %2174 = vmatprep.subr.mxu0 0.0
        %2175 = vmatpush1.msra.mxu0 %v2125
        %2176 = vmatprep.subr.mxu0 0.0
        %2177 = vmatpush1.msra.mxu0 %v2126
        %2178 = vmatprep.subr.mxu0 0.0
        %2179 = vmatpush1.msra.mxu0 %v2127
        %2180 = vmatprep.subr.mxu0 0.0
        %2181 = vmatpush1.msra.mxu0 %v2128
        %2182 = vmatprep.subr.mxu0 0.0
        %2183 = vmatpush1.msra.mxu0 %v2129
        %2184 = vmatprep.subr.mxu0 0.0
        %2185 = vmatpush1.msra.mxu0 %v2130
        %2186 = vmatprep.subr.mxu0 0.0
        %2187 = vmatpush1.msra.mxu0 %v2131
        %2188 = vmatprep.subr.mxu0 0.0
        %2189 = vmatpush1.msra.mxu0 %v2132
        %2190 = vmatprep.subr.mxu0 0.0
        %2191 = vmatpush1.msra.mxu0 %v2133
        %2192 = vmatprep.subr.mxu0 0.0
        %2193 = vmatpush1.msra.mxu0 %v2134
        %2194 = vmatprep.subr.mxu0 0.0
        %2195 = vmatpush1.msra.mxu0 %v2135
        %2196 = vmatprep.subr.mxu0 0.0
        %2197 = vmatpush1.msra.mxu0 %v2136
        %2198 = vmatprep.subr.mxu0 0.0
        %2199 = vmatpush1.msra.mxu0 %v2137
        %2200 = vmatprep.subr.mxu0 0.0
        %2201 = vmatpush1.msra.mxu0 %v2138
        %2202 = vmatprep.subr.mxu0 0.0
        %2203 = vmatpush1.msra.mxu0 %v2139
        %2204 = vmatprep.mubr.f32.mxu0 %v623
        %2205 = vmatmul.mubr.f32.gmra.mrb[0].mxu0 %v622
        %v2206 = vpop.f32.mrb[0].mxu0
        %v2207 = vadd.f32 0.0, %v2206
        %v2208 = vpop.f32.mrb[0].mxu0
        %2209 = vmatprep.mubr.f32.mxu0 %v625
        %2210 = vmatmul.mubr.f32.gmra.mrb[0].mxu0 %v624
        %v2211 = vpop.f32.mrb[0].mxu0
        %v2212 = vadd.f32 0.0, %v2211
        %v2213 = vpop.f32.mrb[0].mxu0
        %2214 = vdwg.mxu0
        %v2215 = vld [vmem:[%s7] sm:$0x1]
        %v2217 = vlaneseq
        %v2218 = vshrl.u32 %v2217, 7
        %v2219 = vsub.s32 0, %v2218
        %v2220 = vrot.slane %v2215, %v2219
        %vm2222 = vcmask 130048
        %v2224 = vsel %vm2222, %v626, 0
        %v2227 = vsel %vm2222, %v627, 0
        %2229 = vmatprep.subr.mxu0 0.0
        %2230 = vmatpush1.msra.mxu0 %v2207
        %2231 = vmatprep.subr.mxu0 0.0
        %2232 = vmatpush1.msra.mxu0 %v2212
        %2233 = vmatprep.subr.mxu0 0.0
        %2234 = vmatpush1.msra.mxu0 0.0
        %2235 = vmatprep.subr.mxu0 0.0
        %2236 = vmatpush1.msra.mxu0 0.0
        %2237 = vmatprep.subr.mxu0 0.0
        %2238 = vmatpush1.msra.mxu0 0.0
        %2239 = vmatprep.subr.mxu0 0.0
        %2240 = vmatpush1.msra.mxu0 0.0
        %2241 = vmatprep.subr.mxu0 0.0
        %2242 = vmatpush1.msra.mxu0 0.0
        %2243 = vmatprep.subr.mxu0 0.0
        %2244 = vmatpush1.msra.mxu0 0.0
        %2245 = vmatprep.subr.mxu0 0.0
        %2246 = vmatpush1.msra.mxu0 0.0
        %2247 = vmatprep.subr.mxu0 0.0
        %2248 = vmatpush1.msra.mxu0 0.0
        %2249 = vmatprep.subr.mxu0 0.0
        %2250 = vmatpush1.msra.mxu0 0.0
        %2251 = vmatprep.subr.mxu0 0.0
        %2252 = vmatpush1.msra.mxu0 0.0
        %2253 = vmatprep.subr.mxu0 0.0
        %2254 = vmatpush1.msra.mxu0 0.0
        %2255 = vmatprep.subr.mxu0 0.0
        %2256 = vmatpush1.msra.mxu0 0.0
        %2257 = vmatprep.subr.mxu0 0.0
        %2258 = vmatpush1.msra.mxu0 0.0
        %2259 = vmatprep.subr.mxu0 0.0
        %2260 = vmatpush1.msra.mxu0 0.0
        %2261 = vmatprep.subr.mxu0 0.0
        %2262 = vmatpush1.msra.mxu0 0.0
        %2263 = vmatprep.subr.mxu0 0.0
        %2264 = vmatpush1.msra.mxu0 0.0
        %2265 = vmatprep.subr.mxu0 0.0
        %2266 = vmatpush1.msra.mxu0 0.0
        %2267 = vmatprep.subr.mxu0 0.0
        %2268 = vmatpush1.msra.mxu0 0.0
        %2269 = vmatprep.subr.mxu0 0.0
        %2270 = vmatpush1.msra.mxu0 0.0
        %2271 = vmatprep.subr.mxu0 0.0
        %2272 = vmatpush1.msra.mxu0 0.0
        %2273 = vmatprep.subr.mxu0 0.0
        %2274 = vmatpush1.msra.mxu0 0.0
        %2275 = vmatprep.subr.mxu0 0.0
        %2276 = vmatpush1.msra.mxu0 0.0
        %2277 = vmatprep.subr.mxu0 0.0
        %2278 = vmatpush1.msra.mxu0 0.0
        %2279 = vmatprep.subr.mxu0 0.0
        %2280 = vmatpush1.msra.mxu0 0.0
        %2281 = vmatprep.subr.mxu0 0.0
        %2282 = vmatpush1.msra.mxu0 0.0
        %2283 = vmatprep.subr.mxu0 0.0
        %2284 = vmatpush1.msra.mxu0 0.0
        %2285 = vmatprep.subr.mxu0 0.0
        %2286 = vmatpush1.msra.mxu0 0.0
        %2287 = vmatprep.subr.mxu0 0.0
        %2288 = vmatpush1.msra.mxu0 0.0
        %2289 = vmatprep.subr.mxu0 0.0
        %2290 = vmatpush1.msra.mxu0 0.0
        %2291 = vmatprep.subr.mxu0 0.0
        %2292 = vmatpush1.msra.mxu0 0.0
        %2293 = vmatprep.mubr.f32.mxu0 0.0
        %2294 = vmatmul.mubr.f32.gmra.mrb[0].mxu0 %v2224
        %v2295 = vpop.f32.mrb[0].mxu0
        %v2296 = vadd.f32 %v2220, %v2295
        %v2297 = vpop.f32.mrb[0].mxu0
        %2298 = vmatprep.mubr.f32.mxu0 0.0
        %2299 = vmatmul.mubr.f32.gmra.mrb[0].mxu0 %v2227
        %v2300 = vpop.f32.mrb[0].mxu0
        %v2301 = vadd.f32 %v2220, %v2300
        %v2302 = vpop.f32.mrb[0].mxu0
        %2303 = vdwg.mxu0
        %v2304 = vmax.f32 %v2296, 0.0
        %v2305 = vmax.f32 %v2301, 0.0
        %v2306 = vld [vmem:[%s8] sm:$0xff]
        %v2307 = vld [vmem:[%s8 + $0x8] sm:$0xff]
        %v2308 = vld [vmem:[%s8 + $0x10] sm:$0xff]
        %v2309 = vld [vmem:[%s8 + $0x18] sm:$0xff]
        %v2311 = vsel %vm744, %v2304, 0
        %v2314 = vsel %vm744, %v2305, 0
        %2316 = vmatprep.subr.mxu0 0.0
        %2317 = vmatpush1.msra.mxu0 %v2306
        %2318 = vmatprep.subr.mxu0 0.0
        %2319 = vmatpush1.msra.mxu0 %v2307
        %2320 = vmatprep.subr.mxu0 0.0
        %2321 = vmatpush1.msra.mxu0 %v2308
        %2322 = vmatprep.subr.mxu0 0.0
        %2323 = vmatpush1.msra.mxu0 %v2309
        %2324 = vmatprep.subr.mxu0 0.0
        %2325 = vmatpush1.msra.mxu0 0.0
        %2326 = vmatprep.subr.mxu0 0.0
        %2327 = vmatpush1.msra.mxu0 0.0
        %2328 = vmatprep.subr.mxu0 0.0
        %2329 = vmatpush1.msra.mxu0 0.0
        %2330 = vmatprep.subr.mxu0 0.0
        %2331 = vmatpush1.msra.mxu0 0.0
        %2332 = vmatprep.subr.mxu0 0.0
        %2333 = vmatpush1.msra.mxu0 0.0
        %2334 = vmatprep.subr.mxu0 0.0
        %2335 = vmatpush1.msra.mxu0 0.0
        %2336 = vmatprep.subr.mxu0 0.0
        %2337 = vmatpush1.msra.mxu0 0.0
        %2338 = vmatprep.subr.mxu0 0.0
        %2339 = vmatpush1.msra.mxu0 0.0
        %2340 = vmatprep.subr.mxu0 0.0
        %2341 = vmatpush1.msra.mxu0 0.0
        %2342 = vmatprep.subr.mxu0 0.0
        %2343 = vmatpush1.msra.mxu0 0.0
        %2344 = vmatprep.subr.mxu0 0.0
        %2345 = vmatpush1.msra.mxu0 0.0
        %2346 = vmatprep.subr.mxu0 0.0
        %2347 = vmatpush1.msra.mxu0 0.0
        %2348 = vmatprep.subr.mxu0 0.0
        %2349 = vmatpush1.msra.mxu0 0.0
        %2350 = vmatprep.subr.mxu0 0.0
        %2351 = vmatpush1.msra.mxu0 0.0
        %2352 = vmatprep.subr.mxu0 0.0
        %2353 = vmatpush1.msra.mxu0 0.0
        %2354 = vmatprep.subr.mxu0 0.0
        %2355 = vmatpush1.msra.mxu0 0.0
        %2356 = vmatprep.subr.mxu0 0.0
        %2357 = vmatpush1.msra.mxu0 0.0
        %2358 = vmatprep.subr.mxu0 0.0
        %2359 = vmatpush1.msra.mxu0 0.0
        %2360 = vmatprep.subr.mxu0 0.0
        %2361 = vmatpush1.msra.mxu0 0.0
        %2362 = vmatprep.subr.mxu0 0.0
        %2363 = vmatpush1.msra.mxu0 0.0
        %2364 = vmatprep.subr.mxu0 0.0
        %2365 = vmatpush1.msra.mxu0 0.0
        %2366 = vmatprep.subr.mxu0 0.0
        %2367 = vmatpush1.msra.mxu0 0.0
        %2368 = vmatprep.subr.mxu0 0.0
        %2369 = vmatpush1.msra.mxu0 0.0
        %2370 = vmatprep.subr.mxu0 0.0
        %2371 = vmatpush1.msra.mxu0 0.0
        %2372 = vmatprep.subr.mxu0 0.0
        %2373 = vmatpush1.msra.mxu0 0.0
        %2374 = vmatprep.subr.mxu0 0.0
        %2375 = vmatpush1.msra.mxu0 0.0
        %2376 = vmatprep.subr.mxu0 0.0
        %2377 = vmatpush1.msra.mxu0 0.0
        %2378 = vmatprep.subr.mxu0 0.0
        %2379 = vmatpush1.msra.mxu0 0.0
        %2380 = vmatprep.mubr.f32.mxu0 0.0
        %2381 = vmatmul.mubr.f32.gmra.mrb[0].mxu0 %v2311
        %v2382 = vpop.f32.mrb[0].mxu0
        %v2383 = vadd.f32 0.0, %v2382
        %v2384 = vpop.f32.mrb[0].mxu0
        %2385 = vmatprep.mubr.f32.mxu0 0.0
        %2386 = vmatmul.mubr.f32.gmra.mrb[0].mxu0 %v2314
        %v2387 = vpop.f32.mrb[0].mxu0
        %v2388 = vadd.f32 0.0, %v2387
        %v2389 = vpop.f32.mrb[0].mxu0
        %2390 = vdwg.mxu0
        %v2391 = vld [vmem:[%s9] sm:$0x1]
        %v2393 = vlaneseq
        %v2394 = vshrl.u32 %v2393, 7
        %v2395 = vsub.s32 0, %v2394
        %v2396 = vrot.slane %v2391, %v2395
        %2398 = vmatprep.subr.mxu0 0.0
        %2399 = vmatpush1.msra.mxu0 %v2383
        %2400 = vmatprep.subr.mxu0 0.0
        %2401 = vmatpush1.msra.mxu0 %v2388
        %2402 = vmatprep.subr.mxu0 0.0
        %2403 = vmatpush1.msra.mxu0 0.0
        %2404 = vmatprep.subr.mxu0 0.0
        %2405 = vmatpush1.msra.mxu0 0.0
        %2406 = vmatprep.subr.mxu0 0.0
        %2407 = vmatpush1.msra.mxu0 0.0
        %2408 = vmatprep.subr.mxu0 0.0
        %2409 = vmatpush1.msra.mxu0 0.0
        %2410 = vmatprep.subr.mxu0 0.0
        %2411 = vmatpush1.msra.mxu0 0.0
        %2412 = vmatprep.subr.mxu0 0.0
        %2413 = vmatpush1.msra.mxu0 0.0
        %2414 = vmatprep.subr.mxu0 0.0
        %2415 = vmatpush1.msra.mxu0 0.0
        %2416 = vmatprep.subr.mxu0 0.0
        %2417 = vmatpush1.msra.mxu0 0.0
        %2418 = vmatprep.subr.mxu0 0.0
        %2419 = vmatpush1.msra.mxu0 0.0
        %2420 = vmatprep.subr.mxu0 0.0
        %2421 = vmatpush1.msra.mxu0 0.0
        %2422 = vmatprep.subr.mxu0 0.0
        %2423 = vmatpush1.msra.mxu0 0.0
        %2424 = vmatprep.subr.mxu0 0.0
        %2425 = vmatpush1.msra.mxu0 0.0
        %2426 = vmatprep.subr.mxu0 0.0
        %2427 = vmatpush1.msra.mxu0 0.0
        %2428 = vmatprep.subr.mxu0 0.0
        %2429 = vmatpush1.msra.mxu0 0.0
        %2430 = vmatprep.subr.mxu0 0.0
        %2431 = vmatpush1.msra.mxu0 0.0
        %2432 = vmatprep.subr.mxu0 0.0
        %2433 = vmatpush1.msra.mxu0 0.0
        %2434 = vmatprep.subr.mxu0 0.0
        %2435 = vmatpush1.msra.mxu0 0.0
        %2436 = vmatprep.subr.mxu0 0.0
        %2437 = vmatpush1.msra.mxu0 0.0
        %2438 = vmatprep.subr.mxu0 0.0
        %2439 = vmatpush1.msra.mxu0 0.0
        %2440 = vmatprep.subr.mxu0 0.0
        %2441 = vmatpush1.msra.mxu0 0.0
        %2442 = vmatprep.subr.mxu0 0.0
        %2443 = vmatpush1.msra.mxu0 0.0
        %2444 = vmatprep.subr.mxu0 0.0
        %2445 = vmatpush1.msra.mxu0 0.0
        %2446 = vmatprep.subr.mxu0 0.0
        %2447 = vmatpush1.msra.mxu0 0.0
        %2448 = vmatprep.subr.mxu0 0.0
        %2449 = vmatpush1.msra.mxu0 0.0
        %2450 = vmatprep.subr.mxu0 0.0
        %2451 = vmatpush1.msra.mxu0 0.0
        %2452 = vmatprep.subr.mxu0 0.0
        %2453 = vmatpush1.msra.mxu0 0.0
        %2454 = vmatprep.subr.mxu0 0.0
        %2455 = vmatpush1.msra.mxu0 0.0
        %2456 = vmatprep.subr.mxu0 0.0
        %2457 = vmatpush1.msra.mxu0 0.0
        %2458 = vmatprep.subr.mxu0 0.0
        %2459 = vmatpush1.msra.mxu0 0.0
        %2460 = vmatprep.subr.mxu0 0.0
        %2461 = vmatpush1.msra.mxu0 0.0
        %2462 = vmatprep.mubr.f32.mxu0 0.0
        %2463 = vmatmul.mubr.f32.gmra.mrb[0].mxu0 %v2224
        %v2464 = vpop.f32.mrb[0].mxu0
        %v2465 = vadd.f32 %v2396, %v2464
        %v2466 = vpop.f32.mrb[0].mxu0
        %2467 = vmatprep.mubr.f32.mxu0 0.0
        %2468 = vmatmul.mubr.f32.gmra.mrb[0].mxu0 %v2227
        %v2469 = vpop.f32.mrb[0].mxu0
        %v2470 = vadd.f32 %v2396, %v2469
        %v2471 = vpop.f32.mrb[0].mxu0
        %2472 = vdwg.mxu0
        %v2473 = vmax.f32 %v2465, 0.0
        %v2474 = vmax.f32 %v2470, 0.0
        %v2475 = vld [vmem:[%s10] sm:$0xff]
        %v2476 = vld [vmem:[%s10 + $0x8] sm:$0xff]
        %v2477 = vld [vmem:[%s10 + $0x10] sm:$0xff]
        %v2478 = vld [vmem:[%s10 + $0x18] sm:$0xff]
        %v2479 = vld [vmem:[%s11] sm:$0xff]
        %v2480 = vld [vmem:[%s11 + $0x8] sm:$0xff]
        %v2481 = vld [vmem:[%s11 + $0x10] sm:$0xff]
        %v2482 = vld [vmem:[%s11 + $0x18] sm:$0xff]
        %v2484 = vsel %vm744, %v2106, 0
        %v2487 = vsel %vm744, %v2107, 0
        %2489 = vmatprep.subr.mxu0 0.0
        %2490 = vmatpush1.msra.mxu0 %v2479
        %2491 = vmatprep.subr.mxu0 0.0
        %2492 = vmatpush1.msra.mxu0 %v2480
        %2493 = vmatprep.subr.mxu0 0.0
        %2494 = vmatpush1.msra.mxu0 %v2481
        %2495 = vmatprep.subr.mxu0 0.0
        %2496 = vmatpush1.msra.mxu0 %v2482
        %2497 = vmatprep.subr.mxu0 0.0
        %2498 = vmatpush1.msra.mxu0 0.0
        %2499 = vmatprep.subr.mxu0 0.0
        %2500 = vmatpush1.msra.mxu0 0.0
        %2501 = vmatprep.subr.mxu0 0.0
        %2502 = vmatpush1.msra.mxu0 0.0
        %2503 = vmatprep.subr.mxu0 0.0
        %2504 = vmatpush1.msra.mxu0 0.0
        %2505 = vmatprep.subr.mxu0 0.0
        %2506 = vmatpush1.msra.mxu0 0.0
        %2507 = vmatprep.subr.mxu0 0.0
        %2508 = vmatpush1.msra.mxu0 0.0
        %2509 = vmatprep.subr.mxu0 0.0
        %2510 = vmatpush1.msra.mxu0 0.0
        %2511 = vmatprep.subr.mxu0 0.0
        %2512 = vmatpush1.msra.mxu0 0.0
        %2513 = vmatprep.subr.mxu0 0.0
        %2514 = vmatpush1.msra.mxu0 0.0
        %2515 = vmatprep.subr.mxu0 0.0
        %2516 = vmatpush1.msra.mxu0 0.0
        %2517 = vmatprep.subr.mxu0 0.0
        %2518 = vmatpush1.msra.mxu0 0.0
        %2519 = vmatprep.subr.mxu0 0.0
        %2520 = vmatpush1.msra.mxu0 0.0
        %2521 = vmatprep.subr.mxu0 0.0
        %2522 = vmatpush1.msra.mxu0 0.0
        %2523 = vmatprep.subr.mxu0 0.0
        %2524 = vmatpush1.msra.mxu0 0.0
        %2525 = vmatprep.subr.mxu0 0.0
        %2526 = vmatpush1.msra.mxu0 0.0
        %2527 = vmatprep.subr.mxu0 0.0
        %2528 = vmatpush1.msra.mxu0 0.0
        %2529 = vmatprep.subr.mxu0 0.0
        %2530 = vmatpush1.msra.mxu0 0.0
        %2531 = vmatprep.subr.mxu0 0.0
        %2532 = vmatpush1.msra.mxu0 0.0
        %2533 = vmatprep.subr.mxu0 0.0
        %2534 = vmatpush1.msra.mxu0 0.0
        %2535 = vmatprep.subr.mxu0 0.0
        %2536 = vmatpush1.msra.mxu0 0.0
        %2537 = vmatprep.subr.mxu0 0.0
        %2538 = vmatpush1.msra.mxu0 0.0
        %2539 = vmatprep.subr.mxu0 0.0
        %2540 = vmatpush1.msra.mxu0 0.0
        %2541 = vmatprep.subr.mxu0 0.0
        %2542 = vmatpush1.msra.mxu0 0.0
        %2543 = vmatprep.subr.mxu0 0.0
        %2544 = vmatpush1.msra.mxu0 0.0
        %2545 = vmatprep.subr.mxu0 0.0
        %2546 = vmatpush1.msra.mxu0 0.0
        %2547 = vmatprep.subr.mxu0 0.0
        %2548 = vmatpush1.msra.mxu0 0.0
        %2549 = vmatprep.subr.mxu0 0.0
        %2550 = vmatpush1.msra.mxu0 0.0
        %2551 = vmatprep.subr.mxu0 0.0
        %2552 = vmatpush1.msra.mxu0 0.0
        %2553 = vmatprep.mubr.f32.mxu0 0.0
        %2554 = vmatmul.mubr.f32.gmra.mrb[0].mxu0 %v2484
        %v2555 = vpop.f32.mrb[0].mxu0
        %v2556 = vadd.f32 0.0, %v2555
        %v2557 = vpop.f32.mrb[0].mxu0
        %2558 = vmatprep.mubr.f32.mxu0 0.0
        %2559 = vmatmul.mubr.f32.gmra.mrb[0].mxu0 %v2487
        %v2560 = vpop.f32.mrb[0].mxu0
        %v2561 = vadd.f32 0.0, %v2560
        %v2562 = vpop.f32.mrb[0].mxu0
        %2563 = vdwg.mxu0
        %v2565 = vsel %vm744, %v2473, 0
        %v2568 = vsel %vm744, %v2474, 0
        %2570 = vmatprep.subr.mxu0 0.0
        %2571 = vmatpush1.msra.mxu0 %v2475
        %2572 = vmatprep.subr.mxu0 0.0
        %2573 = vmatpush1.msra.mxu0 %v2476
        %2574 = vmatprep.subr.mxu0 0.0
        %2575 = vmatpush1.msra.mxu0 %v2477
        %2576 = vmatprep.subr.mxu0 0.0
        %2577 = vmatpush1.msra.mxu0 %v2478
        %2578 = vmatprep.subr.mxu0 0.0
        %2579 = vmatpush1.msra.mxu0 0.0
        %2580 = vmatprep.subr.mxu0 0.0
        %2581 = vmatpush1.msra.mxu0 0.0
        %2582 = vmatprep.subr.mxu0 0.0
        %2583 = vmatpush1.msra.mxu0 0.0
        %2584 = vmatprep.subr.mxu0 0.0
        %2585 = vmatpush1.msra.mxu0 0.0
        %2586 = vmatprep.subr.mxu0 0.0
        %2587 = vmatpush1.msra.mxu0 0.0
        %2588 = vmatprep.subr.mxu0 0.0
        %2589 = vmatpush1.msra.mxu0 0.0
        %2590 = vmatprep.subr.mxu0 0.0
        %2591 = vmatpush1.msra.mxu0 0.0
        %2592 = vmatprep.subr.mxu0 0.0
        %2593 = vmatpush1.msra.mxu0 0.0
        %2594 = vmatprep.subr.mxu0 0.0
        %2595 = vmatpush1.msra.mxu0 0.0
        %2596 = vmatprep.subr.mxu0 0.0
        %2597 = vmatpush1.msra.mxu0 0.0
        %2598 = vmatprep.subr.mxu0 0.0
        %2599 = vmatpush1.msra.mxu0 0.0
        %2600 = vmatprep.subr.mxu0 0.0
        %2601 = vmatpush1.msra.mxu0 0.0
        %2602 = vmatprep.subr.mxu0 0.0
        %2603 = vmatpush1.msra.mxu0 0.0
        %2604 = vmatprep.subr.mxu0 0.0
        %2605 = vmatpush1.msra.mxu0 0.0
        %2606 = vmatprep.subr.mxu0 0.0
        %2607 = vmatpush1.msra.mxu0 0.0
        %2608 = vmatprep.subr.mxu0 0.0
        %2609 = vmatpush1.msra.mxu0 0.0
        %2610 = vmatprep.subr.mxu0 0.0
        %2611 = vmatpush1.msra.mxu0 0.0
        %2612 = vmatprep.subr.mxu0 0.0
        %2613 = vmatpush1.msra.mxu0 0.0
        %2614 = vmatprep.subr.mxu0 0.0
        %2615 = vmatpush1.msra.mxu0 0.0
        %2616 = vmatprep.subr.mxu0 0.0
        %2617 = vmatpush1.msra.mxu0 0.0
        %2618 = vmatprep.subr.mxu0 0.0
        %2619 = vmatpush1.msra.mxu0 0.0
        %2620 = vmatprep.subr.mxu0 0.0
        %2621 = vmatpush1.msra.mxu0 0.0
        %2622 = vmatprep.subr.mxu0 0.0
        %2623 = vmatpush1.msra.mxu0 0.0
        %2624 = vmatprep.subr.mxu0 0.0
        %2625 = vmatpush1.msra.mxu0 0.0
        %2626 = vmatprep.subr.mxu0 0.0
        %2627 = vmatpush1.msra.mxu0 0.0
        %2628 = vmatprep.subr.mxu0 0.0
        %2629 = vmatpush1.msra.mxu0 0.0
        %2630 = vmatprep.subr.mxu0 0.0
        %2631 = vmatpush1.msra.mxu0 0.0
        %2632 = vmatprep.subr.mxu0 0.0
        %2633 = vmatpush1.msra.mxu0 0.0
        %2634 = vmatprep.mubr.f32.mxu0 0.0
        %2635 = vmatmul.mubr.f32.gmra.mrb[0].mxu0 %v2565
        %v2636 = vpop.f32.mrb[0].mxu0
        %v2637 = vadd.f32 %v2556, %v2636
        %v2638 = vpop.f32.mrb[0].mxu0
        %2639 = vmatprep.mubr.f32.mxu0 0.0
        %2640 = vmatmul.mubr.f32.gmra.mrb[0].mxu0 %v2568
        %v2641 = vpop.f32.mrb[0].mxu0
        %v2642 = vadd.f32 %v2561, %v2641
        %v2643 = vpop.f32.mrb[0].mxu0
        %2644 = vdwg.mxu0
        %v2645 = vld [vmem:[%s12] sm:$0xff]
        %v2646 = vld [vmem:[%s12 + $0x8] sm:$0xff]
        %v2647 = vld [vmem:[%s12 + $0x10] sm:$0xff]
        %v2648 = vld [vmem:[%s12 + $0x18] sm:$0xff]
        %v2649 = vld [vmem:[%s13] sm:$0xff]
        %v2650 = vld [vmem:[%s13 + $0x8] sm:$0xff]
        %v2651 = vld [vmem:[%s13 + $0x10] sm:$0xff]
        %v2652 = vld [vmem:[%s13 + $0x18] sm:$0xff]
        %2653 = vmatprep.subr.mxu0 0.0
        %2654 = vmatpush1.msra.mxu0 %v2649
        %2655 = vmatprep.subr.mxu0 0.0
        %2656 = vmatpush1.msra.mxu0 %v2650
        %2657 = vmatprep.subr.mxu0 0.0
        %2658 = vmatpush1.msra.mxu0 %v2651
        %2659 = vmatprep.subr.mxu0 0.0
        %2660 = vmatpush1.msra.mxu0 %v2652
        %2661 = vmatprep.subr.mxu0 0.0
        %2662 = vmatpush1.msra.mxu0 0.0
        %2663 = vmatprep.subr.mxu0 0.0
        %2664 = vmatpush1.msra.mxu0 0.0
        %2665 = vmatprep.subr.mxu0 0.0
        %2666 = vmatpush1.msra.mxu0 0.0
        %2667 = vmatprep.subr.mxu0 0.0
        %2668 = vmatpush1.msra.mxu0 0.0
        %2669 = vmatprep.subr.mxu0 0.0
        %2670 = vmatpush1.msra.mxu0 0.0
        %2671 = vmatprep.subr.mxu0 0.0
        %2672 = vmatpush1.msra.mxu0 0.0
        %2673 = vmatprep.subr.mxu0 0.0
        %2674 = vmatpush1.msra.mxu0 0.0
        %2675 = vmatprep.subr.mxu0 0.0
        %2676 = vmatpush1.msra.mxu0 0.0
        %2677 = vmatprep.subr.mxu0 0.0
        %2678 = vmatpush1.msra.mxu0 0.0
        %2679 = vmatprep.subr.mxu0 0.0
        %2680 = vmatpush1.msra.mxu0 0.0
        %2681 = vmatprep.subr.mxu0 0.0
        %2682 = vmatpush1.msra.mxu0 0.0
        %2683 = vmatprep.subr.mxu0 0.0
        %2684 = vmatpush1.msra.mxu0 0.0
        %2685 = vmatprep.subr.mxu0 0.0
        %2686 = vmatpush1.msra.mxu0 0.0
        %2687 = vmatprep.subr.mxu0 0.0
        %2688 = vmatpush1.msra.mxu0 0.0
        %2689 = vmatprep.subr.mxu0 0.0
        %2690 = vmatpush1.msra.mxu0 0.0
        %2691 = vmatprep.subr.mxu0 0.0
        %2692 = vmatpush1.msra.mxu0 0.0
        %2693 = vmatprep.subr.mxu0 0.0
        %2694 = vmatpush1.msra.mxu0 0.0
        %2695 = vmatprep.subr.mxu0 0.0
        %2696 = vmatpush1.msra.mxu0 0.0
        %2697 = vmatprep.subr.mxu0 0.0
        %2698 = vmatpush1.msra.mxu0 0.0
        %2699 = vmatprep.subr.mxu0 0.0
        %2700 = vmatpush1.msra.mxu0 0.0
        %2701 = vmatprep.subr.mxu0 0.0
        %2702 = vmatpush1.msra.mxu0 0.0
        %2703 = vmatprep.subr.mxu0 0.0
        %2704 = vmatpush1.msra.mxu0 0.0
        %2705 = vmatprep.subr.mxu0 0.0
        %2706 = vmatpush1.msra.mxu0 0.0
        %2707 = vmatprep.subr.mxu0 0.0
        %2708 = vmatpush1.msra.mxu0 0.0
        %2709 = vmatprep.subr.mxu0 0.0
        %2710 = vmatpush1.msra.mxu0 0.0
        %2711 = vmatprep.subr.mxu0 0.0
        %2712 = vmatpush1.msra.mxu0 0.0
        %2713 = vmatprep.subr.mxu0 0.0
        %2714 = vmatpush1.msra.mxu0 0.0
        %2715 = vmatprep.subr.mxu0 0.0
        %2716 = vmatpush1.msra.mxu0 0.0
        %2717 = vmatprep.mubr.f32.mxu0 0.0
        %2718 = vmatmul.mubr.f32.gmra.mrb[0].mxu0 %v2484
        %v2719 = vpop.f32.mrb[0].mxu0
        %v2720 = vadd.f32 0.0, %v2719
        %v2721 = vpop.f32.mrb[0].mxu0
        %2722 = vmatprep.mubr.f32.mxu0 0.0
        %2723 = vmatmul.mubr.f32.gmra.mrb[0].mxu0 %v2487
        %v2724 = vpop.f32.mrb[0].mxu0
        %v2725 = vadd.f32 0.0, %v2724
        %v2726 = vpop.f32.mrb[0].mxu0
        %2727 = vdwg.mxu0
        %2728 = vmatprep.subr.mxu0 0.0
        %2729 = vmatpush1.msra.mxu0 %v2645
        %2730 = vmatprep.subr.mxu0 0.0
        %2731 = vmatpush1.msra.mxu0 %v2646
        %2732 = vmatprep.subr.mxu0 0.0
        %2733 = vmatpush1.msra.mxu0 %v2647
        %2734 = vmatprep.subr.mxu0 0.0
        %2735 = vmatpush1.msra.mxu0 %v2648
        %2736 = vmatprep.subr.mxu0 0.0
        %2737 = vmatpush1.msra.mxu0 0.0
        %2738 = vmatprep.subr.mxu0 0.0
        %2739 = vmatpush1.msra.mxu0 0.0
        %2740 = vmatprep.subr.mxu0 0.0
        %2741 = vmatpush1.msra.mxu0 0.0
        %2742 = vmatprep.subr.mxu0 0.0
        %2743 = vmatpush1.msra.mxu0 0.0
        %2744 = vmatprep.subr.mxu0 0.0
        %2745 = vmatpush1.msra.mxu0 0.0
        %2746 = vmatprep.subr.mxu0 0.0
        %2747 = vmatpush1.msra.mxu0 0.0
        %2748 = vmatprep.subr.mxu0 0.0
        %2749 = vmatpush1.msra.mxu0 0.0
        %2750 = vmatprep.subr.mxu0 0.0
        %2751 = vmatpush1.msra.mxu0 0.0
        %2752 = vmatprep.subr.mxu0 0.0
        %2753 = vmatpush1.msra.mxu0 0.0
        %2754 = vmatprep.subr.mxu0 0.0
        %2755 = vmatpush1.msra.mxu0 0.0
        %2756 = vmatprep.subr.mxu0 0.0
        %2757 = vmatpush1.msra.mxu0 0.0
        %2758 = vmatprep.subr.mxu0 0.0
        %2759 = vmatpush1.msra.mxu0 0.0
        %2760 = vmatprep.subr.mxu0 0.0
        %2761 = vmatpush1.msra.mxu0 0.0
        %2762 = vmatprep.subr.mxu0 0.0
        %2763 = vmatpush1.msra.mxu0 0.0
        %2764 = vmatprep.subr.mxu0 0.0
        %2765 = vmatpush1.msra.mxu0 0.0
        %2766 = vmatprep.subr.mxu0 0.0
        %2767 = vmatpush1.msra.mxu0 0.0
        %2768 = vmatprep.subr.mxu0 0.0
        %2769 = vmatpush1.msra.mxu0 0.0
        %2770 = vmatprep.subr.mxu0 0.0
        %2771 = vmatpush1.msra.mxu0 0.0
        %2772 = vmatprep.subr.mxu0 0.0
        %2773 = vmatpush1.msra.mxu0 0.0
        %2774 = vmatprep.subr.mxu0 0.0
        %2775 = vmatpush1.msra.mxu0 0.0
        %2776 = vmatprep.subr.mxu0 0.0
        %2777 = vmatpush1.msra.mxu0 0.0
        %2778 = vmatprep.subr.mxu0 0.0
        %2779 = vmatpush1.msra.mxu0 0.0
        %2780 = vmatprep.subr.mxu0 0.0
        %2781 = vmatpush1.msra.mxu0 0.0
        %2782 = vmatprep.subr.mxu0 0.0
        %2783 = vmatpush1.msra.mxu0 0.0
        %2784 = vmatprep.subr.mxu0 0.0
        %2785 = vmatpush1.msra.mxu0 0.0
        %2786 = vmatprep.subr.mxu0 0.0
        %2787 = vmatpush1.msra.mxu0 0.0
        %2788 = vmatprep.subr.mxu0 0.0
        %2789 = vmatpush1.msra.mxu0 0.0
        %2790 = vmatprep.subr.mxu0 0.0
        %2791 = vmatpush1.msra.mxu0 0.0
        %2792 = vmatprep.mubr.f32.mxu0 0.0
        %2793 = vmatmul.mubr.f32.gmra.mrb[0].mxu0 %v2565
        %v2794 = vpop.f32.mrb[0].mxu0
        %v2795 = vadd.f32 %v2720, %v2794
        %v2796 = vpop.f32.mrb[0].mxu0
        %2797 = vmatprep.mubr.f32.mxu0 0.0
        %2798 = vmatmul.mubr.f32.gmra.mrb[0].mxu0 %v2568
        %v2799 = vpop.f32.mrb[0].mxu0
        %v2800 = vadd.f32 %v2725, %v2799
        %v2801 = vpop.f32.mrb[0].mxu0
        %2802 = vdwg.mxu0
        %v2805 = vcombine.high %v2795, %v2795
        %v2807 = vunpack.c.l.s4 1966171168
        %v2808 = vunpack.c.0.s8 %v2807
        %v2809 = vlaneseq
        %v2810 = vshrl.u32 %v2809, 7
        %v2811 = vsub.s32 %v2808, %v2810
        %v2812 = vrot.slane %v2795, %v2811
        %v2814 = vunpack.c.l.s4 1966171168
        %v2815 = vunpack.c.0.s8 %v2814
        %v2816 = vlaneseq
        %v2817 = vshrl.u32 %v2816, 7
        %v2818 = vsub.s32 %v2815, %v2817
        %v2819 = vrot.slane %v2805, %v2818
        %v2820 = vcombine.high %v2812, %v2812
        %v2821 = vcombine.high %v2819, %v2819
        %v2823 = vunpack.c.l.s4 1966171168
        %v2824 = vunpack.c.0.s8 %v2823
        %v2825 = vlaneseq
        %v2826 = vshrl.u32 %v2825, 7
        %v2827 = vsub.s32 %v2824, %v2826
        %v2828 = vrot.slane %v2812, %v2827
        %v2830 = vunpack.c.l.s4 1966171168
        %v2831 = vunpack.c.0.s8 %v2830
        %v2832 = vlaneseq
        %v2833 = vshrl.u32 %v2832, 7
        %v2834 = vsub.s32 %v2831, %v2833
        %v2835 = vrot.slane %v2819, %v2834
        %v2837 = vunpack.c.l.s4 1966171168
        %v2838 = vunpack.c.0.s8 %v2837
        %v2839 = vlaneseq
        %v2840 = vshrl.u32 %v2839, 7
        %v2841 = vsub.s32 %v2838, %v2840
        %v2842 = vrot.slane %v2820, %v2841
        %v2844 = vunpack.c.l.s4 1966171168
        %v2845 = vunpack.c.0.s8 %v2844
        %v2846 = vlaneseq
        %v2847 = vshrl.u32 %v2846, 7
        %v2848 = vsub.s32 %v2845, %v2847
        %v2849 = vrot.slane %v2821, %v2848
        %v2850 = vcombine.high %v2828, %v2828
        %v2851 = vcombine.high %v2835, %v2835
        %v2852 = vcombine.high %v2842, %v2842
        %v2853 = vcombine.high %v2849, %v2849
        %v2854 = vcombine.high %v2800, %v2800
        %v2856 = vunpack.c.l.s4 1966171168
        %v2857 = vunpack.c.0.s8 %v2856
        %v2858 = vlaneseq
        %v2859 = vshrl.u32 %v2858, 7
        %v2860 = vsub.s32 %v2857, %v2859
        %v2861 = vrot.slane %v2800, %v2860
        %v2863 = vunpack.c.l.s4 1966171168
        %v2864 = vunpack.c.0.s8 %v2863
        %v2865 = vlaneseq
        %v2866 = vshrl.u32 %v2865, 7
        %v2867 = vsub.s32 %v2864, %v2866
        %v2868 = vrot.slane %v2854, %v2867
        %v2869 = vcombine.high %v2861, %v2861
        %v2870 = vcombine.high %v2868, %v2868
        %v2872 = vunpack.c.l.s4 1966171168
        %v2873 = vunpack.c.0.s8 %v2872
        %v2874 = vlaneseq
        %v2875 = vshrl.u32 %v2874, 7
        %v2876 = vsub.s32 %v2873, %v2875
        %v2877 = vrot.slane %v2861, %v2876
        %v2879 = vunpack.c.l.s4 1966171168
        %v2880 = vunpack.c.0.s8 %v2879
        %v2881 = vlaneseq
        %v2882 = vshrl.u32 %v2881, 7
        %v2883 = vsub.s32 %v2880, %v2882
        %v2884 = vrot.slane %v2868, %v2883
        %v2886 = vunpack.c.l.s4 1966171168
        %v2887 = vunpack.c.0.s8 %v2886
        %v2888 = vlaneseq
        %v2889 = vshrl.u32 %v2888, 7
        %v2890 = vsub.s32 %v2887, %v2889
        %v2891 = vrot.slane %v2869, %v2890
        %v2893 = vunpack.c.l.s4 1966171168
        %v2894 = vunpack.c.0.s8 %v2893
        %v2895 = vlaneseq
        %v2896 = vshrl.u32 %v2895, 7
        %v2897 = vsub.s32 %v2894, %v2896
        %v2898 = vrot.slane %v2870, %v2897
        %v2899 = vcombine.high %v2877, %v2877
        %v2900 = vcombine.high %v2884, %v2884
        %v2901 = vcombine.high %v2891, %v2891
        %v2902 = vcombine.high %v2898, %v2898
        %v2903 = vlaneseq
        %v2904 = vshrl.u32 %v2903, 7
        %v2905 = vsub.s32 0, %v2904
        %v2906 = vrot.slane %v2828, %v2905
        %v2907 = vlaneseq
        %v2908 = vshrl.u32 %v2907, 7
        %v2909 = vsub.s32 0, %v2908
        %v2910 = vrot.slane %v2842, %v2909
        %v2911 = vlaneseq
        %v2912 = vshrl.u32 %v2911, 7
        %v2913 = vsub.s32 0, %v2912
        %v2914 = vrot.slane %v2850, %v2913
        %v2915 = vlaneseq
        %v2916 = vshrl.u32 %v2915, 7
        %v2917 = vsub.s32 0, %v2916
        %v2918 = vrot.slane %v2852, %v2917
        %v2919 = vlaneseq
        %v2920 = vshrl.u32 %v2919, 7
        %v2921 = vsub.s32 0, %v2920
        %v2922 = vrot.slane %v2835, %v2921
        %v2923 = vlaneseq
        %v2924 = vshrl.u32 %v2923, 7
        %v2925 = vsub.s32 0, %v2924
        %v2926 = vrot.slane %v2849, %v2925
        %v2927 = vlaneseq
        %v2928 = vshrl.u32 %v2927, 7
        %v2929 = vsub.s32 0, %v2928
        %v2930 = vrot.slane %v2851, %v2929
        %v2931 = vlaneseq
        %v2932 = vshrl.u32 %v2931, 7
        %v2933 = vsub.s32 0, %v2932
        %v2934 = vrot.slane %v2853, %v2933
        %v2935 = vlaneseq
        %v2936 = vshrl.u32 %v2935, 7
        %v2937 = vsub.s32 0, %v2936
        %v2938 = vrot.slane %v2877, %v2937
        %v2939 = vlaneseq
        %v2940 = vshrl.u32 %v2939, 7
        %v2941 = vsub.s32 0, %v2940
        %v2942 = vrot.slane %v2891, %v2941
        %v2943 = vlaneseq
        %v2944 = vshrl.u32 %v2943, 7
        %v2945 = vsub.s32 0, %v2944
        %v2946 = vrot.slane %v2899, %v2945
        %v2947 = vlaneseq
        %v2948 = vshrl.u32 %v2947, 7
        %v2949 = vsub.s32 0, %v2948
        %v2950 = vrot.slane %v2901, %v2949
        %v2951 = vlaneseq
        %v2952 = vshrl.u32 %v2951, 7
        %v2953 = vsub.s32 0, %v2952
        %v2954 = vrot.slane %v2884, %v2953
        %v2955 = vlaneseq
        %v2956 = vshrl.u32 %v2955, 7
        %v2957 = vsub.s32 0, %v2956
        %v2958 = vrot.slane %v2898, %v2957
        %v2959 = vlaneseq
        %v2960 = vshrl.u32 %v2959, 7
        %v2961 = vsub.s32 0, %v2960
        %v2962 = vrot.slane %v2900, %v2961
        %v2963 = vlaneseq
        %v2964 = vshrl.u32 %v2963, 7
        %v2965 = vsub.s32 0, %v2964
        %v2966 = vrot.slane %v2902, %v2965
        %v2983 = vadd.f32 %v2637, %v2906
        %v2984 = vadd.f32 %v2642, %v2906
        %v2985 = vadd.f32 %v2637, %v2910
        %v2986 = vadd.f32 %v2642, %v2910
        %v2987 = vadd.f32 %v2637, %v2914
        %v2988 = vadd.f32 %v2642, %v2914
        %v2989 = vadd.f32 %v2637, %v2918
        %v2990 = vadd.f32 %v2642, %v2918
        %v2991 = vadd.f32 %v2637, %v2922
        %v2992 = vadd.f32 %v2642, %v2922
        %v2993 = vadd.f32 %v2637, %v2926
        %v2994 = vadd.f32 %v2642, %v2926
        %v2995 = vadd.f32 %v2637, %v2930
        %v2996 = vadd.f32 %v2642, %v2930
        %v2997 = vadd.f32 %v2637, %v2934
        %v2998 = vadd.f32 %v2642, %v2934
        %v2999 = vadd.f32 %v2637, %v2938
        %v3000 = vadd.f32 %v2642, %v2938
        %v3001 = vadd.f32 %v2637, %v2942
        %v3002 = vadd.f32 %v2642, %v2942
        %v3003 = vadd.f32 %v2637, %v2946
        %v3004 = vadd.f32 %v2642, %v2946
        %v3005 = vadd.f32 %v2637, %v2950
        %v3006 = vadd.f32 %v2642, %v2950
        %v3007 = vadd.f32 %v2637, %v2954
        %v3008 = vadd.f32 %v2642, %v2954
        %v3009 = vadd.f32 %v2637, %v2958
        %v3010 = vadd.f32 %v2642, %v2958
        %v3011 = vadd.f32 %v2637, %v2962
        %v3012 = vadd.f32 %v2642, %v2962
        %v3013 = vadd.f32 %v2637, %v2966
        %v3014 = vadd.f32 %v2642, %v2966
        %v3015 = vld [vmem:[%s14] sm:$0x1]
        %v3017 = vlaneseq
        %v3018 = vshrl.u32 %v3017, 7
        %v3019 = vsub.s32 0, %v3018
        %v3020 = vrot.slane %v3015, %v3019
        %v3022 = vadd.f32 %v2983, %v3020
        %v3023 = vadd.f32 %v2984, %v3020
        %v3024 = vadd.f32 %v2985, %v3020
        %v3025 = vadd.f32 %v2986, %v3020
        %v3026 = vadd.f32 %v2987, %v3020
        %v3027 = vadd.f32 %v2988, %v3020
        %v3028 = vadd.f32 %v2989, %v3020
        %v3029 = vadd.f32 %v2990, %v3020
        %v3030 = vadd.f32 %v2991, %v3020
        %v3031 = vadd.f32 %v2992, %v3020
        %v3032 = vadd.f32 %v2993, %v3020
        %v3033 = vadd.f32 %v2994, %v3020
        %v3034 = vadd.f32 %v2995, %v3020
        %v3035 = vadd.f32 %v2996, %v3020
        %v3036 = vadd.f32 %v2997, %v3020
        %v3037 = vadd.f32 %v2998, %v3020
        %v3038 = vadd.f32 %v2999, %v3020
        %v3039 = vadd.f32 %v3000, %v3020
        %v3040 = vadd.f32 %v3001, %v3020
        %v3041 = vadd.f32 %v3002, %v3020
        %v3042 = vadd.f32 %v3003, %v3020
        %v3043 = vadd.f32 %v3004, %v3020
        %v3044 = vadd.f32 %v3005, %v3020
        %v3045 = vadd.f32 %v3006, %v3020
        %v3046 = vadd.f32 %v3007, %v3020
        %v3047 = vadd.f32 %v3008, %v3020
        %v3048 = vadd.f32 %v3009, %v3020
        %v3049 = vadd.f32 %v3010, %v3020
        %v3050 = vadd.f32 %v3011, %v3020
        %v3051 = vadd.f32 %v3012, %v3020
        %v3052 = vadd.f32 %v3013, %v3020
        %v3053 = vadd.f32 %v3014, %v3020
        %v3054 = vmax.f32 %v3022, 0.0
        %v3055 = vmax.f32 %v3023, 0.0
        %v3056 = vmax.f32 %v3024, 0.0
        %v3057 = vmax.f32 %v3025, 0.0
        %v3058 = vmax.f32 %v3026, 0.0
        %v3059 = vmax.f32 %v3027, 0.0
        %v3060 = vmax.f32 %v3028, 0.0
        %v3061 = vmax.f32 %v3029, 0.0
        %v3062 = vmax.f32 %v3030, 0.0
        %v3063 = vmax.f32 %v3031, 0.0
        %v3064 = vmax.f32 %v3032, 0.0
        %v3065 = vmax.f32 %v3033, 0.0
        %v3066 = vmax.f32 %v3034, 0.0
        %v3067 = vmax.f32 %v3035, 0.0
        %v3068 = vmax.f32 %v3036, 0.0
        %v3069 = vmax.f32 %v3037, 0.0
        %v3070 = vmax.f32 %v3038, 0.0
        %v3071 = vmax.f32 %v3039, 0.0
        %v3072 = vmax.f32 %v3040, 0.0
        %v3073 = vmax.f32 %v3041, 0.0
        %v3074 = vmax.f32 %v3042, 0.0
        %v3075 = vmax.f32 %v3043, 0.0
        %v3076 = vmax.f32 %v3044, 0.0
        %v3077 = vmax.f32 %v3045, 0.0
        %v3078 = vmax.f32 %v3046, 0.0
        %v3079 = vmax.f32 %v3047, 0.0
        %v3080 = vmax.f32 %v3048, 0.0
        %v3081 = vmax.f32 %v3049, 0.0
        %v3082 = vmax.f32 %v3050, 0.0
        %v3083 = vmax.f32 %v3051, 0.0
        %v3084 = vmax.f32 %v3052, 0.0
        %v3085 = vmax.f32 %v3053, 0.0
        %v3086 = vld [vmem:[%s15] sm:$0xff]
        %v3087 = vld [vmem:[%s15 + $0x8] sm:$0xff]
        %v3088 = vld [vmem:[%s15 + $0x10] sm:$0xff]
        %v3089 = vld [vmem:[%s15 + $0x18] sm:$0xff]
        %v3090 = vld [vmem:[%s15 + $0x20] sm:$0xff]
        %v3091 = vld [vmem:[%s15 + $0x28] sm:$0xff]
        %v3092 = vld [vmem:[%s15 + $0x30] sm:$0xff]
        %v3093 = vld [vmem:[%s15 + $0x38] sm:$0xff]
        %v3094 = vld [vmem:[%s15 + $0x40] sm:$0xff]
        %v3095 = vld [vmem:[%s15 + $0x48] sm:$0xff]
        %v3096 = vld [vmem:[%s15 + $0x50] sm:$0xff]
        %v3097 = vld [vmem:[%s15 + $0x58] sm:$0xff]
        %v3098 = vld [vmem:[%s15 + $0x60] sm:$0xff]
        %v3099 = vld [vmem:[%s15 + $0x68] sm:$0xff]
        %v3100 = vld [vmem:[%s15 + $0x70] sm:$0xff]
        %v3101 = vld [vmem:[%s15 + $0x78] sm:$0xff]
        %v3102 = vld [vmem:[%s16] sm:$0x1]
        %v3104 = vlaneseq
        %v3105 = vshrl.u32 %v3104, 7
        %v3106 = vsub.s32 0, %v3105
        %v3107 = vrot.slane %v3102, %v3106
        %3109 = vmatprep.subr.mxu0 0.0
        %3110 = vmatpush1.msra.mxu0 %v3086
        %3111 = vmatprep.subr.mxu0 0.0
        %3112 = vmatpush1.msra.mxu0 %v3087
        %3113 = vmatprep.subr.mxu0 0.0
        %3114 = vmatpush1.msra.mxu0 %v3088
        %3115 = vmatprep.subr.mxu0 0.0
        %3116 = vmatpush1.msra.mxu0 %v3089
        %3117 = vmatprep.subr.mxu0 0.0
        %3118 = vmatpush1.msra.mxu0 %v3090
        %3119 = vmatprep.subr.mxu0 0.0
        %3120 = vmatpush1.msra.mxu0 %v3091
        %3121 = vmatprep.subr.mxu0 0.0
        %3122 = vmatpush1.msra.mxu0 %v3092
        %3123 = vmatprep.subr.mxu0 0.0
        %3124 = vmatpush1.msra.mxu0 %v3093
        %3125 = vmatprep.subr.mxu0 0.0
        %3126 = vmatpush1.msra.mxu0 %v3094
        %3127 = vmatprep.subr.mxu0 0.0
        %3128 = vmatpush1.msra.mxu0 %v3095
        %3129 = vmatprep.subr.mxu0 0.0
        %3130 = vmatpush1.msra.mxu0 %v3096
        %3131 = vmatprep.subr.mxu0 0.0
        %3132 = vmatpush1.msra.mxu0 %v3097
        %3133 = vmatprep.subr.mxu0 0.0
        %3134 = vmatpush1.msra.mxu0 %v3098
        %3135 = vmatprep.subr.mxu0 0.0
        %3136 = vmatpush1.msra.mxu0 %v3099
        %3137 = vmatprep.subr.mxu0 0.0
        %3138 = vmatpush1.msra.mxu0 %v3100
        %3139 = vmatprep.subr.mxu0 0.0
        %3140 = vmatpush1.msra.mxu0 %v3101
        %3141 = vmatprep.subr.mxu0 0.0
        %3142 = vmatpush1.msra.mxu0 0.0
        %3143 = vmatprep.subr.mxu0 0.0
        %3144 = vmatpush1.msra.mxu0 0.0
        %3145 = vmatprep.subr.mxu0 0.0
        %3146 = vmatpush1.msra.mxu0 0.0
        %3147 = vmatprep.subr.mxu0 0.0
        %3148 = vmatpush1.msra.mxu0 0.0
        %3149 = vmatprep.subr.mxu0 0.0
        %3150 = vmatpush1.msra.mxu0 0.0
        %3151 = vmatprep.subr.mxu0 0.0
        %3152 = vmatpush1.msra.mxu0 0.0
        %3153 = vmatprep.subr.mxu0 0.0
        %3154 = vmatpush1.msra.mxu0 0.0
        %3155 = vmatprep.subr.mxu0 0.0
        %3156 = vmatpush1.msra.mxu0 0.0
        %3157 = vmatprep.subr.mxu0 0.0
        %3158 = vmatpush1.msra.mxu0 0.0
        %3159 = vmatprep.subr.mxu0 0.0
        %3160 = vmatpush1.msra.mxu0 0.0
        %3161 = vmatprep.subr.mxu0 0.0
        %3162 = vmatpush1.msra.mxu0 0.0
        %3163 = vmatprep.subr.mxu0 0.0
        %3164 = vmatpush1.msra.mxu0 0.0
        %3165 = vmatprep.subr.mxu0 0.0
        %3166 = vmatpush1.msra.mxu0 0.0
        %3167 = vmatprep.subr.mxu0 0.0
        %3168 = vmatpush1.msra.mxu0 0.0
        %3169 = vmatprep.subr.mxu0 0.0
        %3170 = vmatpush1.msra.mxu0 0.0
        %3171 = vmatprep.subr.mxu0 0.0
        %3172 = vmatpush1.msra.mxu0 0.0
        %3173 = vmatprep.mubr.f32.mxu0 0.0
        %3174 = vmatmul.mubr.f32.gmra.mrb[0].mxu0 %v3054
        %v3175 = vpop.f32.mrb[0].mxu0
        %v3176 = vadd.f32 %v3107, %v3175
        %v3177 = vpop.f32.mrb[0].mxu0
        %3178 = vmatprep.mubr.f32.mxu0 0.0
        %3179 = vmatmul.mubr.f32.gmra.mrb[0].mxu0 %v3055
        %v3180 = vpop.f32.mrb[0].mxu0
        %v3181 = vadd.f32 %v3107, %v3180
        %v3182 = vpop.f32.mrb[0].mxu0
        %3183 = vmatprep.mubr.f32.mxu0 0.0
        %3184 = vmatmul.mubr.f32.gmra.mrb[0].mxu0 %v3056
        %v3185 = vpop.f32.mrb[0].mxu0
        %v3186 = vadd.f32 %v3107, %v3185
        %v3187 = vpop.f32.mrb[0].mxu0
        %3188 = vmatprep.mubr.f32.mxu0 0.0
        %3189 = vmatmul.mubr.f32.gmra.mrb[0].mxu0 %v3057
        %v3190 = vpop.f32.mrb[0].mxu0
        %v3191 = vadd.f32 %v3107, %v3190
        %v3192 = vpop.f32.mrb[0].mxu0
        %3193 = vmatprep.mubr.f32.mxu0 0.0
        %3194 = vmatmul.mubr.f32.gmra.mrb[0].mxu0 %v3058
        %v3195 = vpop.f32.mrb[0].mxu0
        %v3196 = vadd.f32 %v3107, %v3195
        %v3197 = vpop.f32.mrb[0].mxu0
        %3198 = vmatprep.mubr.f32.mxu0 0.0
        %3199 = vmatmul.mubr.f32.gmra.mrb[0].mxu0 %v3059
        %v3200 = vpop.f32.mrb[0].mxu0
        %v3201 = vadd.f32 %v3107, %v3200
        %v3202 = vpop.f32.mrb[0].mxu0
        %3203 = vmatprep.mubr.f32.mxu0 0.0
        %3204 = vmatmul.mubr.f32.gmra.mrb[0].mxu0 %v3060
        %v3205 = vpop.f32.mrb[0].mxu0
        %v3206 = vadd.f32 %v3107, %v3205
        %v3207 = vpop.f32.mrb[0].mxu0
        %3208 = vmatprep.mubr.f32.mxu0 0.0
        %3209 = vmatmul.mubr.f32.gmra.mrb[0].mxu0 %v3061
        %v3210 = vpop.f32.mrb[0].mxu0
        %v3211 = vadd.f32 %v3107, %v3210
        %v3212 = vpop.f32.mrb[0].mxu0
        %3213 = vmatprep.mubr.f32.mxu0 0.0
        %3214 = vmatmul.mubr.f32.gmra.mrb[0].mxu0 %v3062
        %v3215 = vpop.f32.mrb[0].mxu0
        %v3216 = vadd.f32 %v3107, %v3215
        %v3217 = vpop.f32.mrb[0].mxu0
        %3218 = vmatprep.mubr.f32.mxu0 0.0
        %3219 = vmatmul.mubr.f32.gmra.mrb[0].mxu0 %v3063
        %v3220 = vpop.f32.mrb[0].mxu0
        %v3221 = vadd.f32 %v3107, %v3220
        %v3222 = vpop.f32.mrb[0].mxu0
        %3223 = vmatprep.mubr.f32.mxu0 0.0
        %3224 = vmatmul.mubr.f32.gmra.mrb[0].mxu0 %v3064
        %v3225 = vpop.f32.mrb[0].mxu0
        %v3226 = vadd.f32 %v3107, %v3225
        %v3227 = vpop.f32.mrb[0].mxu0
        %3228 = vmatprep.mubr.f32.mxu0 0.0
        %3229 = vmatmul.mubr.f32.gmra.mrb[0].mxu0 %v3065
        %v3230 = vpop.f32.mrb[0].mxu0
        %v3231 = vadd.f32 %v3107, %v3230
        %v3232 = vpop.f32.mrb[0].mxu0
        %3233 = vmatprep.mubr.f32.mxu0 0.0
        %3234 = vmatmul.mubr.f32.gmra.mrb[0].mxu0 %v3066
        %v3235 = vpop.f32.mrb[0].mxu0
        %v3236 = vadd.f32 %v3107, %v3235
        %v3237 = vpop.f32.mrb[0].mxu0
        %3238 = vmatprep.mubr.f32.mxu0 0.0
        %3239 = vmatmul.mubr.f32.gmra.mrb[0].mxu0 %v3067
        %v3240 = vpop.f32.mrb[0].mxu0
        %v3241 = vadd.f32 %v3107, %v3240
        %v3242 = vpop.f32.mrb[0].mxu0
        %3243 = vmatprep.mubr.f32.mxu0 0.0
        %3244 = vmatmul.mubr.f32.gmra.mrb[0].mxu0 %v3068
        %v3245 = vpop.f32.mrb[0].mxu0
        %v3246 = vadd.f32 %v3107, %v3245
        %v3247 = vpop.f32.mrb[0].mxu0
        %3248 = vmatprep.mubr.f32.mxu0 0.0
        %3249 = vmatmul.mubr.f32.gmra.mrb[0].mxu0 %v3069
        %v3250 = vpop.f32.mrb[0].mxu0
        %v3251 = vadd.f32 %v3107, %v3250
        %v3252 = vpop.f32.mrb[0].mxu0
        %3253 = vmatprep.mubr.f32.mxu0 0.0
        %3254 = vmatmul.mubr.f32.gmra.mrb[0].mxu0 %v3070
        %v3255 = vpop.f32.mrb[0].mxu0
        %v3256 = vadd.f32 %v3107, %v3255
        %v3257 = vpop.f32.mrb[0].mxu0
        %3258 = vmatprep.mubr.f32.mxu0 0.0
        %3259 = vmatmul.mubr.f32.gmra.mrb[0].mxu0 %v3071
        %v3260 = vpop.f32.mrb[0].mxu0
        %v3261 = vadd.f32 %v3107, %v3260
        %v3262 = vpop.f32.mrb[0].mxu0
        %3263 = vmatprep.mubr.f32.mxu0 0.0
        %3264 = vmatmul.mubr.f32.gmra.mrb[0].mxu0 %v3072
        %v3265 = vpop.f32.mrb[0].mxu0
        %v3266 = vadd.f32 %v3107, %v3265
        %v3267 = vpop.f32.mrb[0].mxu0
        %3268 = vmatprep.mubr.f32.mxu0 0.0
        %3269 = vmatmul.mubr.f32.gmra.mrb[0].mxu0 %v3073
        %v3270 = vpop.f32.mrb[0].mxu0
        %v3271 = vadd.f32 %v3107, %v3270
        %v3272 = vpop.f32.mrb[0].mxu0
        %3273 = vmatprep.mubr.f32.mxu0 0.0
        %3274 = vmatmul.mubr.f32.gmra.mrb[0].mxu0 %v3074
        %v3275 = vpop.f32.mrb[0].mxu0
        %v3276 = vadd.f32 %v3107, %v3275
        %v3277 = vpop.f32.mrb[0].mxu0
        %3278 = vmatprep.mubr.f32.mxu0 0.0
        %3279 = vmatmul.mubr.f32.gmra.mrb[0].mxu0 %v3075
        %v3280 = vpop.f32.mrb[0].mxu0
        %v3281 = vadd.f32 %v3107, %v3280
        %v3282 = vpop.f32.mrb[0].mxu0
        %3283 = vmatprep.mubr.f32.mxu0 0.0
        %3284 = vmatmul.mubr.f32.gmra.mrb[0].mxu0 %v3076
        %v3285 = vpop.f32.mrb[0].mxu0
        %v3286 = vadd.f32 %v3107, %v3285
        %v3287 = vpop.f32.mrb[0].mxu0
        %3288 = vmatprep.mubr.f32.mxu0 0.0
        %3289 = vmatmul.mubr.f32.gmra.mrb[0].mxu0 %v3077
        %v3290 = vpop.f32.mrb[0].mxu0
        %v3291 = vadd.f32 %v3107, %v3290
        %v3292 = vpop.f32.mrb[0].mxu0
        %3293 = vmatprep.mubr.f32.mxu0 0.0
        %3294 = vmatmul.mubr.f32.gmra.mrb[0].mxu0 %v3078
        %v3295 = vpop.f32.mrb[0].mxu0
        %v3296 = vadd.f32 %v3107, %v3295
        %v3297 = vpop.f32.mrb[0].mxu0
        %3298 = vmatprep.mubr.f32.mxu0 0.0
        %3299 = vmatmul.mubr.f32.gmra.mrb[0].mxu0 %v3079
        %v3300 = vpop.f32.mrb[0].mxu0
        %v3301 = vadd.f32 %v3107, %v3300
        %v3302 = vpop.f32.mrb[0].mxu0
        %3303 = vmatprep.mubr.f32.mxu0 0.0
        %3304 = vmatmul.mubr.f32.gmra.mrb[0].mxu0 %v3080
        %v3305 = vpop.f32.mrb[0].mxu0
        %v3306 = vadd.f32 %v3107, %v3305
        %v3307 = vpop.f32.mrb[0].mxu0
        %3308 = vmatprep.mubr.f32.mxu0 0.0
        %3309 = vmatmul.mubr.f32.gmra.mrb[0].mxu0 %v3081
        %v3310 = vpop.f32.mrb[0].mxu0
        %v3311 = vadd.f32 %v3107, %v3310
        %v3312 = vpop.f32.mrb[0].mxu0
        %3313 = vmatprep.mubr.f32.mxu0 0.0
        %3314 = vmatmul.mubr.f32.gmra.mrb[0].mxu0 %v3082
        %v3315 = vpop.f32.mrb[0].mxu0
        %v3316 = vadd.f32 %v3107, %v3315
        %v3317 = vpop.f32.mrb[0].mxu0
        %3318 = vmatprep.mubr.f32.mxu0 0.0
        %3319 = vmatmul.mubr.f32.gmra.mrb[0].mxu0 %v3083
        %v3320 = vpop.f32.mrb[0].mxu0
        %v3321 = vadd.f32 %v3107, %v3320
        %v3322 = vpop.f32.mrb[0].mxu0
        %3323 = vmatprep.mubr.f32.mxu0 0.0
        %3324 = vmatmul.mubr.f32.gmra.mrb[0].mxu0 %v3084
        %v3325 = vpop.f32.mrb[0].mxu0
        %v3326 = vadd.f32 %v3107, %v3325
        %v3327 = vpop.f32.mrb[0].mxu0
        %3328 = vmatprep.mubr.f32.mxu0 0.0
        %3329 = vmatmul.mubr.f32.gmra.mrb[0].mxu0 %v3085
        %v3330 = vpop.f32.mrb[0].mxu0
        %v3331 = vadd.f32 %v3107, %v3330
        %v3332 = vpop.f32.mrb[0].mxu0
        %3333 = vdwg.mxu0
        %v3334 = vmax.f32 %v3176, 0.0
        %v3335 = vmax.f32 %v3181, 0.0
        %v3336 = vmax.f32 %v3186, 0.0
        %v3337 = vmax.f32 %v3191, 0.0
        %v3338 = vmax.f32 %v3196, 0.0
        %v3339 = vmax.f32 %v3201, 0.0
        %v3340 = vmax.f32 %v3206, 0.0
        %v3341 = vmax.f32 %v3211, 0.0
        %v3342 = vmax.f32 %v3216, 0.0
        %v3343 = vmax.f32 %v3221, 0.0
        %v3344 = vmax.f32 %v3226, 0.0
        %v3345 = vmax.f32 %v3231, 0.0
        %v3346 = vmax.f32 %v3236, 0.0
        %v3347 = vmax.f32 %v3241, 0.0
        %v3348 = vmax.f32 %v3246, 0.0
        %v3349 = vmax.f32 %v3251, 0.0
        %v3350 = vmax.f32 %v3256, 0.0
        %v3351 = vmax.f32 %v3261, 0.0
        %v3352 = vmax.f32 %v3266, 0.0
        %v3353 = vmax.f32 %v3271, 0.0
        %v3354 = vmax.f32 %v3276, 0.0
        %v3355 = vmax.f32 %v3281, 0.0
        %v3356 = vmax.f32 %v3286, 0.0
        %v3357 = vmax.f32 %v3291, 0.0
        %v3358 = vmax.f32 %v3296, 0.0
        %v3359 = vmax.f32 %v3301, 0.0
        %v3360 = vmax.f32 %v3306, 0.0
        %v3361 = vmax.f32 %v3311, 0.0
        %v3362 = vmax.f32 %v3316, 0.0
        %v3363 = vmax.f32 %v3321, 0.0
        %v3364 = vmax.f32 %v3326, 0.0
        %v3365 = vmax.f32 %v3331, 0.0
        %v3366 = vld [vmem:[%s17] sm:$0x1]
        %v3368 = vlaneseq
        %v3369 = vshrl.u32 %v3368, 7
        %v3370 = vsub.s32 0, %v3369
        %v3371 = vrot.slane %v3366, %v3370
        %v3373 = vmul.f32 %v3334, %v3371
        %v3374 = vmul.f32 %v3335, %v3371
        %v3375 = vmul.f32 %v3336, %v3371
        %v3376 = vmul.f32 %v3337, %v3371
        %v3377 = vmul.f32 %v3338, %v3371
        %v3378 = vmul.f32 %v3339, %v3371
        %v3379 = vmul.f32 %v3340, %v3371
        %v3380 = vmul.f32 %v3341, %v3371
        %v3381 = vmul.f32 %v3342, %v3371
        %v3382 = vmul.f32 %v3343, %v3371
        %v3383 = vmul.f32 %v3344, %v3371
        %v3384 = vmul.f32 %v3345, %v3371
        %v3385 = vmul.f32 %v3346, %v3371
        %v3386 = vmul.f32 %v3347, %v3371
        %v3387 = vmul.f32 %v3348, %v3371
        %v3388 = vmul.f32 %v3349, %v3371
        %v3389 = vmul.f32 %v3350, %v3371
        %v3390 = vmul.f32 %v3351, %v3371
        %v3391 = vmul.f32 %v3352, %v3371
        %v3392 = vmul.f32 %v3353, %v3371
        %v3393 = vmul.f32 %v3354, %v3371
        %v3394 = vmul.f32 %v3355, %v3371
        %v3395 = vmul.f32 %v3356, %v3371
        %v3396 = vmul.f32 %v3357, %v3371
        %v3397 = vmul.f32 %v3358, %v3371
        %v3398 = vmul.f32 %v3359, %v3371
        %v3399 = vmul.f32 %v3360, %v3371
        %v3400 = vmul.f32 %v3361, %v3371
        %v3401 = vmul.f32 %v3362, %v3371
        %v3402 = vmul.f32 %v3363, %v3371
        %v3403 = vmul.f32 %v3364, %v3371
        %v3404 = vmul.f32 %v3365, %v3371
        %vm3405 = vcmask 523264
        %v3406 = vsel %vm3405, %v3373, 0.0
        %3407 = vadd.xlane.f32.xlu0 %v3406
        %v3408 = vpop.xlane.xlu0 %3407
        %v3409 = vsel %vm3405, %v3374, 0.0
        %3410 = vadd.xlane.f32.xlu0 %v3409
        %v3411 = vpop.xlane.xlu0 %3410
        %v3412 = vsel %vm3405, %v3375, 0.0
        %3413 = vadd.xlane.f32.xlu0 %v3412
        %v3414 = vpop.xlane.xlu0 %3413
        %v3415 = vsel %vm3405, %v3376, 0.0
        %3416 = vadd.xlane.f32.xlu0 %v3415
        %v3417 = vpop.xlane.xlu0 %3416
        %v3418 = vsel %vm3405, %v3377, 0.0
        %3419 = vadd.xlane.f32.xlu0 %v3418
        %v3420 = vpop.xlane.xlu0 %3419
        %v3421 = vsel %vm3405, %v3378, 0.0
        %3422 = vadd.xlane.f32.xlu0 %v3421
        %v3423 = vpop.xlane.xlu0 %3422
        %v3424 = vsel %vm3405, %v3379, 0.0
        %3425 = vadd.xlane.f32.xlu0 %v3424
        %v3426 = vpop.xlane.xlu0 %3425
        %v3427 = vsel %vm3405, %v3380, 0.0
        %3428 = vadd.xlane.f32.xlu0 %v3427
        %v3429 = vpop.xlane.xlu0 %3428
        %v3430 = vsel %vm3405, %v3381, 0.0
        %3431 = vadd.xlane.f32.xlu0 %v3430
        %v3432 = vpop.xlane.xlu0 %3431
        %v3433 = vsel %vm3405, %v3382, 0.0
        %3434 = vadd.xlane.f32.xlu0 %v3433
        %v3435 = vpop.xlane.xlu0 %3434
        %v3436 = vsel %vm3405, %v3383, 0.0
        %3437 = vadd.xlane.f32.xlu0 %v3436
        %v3438 = vpop.xlane.xlu0 %3437
        %v3439 = vsel %vm3405, %v3384, 0.0
        %3440 = vadd.xlane.f32.xlu0 %v3439
        %v3441 = vpop.xlane.xlu0 %3440
        %v3442 = vsel %vm3405, %v3385, 0.0
        %3443 = vadd.xlane.f32.xlu0 %v3442
        %v3444 = vpop.xlane.xlu0 %3443
        %v3445 = vsel %vm3405, %v3386, 0.0
        %3446 = vadd.xlane.f32.xlu0 %v3445
        %v3447 = vpop.xlane.xlu0 %3446
        %v3448 = vsel %vm3405, %v3387, 0.0
        %3449 = vadd.xlane.f32.xlu0 %v3448
        %v3450 = vpop.xlane.xlu0 %3449
        %v3451 = vsel %vm3405, %v3388, 0.0
        %3452 = vadd.xlane.f32.xlu0 %v3451
        %v3453 = vpop.xlane.xlu0 %3452
        %v3454 = vsel %vm3405, %v3389, 0.0
        %3455 = vadd.xlane.f32.xlu0 %v3454
        %v3456 = vpop.xlane.xlu0 %3455
        %v3457 = vsel %vm3405, %v3390, 0.0
        %3458 = vadd.xlane.f32.xlu0 %v3457
        %v3459 = vpop.xlane.xlu0 %3458
        %v3460 = vsel %vm3405, %v3391, 0.0
        %3461 = vadd.xlane.f32.xlu0 %v3460
        %v3462 = vpop.xlane.xlu0 %3461
        %v3463 = vsel %vm3405, %v3392, 0.0
        %3464 = vadd.xlane.f32.xlu0 %v3463
        %v3465 = vpop.xlane.xlu0 %3464
        %v3466 = vsel %vm3405, %v3393, 0.0
        %3467 = vadd.xlane.f32.xlu0 %v3466
        %v3468 = vpop.xlane.xlu0 %3467
        %v3469 = vsel %vm3405, %v3394, 0.0
        %3470 = vadd.xlane.f32.xlu0 %v3469
        %v3471 = vpop.xlane.xlu0 %3470
        %v3472 = vsel %vm3405, %v3395, 0.0
        %3473 = vadd.xlane.f32.xlu0 %v3472
        %v3474 = vpop.xlane.xlu0 %3473
        %v3475 = vsel %vm3405, %v3396, 0.0
        %3476 = vadd.xlane.f32.xlu0 %v3475
        %v3477 = vpop.xlane.xlu0 %3476
        %v3478 = vsel %vm3405, %v3397, 0.0
        %3479 = vadd.xlane.f32.xlu0 %v3478
        %v3480 = vpop.xlane.xlu0 %3479
        %v3481 = vsel %vm3405, %v3398, 0.0
        %3482 = vadd.xlane.f32.xlu0 %v3481
        %v3483 = vpop.xlane.xlu0 %3482
        %v3484 = vsel %vm3405, %v3399, 0.0
        %3485 = vadd.xlane.f32.xlu0 %v3484
        %v3486 = vpop.xlane.xlu0 %3485
        %v3487 = vsel %vm3405, %v3400, 0.0
        %3488 = vadd.xlane.f32.xlu0 %v3487
        %v3489 = vpop.xlane.xlu0 %3488
        %v3490 = vsel %vm3405, %v3401, 0.0
        %3491 = vadd.xlane.f32.xlu0 %v3490
        %v3492 = vpop.xlane.xlu0 %3491
        %v3493 = vsel %vm3405, %v3402, 0.0
        %3494 = vadd.xlane.f32.xlu0 %v3493
        %v3495 = vpop.xlane.xlu0 %3494
        %v3496 = vsel %vm3405, %v3403, 0.0
        %3497 = vadd.xlane.f32.xlu0 %v3496
        %v3498 = vpop.xlane.xlu0 %3497
        %v3499 = vsel %vm3405, %v3404, 0.0
        %3500 = vadd.xlane.f32.xlu0 %v3499
        %v3501 = vpop.xlane.xlu0 %3500
        %s3502 = sld [smem:[#allocation3]]
        %v3503 = vstv %s3502
        %v3504 = vadd.f32 %v3408, %v3503
        %v3505 = vadd.f32 %v3411, %v3503
        %v3506 = vadd.f32 %v3414, %v3503
        %v3507 = vadd.f32 %v3417, %v3503
        %v3508 = vadd.f32 %v3420, %v3503
        %v3509 = vadd.f32 %v3423, %v3503
        %v3510 = vadd.f32 %v3426, %v3503
        %v3511 = vadd.f32 %v3429, %v3503
        %v3512 = vadd.f32 %v3432, %v3503
        %v3513 = vadd.f32 %v3435, %v3503
        %v3514 = vadd.f32 %v3438, %v3503
        %v3515 = vadd.f32 %v3441, %v3503
        %v3516 = vadd.f32 %v3444, %v3503
        %v3517 = vadd.f32 %v3447, %v3503
        %v3518 = vadd.f32 %v3450, %v3503
        %v3519 = vadd.f32 %v3453, %v3503
        %v3520 = vadd.f32 %v3456, %v3503
        %v3521 = vadd.f32 %v3459, %v3503
        %v3522 = vadd.f32 %v3462, %v3503
        %v3523 = vadd.f32 %v3465, %v3503
        %v3524 = vadd.f32 %v3468, %v3503
        %v3525 = vadd.f32 %v3471, %v3503
        %v3526 = vadd.f32 %v3474, %v3503
        %v3527 = vadd.f32 %v3477, %v3503
        %v3528 = vadd.f32 %v3480, %v3503
        %v3529 = vadd.f32 %v3483, %v3503
        %v3530 = vadd.f32 %v3486, %v3503
        %v3531 = vadd.f32 %v3489, %v3503
        %v3532 = vadd.f32 %v3492, %v3503
        %v3533 = vadd.f32 %v3495, %v3503
        %v3534 = vadd.f32 %v3498, %v3503
        %v3535 = vadd.f32 %v3501, %v3503
        %v3536 = vmax.f32 %v3504, 0.0
        %v3537 = vmax.f32 %v3505, 0.0
        %v3538 = vmax.f32 %v3506, 0.0
        %v3539 = vmax.f32 %v3507, 0.0
        %v3540 = vmax.f32 %v3508, 0.0
        %v3541 = vmax.f32 %v3509, 0.0
        %v3542 = vmax.f32 %v3510, 0.0
        %v3543 = vmax.f32 %v3511, 0.0
        %v3544 = vmax.f32 %v3512, 0.0
        %v3545 = vmax.f32 %v3513, 0.0
        %v3546 = vmax.f32 %v3514, 0.0
        %v3547 = vmax.f32 %v3515, 0.0
        %v3548 = vmax.f32 %v3516, 0.0
        %v3549 = vmax.f32 %v3517, 0.0
        %v3550 = vmax.f32 %v3518, 0.0
        %v3551 = vmax.f32 %v3519, 0.0
        %v3552 = vmax.f32 %v3520, 0.0
        %v3553 = vmax.f32 %v3521, 0.0
        %v3554 = vmax.f32 %v3522, 0.0
        %v3555 = vmax.f32 %v3523, 0.0
        %v3556 = vmax.f32 %v3524, 0.0
        %v3557 = vmax.f32 %v3525, 0.0
        %v3558 = vmax.f32 %v3526, 0.0
        %v3559 = vmax.f32 %v3527, 0.0
        %v3560 = vmax.f32 %v3528, 0.0
        %v3561 = vmax.f32 %v3529, 0.0
        %v3562 = vmax.f32 %v3530, 0.0
        %v3563 = vmax.f32 %v3531, 0.0
        %v3564 = vmax.f32 %v3532, 0.0
        %v3565 = vmax.f32 %v3533, 0.0
        %v3566 = vmax.f32 %v3534, 0.0
        %v3567 = vmax.f32 %v3535, 0.0
        %v3600 = vlaneseq
        %v3601 = vand.u32 %v3600, 127
        %v3602 = vlaneseq
        %v3603 = vshrl.u32 %v3602, 7
        %v3604 = vsub.s32 %v3601, %v3603
        %v3605 = vrot.slane %v3536, %v3604
        %v3606 = vadd.s32 %v3601, 4294967288
        %v3607 = vlaneseq
        %v3608 = vshrl.u32 %v3607, 7
        %v3609 = vsub.s32 %v3606, %v3608
        %v3610 = vrot.slane %v3537, %v3609
        %vm3611 = vcmask 130112
        %v3612 = vsel %vm3611, %v3610, %v3605
        %v3613 = vlaneseq
        %v3614 = vshrl.u32 %v3613, 7
        %v3615 = vsub.s32 %v3601, %v3614
        %v3616 = vrot.slane %v3538, %v3615
        %v3617 = vlaneseq
        %v3618 = vshrl.u32 %v3617, 7
        %v3619 = vsub.s32 %v3606, %v3618
        %v3620 = vrot.slane %v3539, %v3619
        %v3621 = vsel %vm3611, %v3620, %v3616
        %v3622 = vlaneseq
        %v3623 = vshrl.u32 %v3622, 7
        %v3624 = vsub.s32 %v3601, %v3623
        %v3625 = vrot.slane %v3540, %v3624
        %v3626 = vlaneseq
        %v3627 = vshrl.u32 %v3626, 7
        %v3628 = vsub.s32 %v3606, %v3627
        %v3629 = vrot.slane %v3541, %v3628
        %v3630 = vsel %vm3611, %v3629, %v3625
        %v3631 = vlaneseq
        %v3632 = vshrl.u32 %v3631, 7
        %v3633 = vsub.s32 %v3601, %v3632
        %v3634 = vrot.slane %v3542, %v3633
        %v3635 = vlaneseq
        %v3636 = vshrl.u32 %v3635, 7
        %v3637 = vsub.s32 %v3606, %v3636
        %v3638 = vrot.slane %v3543, %v3637
        %v3639 = vsel %vm3611, %v3638, %v3634
        %v3640 = vlaneseq
        %v3641 = vshrl.u32 %v3640, 7
        %v3642 = vsub.s32 %v3601, %v3641
        %v3643 = vrot.slane %v3544, %v3642
        %v3644 = vlaneseq
        %v3645 = vshrl.u32 %v3644, 7
        %v3646 = vsub.s32 %v3606, %v3645
        %v3647 = vrot.slane %v3545, %v3646
        %v3648 = vsel %vm3611, %v3647, %v3643
        %v3649 = vlaneseq
        %v3650 = vshrl.u32 %v3649, 7
        %v3651 = vsub.s32 %v3601, %v3650
        %v3652 = vrot.slane %v3546, %v3651
        %v3653 = vlaneseq
        %v3654 = vshrl.u32 %v3653, 7
        %v3655 = vsub.s32 %v3606, %v3654
        %v3656 = vrot.slane %v3547, %v3655
        %v3657 = vsel %vm3611, %v3656, %v3652
        %v3658 = vlaneseq
        %v3659 = vshrl.u32 %v3658, 7
        %v3660 = vsub.s32 %v3601, %v3659
        %v3661 = vrot.slane %v3548, %v3660
        %v3662 = vlaneseq
        %v3663 = vshrl.u32 %v3662, 7
        %v3664 = vsub.s32 %v3606, %v3663
        %v3665 = vrot.slane %v3549, %v3664
        %v3666 = vsel %vm3611, %v3665, %v3661
        %v3667 = vlaneseq
        %v3668 = vshrl.u32 %v3667, 7
        %v3669 = vsub.s32 %v3601, %v3668
        %v3670 = vrot.slane %v3550, %v3669
        %v3671 = vlaneseq
        %v3672 = vshrl.u32 %v3671, 7
        %v3673 = vsub.s32 %v3606, %v3672
        %v3674 = vrot.slane %v3551, %v3673
        %v3675 = vsel %vm3611, %v3674, %v3670
        %v3676 = vlaneseq
        %v3677 = vshrl.u32 %v3676, 7
        %v3678 = vsub.s32 %v3601, %v3677
        %v3679 = vrot.slane %v3552, %v3678
        %v3680 = vlaneseq
        %v3681 = vshrl.u32 %v3680, 7
        %v3682 = vsub.s32 %v3606, %v3681
        %v3683 = vrot.slane %v3553, %v3682
        %v3684 = vsel %vm3611, %v3683, %v3679
        %v3685 = vlaneseq
        %v3686 = vshrl.u32 %v3685, 7
        %v3687 = vsub.s32 %v3601, %v3686
        %v3688 = vrot.slane %v3554, %v3687
        %v3689 = vlaneseq
        %v3690 = vshrl.u32 %v3689, 7
        %v3691 = vsub.s32 %v3606, %v3690
        %v3692 = vrot.slane %v3555, %v3691
        %v3693 = vsel %vm3611, %v3692, %v3688
        %v3694 = vlaneseq
        %v3695 = vshrl.u32 %v3694, 7
        %v3696 = vsub.s32 %v3601, %v3695
        %v3697 = vrot.slane %v3556, %v3696
        %v3698 = vlaneseq
        %v3699 = vshrl.u32 %v3698, 7
        %v3700 = vsub.s32 %v3606, %v3699
        %v3701 = vrot.slane %v3557, %v3700
        %v3702 = vsel %vm3611, %v3701, %v3697
        %v3703 = vlaneseq
        %v3704 = vshrl.u32 %v3703, 7
        %v3705 = vsub.s32 %v3601, %v3704
        %v3706 = vrot.slane %v3558, %v3705
        %v3707 = vlaneseq
        %v3708 = vshrl.u32 %v3707, 7
        %v3709 = vsub.s32 %v3606, %v3708
        %v3710 = vrot.slane %v3559, %v3709
        %v3711 = vsel %vm3611, %v3710, %v3706
        %v3712 = vlaneseq
        %v3713 = vshrl.u32 %v3712, 7
        %v3714 = vsub.s32 %v3601, %v3713
        %v3715 = vrot.slane %v3560, %v3714
        %v3716 = vlaneseq
        %v3717 = vshrl.u32 %v3716, 7
        %v3718 = vsub.s32 %v3606, %v3717
        %v3719 = vrot.slane %v3561, %v3718
        %v3720 = vsel %vm3611, %v3719, %v3715
        %v3721 = vlaneseq
        %v3722 = vshrl.u32 %v3721, 7
        %v3723 = vsub.s32 %v3601, %v3722
        %v3724 = vrot.slane %v3562, %v3723
        %v3725 = vlaneseq
        %v3726 = vshrl.u32 %v3725, 7
        %v3727 = vsub.s32 %v3606, %v3726
        %v3728 = vrot.slane %v3563, %v3727
        %v3729 = vsel %vm3611, %v3728, %v3724
        %v3730 = vlaneseq
        %v3731 = vshrl.u32 %v3730, 7
        %v3732 = vsub.s32 %v3601, %v3731
        %v3733 = vrot.slane %v3564, %v3732
        %v3734 = vlaneseq
        %v3735 = vshrl.u32 %v3734, 7
        %v3736 = vsub.s32 %v3606, %v3735
        %v3737 = vrot.slane %v3565, %v3736
        %v3738 = vsel %vm3611, %v3737, %v3733
        %v3739 = vlaneseq
        %v3740 = vshrl.u32 %v3739, 7
        %v3741 = vsub.s32 %v3601, %v3740
        %v3742 = vrot.slane %v3566, %v3741
        %v3743 = vlaneseq
        %v3744 = vshrl.u32 %v3743, 7
        %v3745 = vsub.s32 %v3606, %v3744
        %v3746 = vrot.slane %v3567, %v3745
        %v3747 = vsel %vm3611, %v3746, %v3742
        %vm3748 = vcmask 1041409
        %v3749 = vsel %vm3748, %v3621, %v3612
        %vm3750 = vcmask 1042434
        %v3751 = vsel %vm3750, %v3630, %v3749
        %vm3752 = vcmask 1043459
        %v3753 = vsel %vm3752, %v3639, %v3751
        %vm3754 = vcmask 1044484
        %v3755 = vsel %vm3754, %v3648, %v3753
        %vm3756 = vcmask 1045509
        %v3757 = vsel %vm3756, %v3657, %v3755
        %vm3758 = vcmask 1046534
        %v3759 = vsel %vm3758, %v3666, %v3757
        %vm3760 = vcmask 1047559
        %v3761 = vsel %vm3760, %v3675, %v3759
        %v3762 = vsel %vm3748, %v3693, %v3684
        %v3763 = vsel %vm3750, %v3702, %v3762
        %v3764 = vsel %vm3752, %v3711, %v3763
        %v3765 = vsel %vm3754, %v3720, %v3764
        %v3766 = vsel %vm3756, %v3729, %v3765
        %v3767 = vsel %vm3758, %v3738, %v3766
        %v3768 = vsel %vm3760, %v3747, %v3767
        %3771 = vst.msk [vmem:[%s611] sm:$0xff] %vm2222, %v3761
        %3772 = vst.msk [vmem:[%s611 + $0x8] sm:$0xff] %vm2222, %v3768
        %s3773 = sand.u32 %s451, 1
        %s3774 = scalar_lea.sflag [#allocation5], %s3773
        %s3775 = sand.u32 %s451, 1
        %s3776 = smul.addr %s3775, 16
        %s3777 = scalar_lea.vmem [#allocation4], %s3776
        // Predicated region
        $region97: #{caesar_forward_pallas.1} parent=95 // pred_check
          %p3778 = pneg %p461
        $region98: #{caesar_forward_pallas.1} parent=95 // pred_check_branch
          %3780 = sbr.rel (%p3778) target = $region100
        $region99: #{caesar_forward_pallas.1} parent=95 // pred_region
          %s3782 = ssub.s32 256, 256
          %3783 = vsyncadd %s3774, %s3782
          %s3784 = smul.addr %s34, 2
          %s3785 = smul.addr %s3784, 128
          %s3786 = scalar_lea.hbm %s19, %s3785
          %s3787 = sshll.u32 %s3777, 4
          %s3788 = int_to_ptr.vmem [resolvable:$true] %s3787
          %3793 = dma.vmem_to_hbm [thread:$0]  %s3788, 256, %s3786, %s3774, 128, 128, 8
        $region100: #{caesar_forward_pallas.1} parent=95 // pred_fallthru
          _
      $region96: #{caesar_forward_pallas.1} parent=5 // pred_fallthru
        _
      %p3794 = scmp.le.s32.totalorder 2, %s29
      // Predicated region
      $region101: #{caesar_forward_pallas.1} parent=5 // pred_check
        %p3795 = pneg %p3794
      $region102: #{caesar_forward_pallas.1} parent=5 // pred_check_branch
        %3797 = sbr.rel (%p3795) target = $region104
      $region103: #{caesar_forward_pallas.1} parent=5 // pred_region
        %s3798 = ssub.s32 %s29, 2
        // Predicated region
        $region105: #{caesar_forward_pallas.1} parent=103 // pred_check
          %p3799 = pneg %p467
        $region106: #{caesar_forward_pallas.1} parent=103 // pred_check_branch
          %3801 = sbr.rel (%p3799) target = $region108
        $region107: #{caesar_forward_pallas.1} parent=103 // pred_region
          %s3802 = sand.u32 %s452, 1
          %s3803 = scalar_lea.sflag [#allocation5], %s3802
          %s3804 = sand.u32 %s452, 1
          %s3805 = smul.addr %s3804, 16
          %s3806 = scalar_lea.vmem [#allocation4], %s3805
          %3807 = dma.done %s3803, 256
        $region108: #{caesar_forward_pallas.1} parent=103 // pred_fallthru
          _
      $region104: #{caesar_forward_pallas.1} parent=5 // pred_fallthru
        _
    $region6: #{caesar_forward_pallas.1} parent=1 // loop_footer
      %s33 = sadd.s32 1, %s29
    $region7: #{caesar_forward_pallas.1} parent=1 // loop_footer_branch
      %28 = sbr.rel target = $region3
    $region8: #{caesar_forward_pallas.1} parent=1 // loop_exit
      _
    %3808 = vsyncpa [#allocation5], 1
    %s3809 = scalar_lea.sflag [#allocation5], 1
    %3810 = vsyncpa %s3809, 1

</llo_original>
